<compile_context>
chip_gen: v5e
topology: v5e:2x2
jax: 0.10.0
libtpu: 0.0.40
codegen_flags: <defaults>
</compile_context>

<pallas_src>
import math
import functools

import jax
import jax.numpy as jnp
from jax import lax
from jax.experimental import pallas as pl
from jax.experimental.pallas import tpu as pltpu


# ---------------------------------------------------------------------------
# Kernel 1: the stack of transformer encoder layers (pre-norm, causal mask).
# grid = (batch_tiles, num_layers); one grid step = one layer on one batch
# tile.  Per-layer weights use (1, ...) blocks indexed by the layer id so only
# ~2 layers of weights are VMEM-resident (double-buffered) and layer l+1's
# weight DMA overlaps layer l's compute.  The residual stream lives in a flat
# (Bt*S, H) VMEM scratch carried across the (innermost, "arbitrary") layer
# axis; the final residual is flushed to HBM on the last layer step.
# ---------------------------------------------------------------------------
def _layers_kernel(nhead,
                   emb_ref,
                   ln1w_ref, ln1b_ref, qkvw_ref, qkvb_ref,
                   ow_ref, ob_ref, ln2w_ref, ln2b_ref,
                   f1w_ref, f1b_ref, f2w_ref, f2b_ref,
                   xout_ref,
                   x_ref):
    l = pl.program_id(1)
    n_layers = pl.num_programs(1)

    Bt, S, H = emb_ref.shape
    R = Bt * S
    hd = H // nhead
    bf16 = jnp.bfloat16
    inv_sqrt2 = jnp.float32(0.7071067811865476)

    # ---- init residual stream (sqrt(H) scale + pos-enc folded in wrapper) --
    @pl.when(l == 0)
    def _():
        x_ref[...] = emb_ref[...].reshape(R, H)

    def layer_norm(v, w, b):
        # one-pass LN: E[x] and E[x^2] are independent cross-lane reductions
        mu = jnp.mean(v, axis=-1, keepdims=True)
        ms = jnp.mean(v * v, axis=-1, keepdims=True)
        var = jnp.maximum(ms - mu * mu, 0.0)
        return (v - mu) * lax.rsqrt(var + 1e-5) * w + b

    x = x_ref[...]                                              # (R, H) f32

    # ---- self-attention block (norm_first; dropout1 = identity) ------------
    h = layer_norm(x, ln1w_ref[0], ln1b_ref[0])
    qkv = jnp.dot(h.astype(bf16), qkvw_ref[0],
                  preferred_element_type=jnp.float32) + qkvb_ref[0]   # (R,3H)
    qkv = qkv.reshape(Bt, S, 3 * H)
    q = qkv[:, :, 0 * H:1 * H]                   # 1/sqrt(hd) folded into W_q
    k = qkv[:, :, 1 * H:2 * H]
    v = qkv[:, :, 2 * H:3 * H]

    # head split kept as lane-slice + axis-0 concat; single-batch-dim einsums
    # are the batched-dot form known to lower cleanly on Mosaic.
    def to_z(t):                                 # (Bt,S,H) -> (nhead*Bt,S,hd)
        return jnp.concatenate(
            [t[:, :, i * hd:(i + 1) * hd] for i in range(nhead)], axis=0)

    qz = to_z(q).astype(bf16)
    kz = to_z(k).astype(bf16)
    vz = to_z(v).astype(bf16)

    scores = jnp.einsum('zqd,zkd->zqk', qz, kz,
                        preferred_element_type=jnp.float32)     # (Z,S,S) f32

    # causal mask generated in-kernel (a few VPU ops; no HBM/VMEM constant)
    row = lax.broadcasted_iota(jnp.int32, (S, S), 0)
    col = lax.broadcasted_iota(jnp.int32, (S, S), 1)
    causal = jnp.where(col <= row, jnp.float32(0.0), jnp.float32(-1e30))
    scores = scores + causal[None, :, :]

    m = jnp.max(scores, axis=-1, keepdims=True)
    p = jnp.exp(scores - m)
    denom = jnp.sum(p, axis=-1, keepdims=True)
    p = p * pl.reciprocal(denom, approx=True)                   # EUP recip
    az = jnp.einsum('zqk,zkd->zqd', p.astype(bf16), vz,
                    preferred_element_type=jnp.float32)         # (Z,S,hd)

    attn = jnp.concatenate(
        [az[i * Bt:(i + 1) * Bt] for i in range(nhead)], axis=-1)  # (Bt,S,H)
    attn = attn.reshape(R, H)
    attn = jnp.dot(attn.astype(bf16), ow_ref[0],
                   preferred_element_type=jnp.float32) + ob_ref[0]
    x = x + attn                                                # residual

    # ---- feed-forward block (norm_first; dropout2 = identity) --------------
    h = layer_norm(x, ln2w_ref[0], ln2b_ref[0])
    h1 = jnp.dot(h.astype(bf16), f1w_ref[0],
                 preferred_element_type=jnp.float32) + f1b_ref[0]     # (R,4H)
    h1 = 0.5 * h1 * (1.0 + lax.erf(h1 * inv_sqrt2))             # exact GELU
    h2 = jnp.dot(h1.astype(bf16), f2w_ref[0],
                 preferred_element_type=jnp.float32) + f2b_ref[0]     # (R,H)
    x = x + h2                                                  # residual

    x_ref[...] = x                                              # carry

    # flush final residual for this batch tile (layer axis is innermost)
    @pl.when(l == n_layers - 1)
    def _():
        xout_ref[...] = x.reshape(Bt, S, H)


# ---------------------------------------------------------------------------
# Kernel 2 (epilogue): final LayerNorm + lane-dense vocab projection.
# ---------------------------------------------------------------------------
def _head_kernel(x_ref, lnfw_ref, lnfb_ref, fcw_ref, fcb_ref, o_ref):
    Bt, S, H = x_ref.shape
    R = Bt * S
    Vp = o_ref.shape[-1]

    x = x_ref[...].reshape(R, H)
    mu = jnp.mean(x, axis=-1, keepdims=True)
    ms = jnp.mean(x * x, axis=-1, keepdims=True)
    var = jnp.maximum(ms - mu * mu, 0.0)
    xf = (x - mu) * lax.rsqrt(var + 1e-5) * lnfw_ref[...] + lnfb_ref[...]
    logits = jnp.dot(xf.astype(jnp.bfloat16), fcw_ref[...],
                     preferred_element_type=jnp.float32) + fcb_ref[...]
    o_ref[...] = logits.reshape(Bt, S, Vp)


def _pick_batch_tile(B, S, target_rows=512):
    """Largest divisor of B with Bt*S <= target_rows, keeping >= 2 batch tiles
    when B > 1 so the parallel grid axis can shard across 2 TCs (v7x)."""
    best = 1
    for bt in range(1, B + 1):
        if B % bt != 0:
            continue
        if B > 1 and B // bt < 2:
            continue
        if bt * S <= max(target_rows, S):
            best = bt
    return best


def _vmem_limit(est_bytes):
    """Clamp the requested VMEM budget to 3/4 of per-core capacity."""
    try:
        cap = int(pltpu.get_tpu_info().vmem_capacity_bytes)
    except Exception:
        cap = 64 * 1024 * 1024            # v7x per-core VMEM (safe lower bound)
    return int(min(max(int(est_bytes), 32 * 1024 * 1024), (cap * 3) // 4))


def char_transformer_forward(x_ids, p, *, nhead):
    """Embedding gather + pos-enc (glue), then two pallas_calls:
    (batch_tile, layer) encoder stack, and a small LN+fc_out epilogue."""
    B, S = x_ids.shape
    H = p["emb"].shape[1]
    V = p["fc_w"].shape[1]
    L = p["ln1_w"].shape[0]
    FF = p["ff1_w"].shape[2]
    hd = H // nhead
    Vp = ((V + 127) // 128) * 128          # lane-dense (128-padded) logits
    bf16 = jnp.bfloat16

    # ---- glue outside the kernel --------------------------------------------
    # embedding lookup; sqrt(H) scale and pos-enc add folded here once
    emb = (jnp.take(p["emb"], x_ids, axis=0) * jnp.float32(math.sqrt(H))
           + p["pe"][:, :S, :]).astype(jnp.float32)              # (B,S,H)

    # fold the 1/sqrt(head_dim) attention scale into the Q projection
    scale = 1.0 / math.sqrt(hd)
    qscale = jnp.concatenate([jnp.full((H,), scale, jnp.float32),
                              jnp.ones((2 * H,), jnp.float32)])
    qkv_w = (p["qkv_w"] * qscale[None, None, :]).astype(bf16)
    qkv_b = (p["qkv_b"] * qscale[None, None, :]).astype(jnp.float32)
    out_w = p["out_w"].astype(bf16)
    ff1_w = p["ff1_w"].astype(bf16)
    ff2_w = p["ff2_w"].astype(bf16)
    fc_w = jnp.zeros((H, Vp), bf16).at[:, :V].set(p["fc_w"].astype(bf16))
    fc_b = jnp.zeros((1, Vp), jnp.float32).at[:, :V].set(p["fc_b"].reshape(1, V))

    Bt = _pick_batch_tile(B, S)
    n_btiles = B // Bt
    R = Bt * S
    Z = Bt * nhead

    # ---- pallas_call 1: encoder-layer stack ---------------------------------
    def layered(a):            # per-layer block, indexed by the layer grid axis
        nt = a.ndim - 1
        return pl.BlockSpec((1,) + a.shape[1:],
                            lambda b, l, _nt=nt: (l,) + (0,) * _nt)

    layer_in_arrays = [
        emb,
        p["ln1_w"], p["ln1_b"], qkv_w, qkv_b,
        out_w, p["out_b"], p["ln2_w"], p["ln2_b"],
        ff1_w, p["ff1_b"], ff2_w, p["ff2_b"],
    ]
    layer_in_specs = [
        pl.BlockSpec((Bt, S, H), lambda b, l: (b, 0, 0)),        # emb tile
        layered(p["ln1_w"]), layered(p["ln1_b"]), layered(qkv_w), layered(qkv_b),
        layered(out_w), layered(p["out_b"]),
        layered(p["ln2_w"]), layered(p["ln2_b"]),
        layered(ff1_w), layered(p["ff1_b"]), layered(ff2_w), layered(p["ff2_b"]),
    ]

    # VMEM budget: double-buffered per-layer weights + activation blocks +
    # in-kernel intermediates (qkv/q/k/v, h1 (R,4H), scores & probs (Z,S,S))
    per_layer_w = (H * 3 * H + H * H + H * FF + FF * H) * 2             # bf16
    per_layer_v = (3 * H + 6 * H + FF) * 4                              # f32
    act_blocks = 2 * (Bt * S * H * 4)                                   # in+out
    interm = (R * (3 * H + 3 * H + FF + 2 * H) + 3 * Z * S * S) * 4
    est = 2 * (per_layer_w + per_layer_v + act_blocks) + R * H * 4 + interm
    vmem_layers = _vmem_limit(int(est * 1.3))

    x_res = pl.pallas_call(
        functools.partial(_layers_kernel, nhead),
        out_shape=jax.ShapeDtypeStruct((B, S, H), jnp.float32),
        grid=(n_btiles, L),
        in_specs=layer_in_specs,
        out_specs=pl.BlockSpec((Bt, S, H), lambda b, l: (b, 0, 0)),
        scratch_shapes=[pltpu.VMEM((R, H), jnp.float32)],
        compiler_params=pltpu.CompilerParams(
            dimension_semantics=("parallel", "arbitrary"),
            vmem_limit_bytes=vmem_layers),
    )(*layer_in_arrays)

    # ---- pallas_call 2: final LayerNorm + fc_out (epilogue) -----------------
    est_h = (2 * (Bt * S * H * 4 + H * Vp * 2 + Vp * 4 + 2 * H * 4
                  + Bt * S * Vp * 4) + R * (H + Vp) * 4)
    vmem_head = _vmem_limit(int(est_h * 1.3))

    logits_padded = pl.pallas_call(
        _head_kernel,
        out_shape=jax.ShapeDtypeStruct((B, S, Vp), jnp.float32),
        grid=(n_btiles,),
        in_specs=[
            pl.BlockSpec((Bt, S, H), lambda b: (b, 0, 0)),
            pl.BlockSpec((1, H), lambda b: (0, 0)),
            pl.BlockSpec((1, H), lambda b: (0, 0)),
            pl.BlockSpec((H, Vp), lambda b: (0, 0)),
            pl.BlockSpec((1, Vp), lambda b: (0, 0)),
        ],
        out_specs=pl.BlockSpec((Bt, S, Vp), lambda b: (b, 0, 0)),
        compiler_params=pltpu.CompilerParams(
            dimension_semantics=("parallel",),
            vmem_limit_bytes=vmem_head),
    )(x_res, p["lnf_w"], p["lnf_b"], fc_w, fc_b)

    return logits_padded[:, :, :V]


def init_params(key, vocab_size, hidden, seq_len, num_layers, nhead):
    """Deterministic synthetic parameters with the shapes implied by __init__."""
    H, L, FF = hidden, num_layers, 4 * hidden
    ks = jax.random.split(key, 6)

    def u(k, shape, s):
        return jax.random.uniform(k, shape, jnp.float32, -s, s)

    # sinusoidal positional encoding buffer (exactly as PositionalEncoding)
    pos = jnp.arange(seq_len, dtype=jnp.float32)[:, None]
    div = jnp.exp(jnp.arange(0, H, 2, dtype=jnp.float32) * (-math.log(10000.0) / H))
    pe = jnp.zeros((seq_len, H), jnp.float32)
    pe = pe.at[:, 0::2].set(jnp.sin(pos * div))
    pe = pe.at[:, 1::2].set(jnp.cos(pos * div))

    return {
        "emb":   u(ks[0], (vocab_size, H), 0.1),         # embedding.weight ~ U(-0.1, 0.1)
        "pe":    pe[None],                               # (1, S, H) buffer
        # per-layer params stacked on a leading num_layers axis;
        # weight matrices stored transposed as (in, out); vectors as (L, 1, X)
        "ln1_w": jnp.ones((L, 1, H), jnp.float32),
        "ln1_b": jnp.zeros((L, 1, H), jnp.float32),
        "qkv_w": u(ks[1], (L, H, 3 * H), 0.05),          # in_proj_weight^T
        "qkv_b": jnp.zeros((L, 1, 3 * H), jnp.float32),
        "out_w": u(ks[2], (L, H, H), 0.05),              # out_proj.weight^T
        "out_b": jnp.zeros((L, 1, H), jnp.float32),
        "ln2_w": jnp.ones((L, 1, H), jnp.float32),
        "ln2_b": jnp.zeros((L, 1, H), jnp.float32),
        "ff1_w": u(ks[3], (L, H, FF), 0.05),             # linear1.weight^T
        "ff1_b": jnp.zeros((L, 1, FF), jnp.float32),
        "ff2_w": u(ks[4], (L, FF, H), 0.05),             # linear2.weight^T
        "ff2_b": jnp.zeros((L, 1, H), jnp.float32),
        "lnf_w": jnp.ones((1, H), jnp.float32),          # layer_norm.weight
        "lnf_b": jnp.zeros((1, H), jnp.float32),         # layer_norm.bias
        "fc_w":  u(ks[5], (H, vocab_size), 0.1),         # fc_out.weight^T ~ U(-0.1, 0.1)
        "fc_b":  jnp.zeros((vocab_size,), jnp.float32),  # fc_out.bias = 0
    }


if __name__ == "__main__":
    # lane-friendly small config: H multiple of 128, head_dim = 32
    vocab_size, hidden, seq_len, num_layers, nhead, batch = 65, 128, 16, 2, 4, 2

    key = jax.random.PRNGKey(0)
    pkey, xkey = jax.random.split(key)
    params = init_params(pkey, vocab_size, hidden, seq_len, num_layers, nhead)
    x_ids = jax.random.randint(xkey, (batch, seq_len), 0, vocab_size, dtype=jnp.int32)

    fwd = jax.jit(functools.partial(char_transformer_forward, nhead=nhead))
    logits = fwd(x_ids, params)
    jax.block_until_ready(logits)
    assert logits.shape == (batch, seq_len, vocab_size)
    assert bool(jnp.all(jnp.isfinite(logits)))
    print("KERNEL_OK")
</pallas_src>

<mosaic_0001>
module attributes {stable_mosaic.version = 11 : i64} {
  func.func @_layers_kernel(%arg0: i32, %arg1: i32, %arg2: memref<1x16x128xf32, #tpu.memory_space<vmem>>, %arg3: memref<1x1x128xf32, #tpu.memory_space<vmem>>, %arg4: memref<1x1x128xf32, #tpu.memory_space<vmem>>, %arg5: memref<1x128x384xbf16, #tpu.memory_space<vmem>>, %arg6: memref<1x1x384xf32, #tpu.memory_space<vmem>>, %arg7: memref<1x128x128xbf16, #tpu.memory_space<vmem>>, %arg8: memref<1x1x128xf32, #tpu.memory_space<vmem>>, %arg9: memref<1x1x128xf32, #tpu.memory_space<vmem>>, %arg10: memref<1x1x128xf32, #tpu.memory_space<vmem>>, %arg11: memref<1x128x512xbf16, #tpu.memory_space<vmem>>, %arg12: memref<1x1x512xf32, #tpu.memory_space<vmem>>, %arg13: memref<1x512x128xbf16, #tpu.memory_space<vmem>>, %arg14: memref<1x1x128xf32, #tpu.memory_space<vmem>>, %arg15: memref<1x16x128xf32, #tpu.memory_space<vmem>>, %arg16: memref<16x128xf32, #tpu.memory_space<vmem>>) attributes {dimension_semantics = [#tpu.dimension_semantics<parallel>, #tpu.dimension_semantics<arbitrary>], iteration_bounds = array<i64: 2, 2>, scalar_prefetch = 0 : i64, scratch_operands = 1 : i64, tpu.core_type = #tpu.core_type<tc>, window_params = [{transform_indices = @transform_0, window_bounds = array<i64: 1, 16, 128>}, {transform_indices = @transform_1, window_bounds = array<i64: 1, 1, 128>}, {transform_indices = @transform_2, window_bounds = array<i64: 1, 1, 128>}, {transform_indices = @transform_3, window_bounds = array<i64: 1, 128, 384>}, {transform_indices = @transform_4, window_bounds = array<i64: 1, 1, 384>}, {transform_indices = @transform_5, window_bounds = array<i64: 1, 128, 128>}, {transform_indices = @transform_6, window_bounds = array<i64: 1, 1, 128>}, {transform_indices = @transform_7, window_bounds = array<i64: 1, 1, 128>}, {transform_indices = @transform_8, window_bounds = array<i64: 1, 1, 128>}, {transform_indices = @transform_9, window_bounds = array<i64: 1, 128, 512>}, {transform_indices = @transform_10, window_bounds = array<i64: 1, 1, 512>}, {transform_indices = @transform_11, window_bounds = array<i64: 1, 512, 128>}, {transform_indices = @transform_12, window_bounds = array<i64: 1, 1, 128>}, {transform_indices = @transform_13, window_bounds = array<i64: 1, 16, 128>}]} {
    %c0_i32 = arith.constant 0 : i32
    %0 = arith.cmpi eq, %arg1, %c0_i32 : i32
    %1 = arith.extui %0 : i1 to i32
    %c0_i32_0 = arith.constant 0 : i32
    %2 = arith.cmpi ne, %1, %c0_i32_0 : i32
    scf.if %2 {
      %c0_65 = arith.constant 0 : index
      %c0_66 = arith.constant 0 : index
      %c0_67 = arith.constant 0 : index
      %156 = vector.load %arg2[%c0_65, %c0_66, %c0_67] : memref<1x16x128xf32, #tpu.memory_space<vmem>>, vector<1x16x128xf32>
      %157 = vector.shape_cast %156 : vector<1x16x128xf32> to vector<16x128xf32>
      %c0_68 = arith.constant 0 : index
      %c0_69 = arith.constant 0 : index
      %158 = vector.load %arg16[%c0_68, %c0_69] : memref<16x128xf32, #tpu.memory_space<vmem>>, vector<16x128xf32>
      tpu.vector_store %arg16[%c0_68, %c0_69], %157 {strides = array<i32>} : memref<16x128xf32, #tpu.memory_space<vmem>>, vector<16x128xf32>,
    } else {
    }
    %c0 = arith.constant 0 : index
    %c0_1 = arith.constant 0 : index
    %3 = vector.load %arg16[%c0, %c0_1] : memref<16x128xf32, #tpu.memory_space<vmem>>, vector<16x128xf32>
    %c0_2 = arith.constant 0 : index
    %c0_3 = arith.constant 0 : index
    %c0_4 = arith.constant 0 : index
    %4 = vector.load %arg3[%c0_2, %c0_3, %c0_4] : memref<1x1x128xf32, #tpu.memory_space<vmem>>, vector<1x1x128xf32>
    %5 = vector.shape_cast %4 : vector<1x1x128xf32> to vector<1x128xf32>
    %c0_5 = arith.constant 0 : index
    %c0_6 = arith.constant 0 : index
    %c0_7 = arith.constant 0 : index
    %6 = vector.load %arg4[%c0_5, %c0_6, %c0_7] : memref<1x1x128xf32, #tpu.memory_space<vmem>>, vector<1x1x128xf32>
    %7 = vector.shape_cast %6 : vector<1x1x128xf32> to vector<1x128xf32>
    %cst = arith.constant dense<0.000000e+00> : vector<16xf32>
    %8 = vector.multi_reduction <add>, %3, %cst [1] : vector<16x128xf32> to vector<16xf32>
    %9 = vector.shape_cast %8 : vector<16xf32> to vector<16x1xf32>
    %cst_8 = arith.constant 1.280000e+02 : f32
    %10 = vector.broadcast %cst_8 : f32 to vector<16x1xf32>
    %11 = arith.divf %9, %10 : vector<16x1xf32>
    %12 = arith.mulf %3, %3 : vector<16x128xf32>
    %cst_9 = arith.constant dense<0.000000e+00> : vector<16xf32>
    %13 = vector.multi_reduction <add>, %12, %cst_9 [1] : vector<16x128xf32> to vector<16xf32>
    %14 = vector.shape_cast %13 : vector<16xf32> to vector<16x1xf32>
    %cst_10 = arith.constant 1.280000e+02 : f32
    %15 = vector.broadcast %cst_10 : f32 to vector<16x1xf32>
    %16 = arith.divf %14, %15 : vector<16x1xf32>
    %17 = arith.mulf %11, %11 : vector<16x1xf32>
    %18 = arith.subf %16, %17 : vector<16x1xf32>
    %cst_11 = arith.constant 0.000000e+00 : f32
    %19 = vector.broadcast %cst_11 : f32 to vector<16x1xf32>
    %20 = arith.maximumf %18, %19 : vector<16x1xf32>
    %21 = vector.broadcast %11 : vector<16x1xf32> to vector<16x128xf32>
    %22 = arith.subf %3, %21 : vector<16x128xf32>
    %cst_12 = arith.constant 9.99999974E-6 : f32
    %23 = vector.broadcast %cst_12 : f32 to vector<16x1xf32>
    %24 = arith.addf %20, %23 : vector<16x1xf32>
    %25 = math.rsqrt %24 : vector<16x1xf32>
    %26 = vector.broadcast %25 : vector<16x1xf32> to vector<16x128xf32>
    %27 = arith.mulf %22, %26 : vector<16x128xf32>
    %28 = vector.broadcast %5 : vector<1x128xf32> to vector<16x128xf32>
    %29 = arith.mulf %27, %28 : vector<16x128xf32>
    %30 = vector.broadcast %7 : vector<1x128xf32> to vector<16x128xf32>
    %31 = arith.addf %29, %30 : vector<16x128xf32>
    %32 = arith.truncf %31 : vector<16x128xf32> to vector<16x128xbf16>
    %c0_13 = arith.constant 0 : index
    %c0_14 = arith.constant 0 : index
    %c0_15 = arith.constant 0 : index
    %33 = vector.load %arg5[%c0_13, %c0_14, %c0_15] : memref<1x128x384xbf16, #tpu.memory_space<vmem>>, vector<1x128x384xbf16>
    %34 = vector.shape_cast %33 : vector<1x128x384xbf16> to vector<128x384xbf16>
    %cst_16 = arith.constant dense<0.000000e+00> : vector<16x384xf32>
    %35 = tpu.matmul %32, %34, %cst_16 {dimension_numbers = #tpu.dot_dimension_numbers<[1], [0], [0], [1], [0, 0, 1, 1], [], []>} : vector<16x128xbf16>, vector<128x384xbf16>, vector<16x384xf32> -> vector<16x384xf32>
    %c0_17 = arith.constant 0 : index
    %c0_18 = arith.constant 0 : index
    %c0_19 = arith.constant 0 : index
    %36 = vector.load %arg6[%c0_17, %c0_18, %c0_19] : memref<1x1x384xf32, #tpu.memory_space<vmem>>, vector<1x1x384xf32>
    %37 = vector.shape_cast %36 : vector<1x1x384xf32> to vector<1x384xf32>
    %38 = vector.broadcast %37 : vector<1x384xf32> to vector<16x384xf32>
    %39 = arith.addf %35, %38 : vector<16x384xf32>
    %40 = vector.shape_cast %39 : vector<16x384xf32> to vector<1x16x384xf32>
    %41 = vector.extract_strided_slice %40 {offsets = [0, 0, 0], sizes = [1, 16, 128], strides = [1, 1, 1]} : vector<1x16x384xf32> to vector<1x16x128xf32>
    %42 = vector.extract_strided_slice %40 {offsets = [0, 0, 128], sizes = [1, 16, 128], strides = [1, 1, 1]} : vector<1x16x384xf32> to vector<1x16x128xf32>
    %43 = vector.extract_strided_slice %40 {offsets = [0, 0, 256], sizes = [1, 16, 128], strides = [1, 1, 1]} : vector<1x16x384xf32> to vector<1x16x128xf32>
    %44 = vector.extract_strided_slice %41 {offsets = [0, 0, 0], sizes = [1, 16, 32], strides = [1, 1, 1]} : vector<1x16x128xf32> to vector<1x16x32xf32>
    %45 = vector.extract_strided_slice %41 {offsets = [0, 0, 32], sizes = [1, 16, 32], strides = [1, 1, 1]} : vector<1x16x128xf32> to vector<1x16x32xf32>
    %46 = vector.extract_strided_slice %41 {offsets = [0, 0, 64], sizes = [1, 16, 32], strides = [1, 1, 1]} : vector<1x16x128xf32> to vector<1x16x32xf32>
    %47 = vector.extract_strided_slice %41 {offsets = [0, 0, 96], sizes = [1, 16, 32], strides = [1, 1, 1]} : vector<1x16x128xf32> to vector<1x16x32xf32>
    %48 = tpu.concatenate %44, %45, %46, %47 in 0 : vector<1x16x32xf32>, vector<1x16x32xf32>, vector<1x16x32xf32>, vector<1x16x32xf32> -> vector<4x16x32xf32>
    %49 = arith.truncf %48 : vector<4x16x32xf32> to vector<4x16x32xbf16>
    %50 = vector.extract_strided_slice %42 {offsets = [0, 0, 0], sizes = [1, 16, 32], strides = [1, 1, 1]} : vector<1x16x128xf32> to vector<1x16x32xf32>
    %51 = vector.extract_strided_slice %42 {offsets = [0, 0, 32], sizes = [1, 16, 32], strides = [1, 1, 1]} : vector<1x16x128xf32> to vector<1x16x32xf32>
    %52 = vector.extract_strided_slice %42 {offsets = [0, 0, 64], sizes = [1, 16, 32], strides = [1, 1, 1]} : vector<1x16x128xf32> to vector<1x16x32xf32>
    %53 = vector.extract_strided_slice %42 {offsets = [0, 0, 96], sizes = [1, 16, 32], strides = [1, 1, 1]} : vector<1x16x128xf32> to vector<1x16x32xf32>
    %54 = tpu.concatenate %50, %51, %52, %53 in 0 : vector<1x16x32xf32>, vector<1x16x32xf32>, vector<1x16x32xf32>, vector<1x16x32xf32> -> vector<4x16x32xf32>
    %55 = arith.truncf %54 : vector<4x16x32xf32> to vector<4x16x32xbf16>
    %56 = vector.extract_strided_slice %43 {offsets = [0, 0, 0], sizes = [1, 16, 32], strides = [1, 1, 1]} : vector<1x16x128xf32> to vector<1x16x32xf32>
    %57 = vector.extract_strided_slice %43 {offsets = [0, 0, 32], sizes = [1, 16, 32], strides = [1, 1, 1]} : vector<1x16x128xf32> to vector<1x16x32xf32>
    %58 = vector.extract_strided_slice %43 {offsets = [0, 0, 64], sizes = [1, 16, 32], strides = [1, 1, 1]} : vector<1x16x128xf32> to vector<1x16x32xf32>
    %59 = vector.extract_strided_slice %43 {offsets = [0, 0, 96], sizes = [1, 16, 32], strides = [1, 1, 1]} : vector<1x16x128xf32> to vector<1x16x32xf32>
    %60 = tpu.concatenate %56, %57, %58, %59 in 0 : vector<1x16x32xf32>, vector<1x16x32xf32>, vector<1x16x32xf32>, vector<1x16x32xf32> -> vector<4x16x32xf32>
    %61 = arith.truncf %60 : vector<4x16x32xf32> to vector<4x16x32xbf16>
    "tpu.trace_start"() <{level = 10 : i32, message = "zqd,zkd->zqk"}> : () -> ()
    %cst_20 = arith.constant dense<0.000000e+00> : vector<4x16x16xf32>
    %62 = tpu.matmul %49, %55, %cst_20 {dimension_numbers = #tpu.dot_dimension_numbers<[2], [2], [1], [1], [0, 0, 0, 1, 1, 1], [0], [0]>} : vector<4x16x32xbf16>, vector<4x16x32xbf16>, vector<4x16x16xf32> -> vector<4x16x16xf32>
    "tpu.trace_stop"() : () -> ()
    %63 = tpu.iota {dimensions = array<i32: 0>} : vector<16x16xi32>
    %64 = tpu.iota {dimensions = array<i32: 1>} : vector<16x16xi32>
    %65 = arith.cmpi sle, %64, %63 : vector<16x16xi32>
    %cst_21 = arith.constant 0.000000e+00 : f32
    %cst_22 = arith.constant -1.000000e+30 : f32
    %66 = vector.broadcast %cst_21 : f32 to vector<16x16xf32>
    %67 = vector.broadcast %cst_22 : f32 to vector<16x16xf32>
    %68 = arith.select %65, %66, %67 : vector<16x16xi1>, vector<16x16xf32>
    %69 = vector.shape_cast %68 : vector<16x16xf32> to vector<1x16x16xf32>
    %70 = vector.broadcast %69 : vector<1x16x16xf32> to vector<4x16x16xf32>
    %71 = arith.addf %62, %70 : vector<4x16x16xf32>
    %cst_23 = arith.constant dense<0xFF800000> : vector<4x16xf32>
    %72 = vector.multi_reduction <maximumf>, %71, %cst_23 [2] : vector<4x16x16xf32> to vector<4x16xf32>
    %73 = vector.shape_cast %72 : vector<4x16xf32> to vector<4x16x1xf32>
    %74 = vector.broadcast %73 : vector<4x16x1xf32> to vector<4x16x16xf32>
    %75 = arith.subf %71, %74 : vector<4x16x16xf32>
    %76 = math.exp %75 : vector<4x16x16xf32>
    %cst_24 = arith.constant dense<0.000000e+00> : vector<4x16xf32>
    %77 = vector.multi_reduction <add>, %76, %cst_24 [2] : vector<4x16x16xf32> to vector<4x16xf32>
    %78 = vector.shape_cast %77 : vector<4x16xf32> to vector<4x16x1xf32>
    %79 = tpu.reciprocal %78 {approx = true} : vector<4x16x1xf32> -> vector<4x16x1xf32>
    %80 = vector.broadcast %79 : vector<4x16x1xf32> to vector<4x16x16xf32>
    %81 = arith.mulf %76, %80 : vector<4x16x16xf32>
    %82 = arith.truncf %81 : vector<4x16x16xf32> to vector<4x16x16xbf16>
    "tpu.trace_start"() <{level = 10 : i32, message = "zqk,zkd->zqd"}> : () -> ()
    %cst_25 = arith.constant dense<0.000000e+00> : vector<4x16x32xf32>
    %83 = tpu.matmul %82, %61, %cst_25 {dimension_numbers = #tpu.dot_dimension_numbers<[2], [1], [1], [2], [0, 0, 0, 1, 1, 2], [0], [0]>} : vector<4x16x16xbf16>, vector<4x16x32xbf16>, vector<4x16x32xf32> -> vector<4x16x32xf32>
    "tpu.trace_stop"() : () -> ()
    %84 = vector.extract_strided_slice %83 {offsets = [0, 0, 0], sizes = [1, 16, 32], strides = [1, 1, 1]} : vector<4x16x32xf32> to vector<1x16x32xf32>
    %85 = vector.extract_strided_slice %83 {offsets = [1, 0, 0], sizes = [1, 16, 32], strides = [1, 1, 1]} : vector<4x16x32xf32> to vector<1x16x32xf32>
    %86 = vector.extract_strided_slice %83 {offsets = [2, 0, 0], sizes = [1, 16, 32], strides = [1, 1, 1]} : vector<4x16x32xf32> to vector<1x16x32xf32>
    %87 = vector.extract_strided_slice %83 {offsets = [3, 0, 0], sizes = [1, 16, 32], strides = [1, 1, 1]} : vector<4x16x32xf32> to vector<1x16x32xf32>
    %88 = tpu.concatenate %84, %85, %86, %87 in 2 : vector<1x16x32xf32>, vector<1x16x32xf32>, vector<1x16x32xf32>, vector<1x16x32xf32> -> vector<1x16x128xf32>
    %89 = vector.shape_cast %88 : vector<1x16x128xf32> to vector<16x128xf32>
    %90 = arith.truncf %89 : vector<16x128xf32> to vector<16x128xbf16>
    %c0_26 = arith.constant 0 : index
    %c0_27 = arith.constant 0 : index
    %c0_28 = arith.constant 0 : index
    %91 = vector.load %arg7[%c0_26, %c0_27, %c0_28] : memref<1x128x128xbf16, #tpu.memory_space<vmem>>, vector<1x128x128xbf16>
    %92 = vector.shape_cast %91 : vector<1x128x128xbf16> to vector<128x128xbf16>
    %cst_29 = arith.constant dense<0.000000e+00> : vector<16x128xf32>
    %93 = tpu.matmul %90, %92, %cst_29 {dimension_numbers = #tpu.dot_dimension_numbers<[1], [0], [0], [1], [0, 0, 1, 1], [], []>} : vector<16x128xbf16>, vector<128x128xbf16>, vector<16x128xf32> -> vector<16x128xf32>
    %c0_30 = arith.constant 0 : index
    %c0_31 = arith.constant 0 : index
    %c0_32 = arith.constant 0 : index
    %94 = vector.load %arg8[%c0_30, %c0_31, %c0_32] : memref<1x1x128xf32, #tpu.memory_space<vmem>>, vector<1x1x128xf32>
    %95 = vector.shape_cast %94 : vector<1x1x128xf32> to vector<1x128xf32>
    %96 = vector.broadcast %95 : vector<1x128xf32> to vector<16x128xf32>
    %97 = arith.addf %93, %96 : vector<16x128xf32>
    %98 = arith.addf %3, %97 : vector<16x128xf32>
    %c0_33 = arith.constant 0 : index
    %c0_34 = arith.constant 0 : index
    %c0_35 = arith.constant 0 : index
    %99 = vector.load %arg9[%c0_33, %c0_34, %c0_35] : memref<1x1x128xf32, #tpu.memory_space<vmem>>, vector<1x1x128xf32>
    %100 = vector.shape_cast %99 : vector<1x1x128xf32> to vector<1x128xf32>
    %c0_36 = arith.constant 0 : index
    %c0_37 = arith.constant 0 : index
    %c0_38 = arith.constant 0 : index
    %101 = vector.load %arg10[%c0_36, %c0_37, %c0_38] : memref<1x1x128xf32, #tpu.memory_space<vmem>>, vector<1x1x128xf32>
    %102 = vector.shape_cast %101 : vector<1x1x128xf32> to vector<1x128xf32>
    %cst_39 = arith.constant dense<0.000000e+00> : vector<16xf32>
    %103 = vector.multi_reduction <add>, %98, %cst_39 [1] : vector<16x128xf32> to vector<16xf32>
    %104 = vector.shape_cast %103 : vector<16xf32> to vector<16x1xf32>
    %cst_40 = arith.constant 1.280000e+02 : f32
    %105 = vector.broadcast %cst_40 : f32 to vector<16x1xf32>
    %106 = arith.divf %104, %105 : vector<16x1xf32>
    %107 = arith.mulf %98, %98 : vector<16x128xf32>
    %cst_41 = arith.constant dense<0.000000e+00> : vector<16xf32>
    %108 = vector.multi_reduction <add>, %107, %cst_41 [1] : vector<16x128xf32> to vector<16xf32>
    %109 = vector.shape_cast %108 : vector<16xf32> to vector<16x1xf32>
    %cst_42 = arith.constant 1.280000e+02 : f32
    %110 = vector.broadcast %cst_42 : f32 to vector<16x1xf32>
    %111 = arith.divf %109, %110 : vector<16x1xf32>
    %112 = arith.mulf %106, %106 : vector<16x1xf32>
    %113 = arith.subf %111, %112 : vector<16x1xf32>
    %cst_43 = arith.constant 0.000000e+00 : f32
    %114 = vector.broadcast %cst_43 : f32 to vector<16x1xf32>
    %115 = arith.maximumf %113, %114 : vector<16x1xf32>
    %116 = vector.broadcast %106 : vector<16x1xf32> to vector<16x128xf32>
    %117 = arith.subf %98, %116 : vector<16x128xf32>
    %cst_44 = arith.constant 9.99999974E-6 : f32
    %118 = vector.broadcast %cst_44 : f32 to vector<16x1xf32>
    %119 = arith.addf %115, %118 : vector<16x1xf32>
    %120 = math.rsqrt %119 : vector<16x1xf32>
    %121 = vector.broadcast %120 : vector<16x1xf32> to vector<16x128xf32>
    %122 = arith.mulf %117, %121 : vector<16x128xf32>
    %123 = vector.broadcast %100 : vector<1x128xf32> to vector<16x128xf32>
    %124 = arith.mulf %122, %123 : vector<16x128xf32>
    %125 = vector.broadcast %102 : vector<1x128xf32> to vector<16x128xf32>
    %126 = arith.addf %124, %125 : vector<16x128xf32>
    %127 = arith.truncf %126 : vector<16x128xf32> to vector<16x128xbf16>
    %c0_45 = arith.constant 0 : index
    %c0_46 = arith.constant 0 : index
    %c0_47 = arith.constant 0 : index
    %128 = vector.load %arg11[%c0_45, %c0_46, %c0_47] : memref<1x128x512xbf16, #tpu.memory_space<vmem>>, vector<1x128x512xbf16>
    %129 = vector.shape_cast %128 : vector<1x128x512xbf16> to vector<128x512xbf16>
    %cst_48 = arith.constant dense<0.000000e+00> : vector<16x512xf32>
    %130 = tpu.matmul %127, %129, %cst_48 {dimension_numbers = #tpu.dot_dimension_numbers<[1], [0], [0], [1], [0, 0, 1, 1], [], []>} : vector<16x128xbf16>, vector<128x512xbf16>, vector<16x512xf32> -> vector<16x512xf32>
    %c0_49 = arith.constant 0 : index
    %c0_50 = arith.constant 0 : index
    %c0_51 = arith.constant 0 : index
    %131 = vector.load %arg12[%c0_49, %c0_50, %c0_51] : memref<1x1x512xf32, #tpu.memory_space<vmem>>, vector<1x1x512xf32>
    %132 = vector.shape_cast %131 : vector<1x1x512xf32> to vector<1x512xf32>
    %133 = vector.broadcast %132 : vector<1x512xf32> to vector<16x512xf32>
    %134 = arith.addf %130, %133 : vector<16x512xf32>
    %cst_52 = arith.constant 5.000000e-01 : f32
    %135 = vector.broadcast %cst_52 : f32 to vector<16x512xf32>
    %136 = arith.mulf %135, %134 : vector<16x512xf32>
    %cst_53 = arith.constant 0.707106769 : f32
    %137 = vector.broadcast %cst_53 : f32 to vector<16x512xf32>
    %138 = arith.mulf %134, %137 : vector<16x512xf32>
    %139 = math.erf %138 : vector<16x512xf32>
    %cst_54 = arith.constant 1.000000e+00 : f32
    %140 = vector.broadcast %cst_54 : f32 to vector<16x512xf32>
    %141 = arith.addf %140, %139 : vector<16x512xf32>
    %142 = arith.mulf %136, %141 : vector<16x512xf32>
    %143 = arith.truncf %142 : vector<16x512xf32> to vector<16x512xbf16>
    %c0_55 = arith.constant 0 : index
    %c0_56 = arith.constant 0 : index
    %c0_57 = arith.constant 0 : index
    %144 = vector.load %arg13[%c0_55, %c0_56, %c0_57] : memref<1x512x128xbf16, #tpu.memory_space<vmem>>, vector<1x512x128xbf16>
    %145 = vector.shape_cast %144 : vector<1x512x128xbf16> to vector<512x128xbf16>
    %cst_58 = arith.constant dense<0.000000e+00> : vector<16x128xf32>
    %146 = tpu.matmul %143, %145, %cst_58 {dimension_numbers = #tpu.dot_dimension_numbers<[1], [0], [0], [1], [0, 0, 1, 1], [], []>} : vector<16x512xbf16>, vector<512x128xbf16>, vector<16x128xf32> -> vector<16x128xf32>
    %c0_59 = arith.constant 0 : index
    %c0_60 = arith.constant 0 : index
    %c0_61 = arith.constant 0 : index
    %147 = vector.load %arg14[%c0_59, %c0_60, %c0_61] : memref<1x1x128xf32, #tpu.memory_space<vmem>>, vector<1x1x128xf32>
    %148 = vector.shape_cast %147 : vector<1x1x128xf32> to vector<1x128xf32>
    %149 = vector.broadcast %148 : vector<1x128xf32> to vector<16x128xf32>
    %150 = arith.addf %146, %149 : vector<16x128xf32>
    %151 = arith.addf %98, %150 : vector<16x128xf32>
    %c0_62 = arith.constant 0 : index
    %c0_63 = arith.constant 0 : index
    %152 = vector.load %arg16[%c0_62, %c0_63] : memref<16x128xf32, #tpu.memory_space<vmem>>, vector<16x128xf32>
    tpu.vector_store %arg16[%c0_62, %c0_63], %151 {strides = array<i32>} : memref<16x128xf32, #tpu.memory_space<vmem>>, vector<16x128xf32>,
    %c1_i32 = arith.constant 1 : i32
    %153 = arith.cmpi eq, %arg1, %c1_i32 : i32
    %154 = arith.extui %153 : i1 to i32
    %c0_i32_64 = arith.constant 0 : i32
    %155 = arith.cmpi ne, %154, %c0_i32_64 : i32
    scf.if %155 {
      %156 = vector.shape_cast %151 : vector<16x128xf32> to vector<1x16x128xf32>
      %c0_65 = arith.constant 0 : index
      %c0_66 = arith.constant 0 : index
      %c0_67 = arith.constant 0 : index
      %157 = vector.load %arg15[%c0_65, %c0_66, %c0_67] : memref<1x16x128xf32, #tpu.memory_space<vmem>>, vector<1x16x128xf32>
      tpu.vector_store %arg15[%c0_65, %c0_66, %c0_67], %156 {strides = array<i32>} : memref<1x16x128xf32, #tpu.memory_space<vmem>>, vector<1x16x128xf32>,
    } else {
    }
    return
  }
  func.func @transform_0(%arg0: i32, %arg1: i32) -> (i32, i32, i32) {
    %c0_i32 = arith.constant 0 : i32
    %c0_i32_0 = arith.constant 0 : i32
    %c0_i32_1 = arith.constant 0 : i32
    return %arg0, %c0_i32, %c0_i32_0 : i32, i32, i32
  }
  func.func @transform_1(%arg0: i32, %arg1: i32) -> (i32, i32, i32) {
    %c0_i32 = arith.constant 0 : i32
    %c0_i32_0 = arith.constant 0 : i32
    %c0_i32_1 = arith.constant 0 : i32
    return %arg1, %c0_i32, %c0_i32_0 : i32, i32, i32
  }
  func.func @transform_2(%arg0: i32, %arg1: i32) -> (i32, i32, i32) {
    %c0_i32 = arith.constant 0 : i32
    %c0_i32_0 = arith.constant 0 : i32
    %c0_i32_1 = arith.constant 0 : i32
    return %arg1, %c0_i32, %c0_i32_0 : i32, i32, i32
  }
  func.func @transform_3(%arg0: i32, %arg1: i32) -> (i32, i32, i32) {
    %c0_i32 = arith.constant 0 : i32
    %c0_i32_0 = arith.constant 0 : i32
    %c0_i32_1 = arith.constant 0 : i32
    return %arg1, %c0_i32, %c0_i32_0 : i32, i32, i32
  }
  func.func @transform_4(%arg0: i32, %arg1: i32) -> (i32, i32, i32) {
    %c0_i32 = arith.constant 0 : i32
    %c0_i32_0 = arith.constant 0 : i32
    %c0_i32_1 = arith.constant 0 : i32
    return %arg1, %c0_i32, %c0_i32_0 : i32, i32, i32
  }
  func.func @transform_5(%arg0: i32, %arg1: i32) -> (i32, i32, i32) {
    %c0_i32 = arith.constant 0 : i32
    %c0_i32_0 = arith.constant 0 : i32
    %c0_i32_1 = arith.constant 0 : i32
    return %arg1, %c0_i32, %c0_i32_0 : i32, i32, i32
  }
  func.func @transform_6(%arg0: i32, %arg1: i32) -> (i32, i32, i32) {
    %c0_i32 = arith.constant 0 : i32
    %c0_i32_0 = arith.constant 0 : i32
    %c0_i32_1 = arith.constant 0 : i32
    return %arg1, %c0_i32, %c0_i32_0 : i32, i32, i32
  }
  func.func @transform_7(%arg0: i32, %arg1: i32) -> (i32, i32, i32) {
    %c0_i32 = arith.constant 0 : i32
    %c0_i32_0 = arith.constant 0 : i32
    %c0_i32_1 = arith.constant 0 : i32
    return %arg1, %c0_i32, %c0_i32_0 : i32, i32, i32
  }
  func.func @transform_8(%arg0: i32, %arg1: i32) -> (i32, i32, i32) {
    %c0_i32 = arith.constant 0 : i32
    %c0_i32_0 = arith.constant 0 : i32
    %c0_i32_1 = arith.constant 0 : i32
    return %arg1, %c0_i32, %c0_i32_0 : i32, i32, i32
  }
  func.func @transform_9(%arg0: i32, %arg1: i32) -> (i32, i32, i32) {
    %c0_i32 = arith.constant 0 : i32
    %c0_i32_0 = arith.constant 0 : i32
    %c0_i32_1 = arith.constant 0 : i32
    return %arg1, %c0_i32, %c0_i32_0 : i32, i32, i32
  }
  func.func @transform_10(%arg0: i32, %arg1: i32) -> (i32, i32, i32) {
    %c0_i32 = arith.constant 0 : i32
    %c0_i32_0 = arith.constant 0 : i32
    %c0_i32_1 = arith.constant 0 : i32
    return %arg1, %c0_i32, %c0_i32_0 : i32, i32, i32
  }
  func.func @transform_11(%arg0: i32, %arg1: i32) -> (i32, i32, i32) {
    %c0_i32 = arith.constant 0 : i32
    %c0_i32_0 = arith.constant 0 : i32
    %c0_i32_1 = arith.constant 0 : i32
    return %arg1, %c0_i32, %c0_i32_0 : i32, i32, i32
  }
  func.func @transform_12(%arg0: i32, %arg1: i32) -> (i32, i32, i32) {
    %c0_i32 = arith.constant 0 : i32
    %c0_i32_0 = arith.constant 0 : i32
    %c0_i32_1 = arith.constant 0 : i32
    return %arg1, %c0_i32, %c0_i32_0 : i32, i32, i32
  }
  func.func @transform_13(%arg0: i32, %arg1: i32) -> (i32, i32, i32) {
    %c0_i32 = arith.constant 0 : i32
    %c0_i32_0 = arith.constant 0 : i32
    %c0_i32_1 = arith.constant 0 : i32
    return %arg0, %c0_i32, %c0_i32_0 : i32, i32, i32
  }
}

module attributes {stable_mosaic.version = 11 : i64} {
  func.func @_head_kernel(%arg0: i32, %arg1: memref<1x16x128xf32, #tpu.memory_space<vmem>>, %arg2: memref<1x128xf32, #tpu.memory_space<vmem>>, %arg3: memref<1x128xf32, #tpu.memory_space<vmem>>, %arg4: memref<128x128xbf16, #tpu.memory_space<vmem>>, %arg5: memref<1x128xf32, #tpu.memory_space<vmem>>, %arg6: memref<1x16x128xf32, #tpu.memory_space<vmem>>) attributes {dimension_semantics = [#tpu.dimension_semantics<parallel>], iteration_bounds = array<i64: 2>, scalar_prefetch = 0 : i64, scratch_operands = 0 : i64, tpu.core_type = #tpu.core_type<tc>, window_params = [{transform_indices = @transform_0, window_bounds = array<i64: 1, 16, 128>}, {pipeline_mode = #tpu.pipeline_mode<synchronous>, transform_indices = @transform_1, window_bounds = array<i64: 1, 128>}, {pipeline_mode = #tpu.pipeline_mode<synchronous>, transform_indices = @transform_2, window_bounds = array<i64: 1, 128>}, {pipeline_mode = #tpu.pipeline_mode<synchronous>, transform_indices = @transform_3, window_bounds = array<i64: 128, 128>}, {pipeline_mode = #tpu.pipeline_mode<synchronous>, transform_indices = @transform_4, window_bounds = array<i64: 1, 128>}, {transform_indices = @transform_5, window_bounds = array<i64: 1, 16, 128>}]} {
    %c0 = arith.constant 0 : index
    %c0_0 = arith.constant 0 : index
    %c0_1 = arith.constant 0 : index
    %0 = vector.load %arg1[%c0, %c0_0, %c0_1] : memref<1x16x128xf32, #tpu.memory_space<vmem>>, vector<1x16x128xf32>
    %1 = vector.shape_cast %0 : vector<1x16x128xf32> to vector<16x128xf32>
    %cst = arith.constant dense<0.000000e+00> : vector<16xf32>
    %2 = vector.multi_reduction <add>, %1, %cst [1] : vector<16x128xf32> to vector<16xf32>
    %3 = vector.shape_cast %2 : vector<16xf32> to vector<16x1xf32>
    %cst_2 = arith.constant 1.280000e+02 : f32
    %4 = vector.broadcast %cst_2 : f32 to vector<16x1xf32>
    %5 = arith.divf %3, %4 : vector<16x1xf32>
    %6 = arith.mulf %1, %1 : vector<16x128xf32>
    %cst_3 = arith.constant dense<0.000000e+00> : vector<16xf32>
    %7 = vector.multi_reduction <add>, %6, %cst_3 [1] : vector<16x128xf32> to vector<16xf32>
    %8 = vector.shape_cast %7 : vector<16xf32> to vector<16x1xf32>
    %cst_4 = arith.constant 1.280000e+02 : f32
    %9 = vector.broadcast %cst_4 : f32 to vector<16x1xf32>
    %10 = arith.divf %8, %9 : vector<16x1xf32>
    %11 = arith.mulf %5, %5 : vector<16x1xf32>
    %12 = arith.subf %10, %11 : vector<16x1xf32>
    %cst_5 = arith.constant 0.000000e+00 : f32
    %13 = vector.broadcast %cst_5 : f32 to vector<16x1xf32>
    %14 = arith.maximumf %12, %13 : vector<16x1xf32>
    %15 = vector.broadcast %5 : vector<16x1xf32> to vector<16x128xf32>
    %16 = arith.subf %1, %15 : vector<16x128xf32>
    %cst_6 = arith.constant 9.99999974E-6 : f32
    %17 = vector.broadcast %cst_6 : f32 to vector<16x1xf32>
    %18 = arith.addf %14, %17 : vector<16x1xf32>
    %19 = math.rsqrt %18 : vector<16x1xf32>
    %20 = vector.broadcast %19 : vector<16x1xf32> to vector<16x128xf32>
    %21 = arith.mulf %16, %20 : vector<16x128xf32>
    %c0_7 = arith.constant 0 : index
    %c0_8 = arith.constant 0 : index
    %22 = vector.load %arg2[%c0_7, %c0_8] : memref<1x128xf32, #tpu.memory_space<vmem>>, vector<1x128xf32>
    %23 = vector.broadcast %22 : vector<1x128xf32> to vector<16x128xf32>
    %24 = arith.mulf %21, %23 : vector<16x128xf32>
    %c0_9 = arith.constant 0 : index
    %c0_10 = arith.constant 0 : index
    %25 = vector.load %arg3[%c0_9, %c0_10] : memref<1x128xf32, #tpu.memory_space<vmem>>, vector<1x128xf32>
    %26 = vector.broadcast %25 : vector<1x128xf32> to vector<16x128xf32>
    %27 = arith.addf %24, %26 : vector<16x128xf32>
    %28 = arith.truncf %27 : vector<16x128xf32> to vector<16x128xbf16>
    %c0_11 = arith.constant 0 : index
    %c0_12 = arith.constant 0 : index
    %29 = vector.load %arg4[%c0_11, %c0_12] : memref<128x128xbf16, #tpu.memory_space<vmem>>, vector<128x128xbf16>
    %cst_13 = arith.constant dense<0.000000e+00> : vector<16x128xf32>
    %30 = tpu.matmul %28, %29, %cst_13 {dimension_numbers = #tpu.dot_dimension_numbers<[1], [0], [0], [1], [0, 0, 1, 1], [], []>} : vector<16x128xbf16>, vector<128x128xbf16>, vector<16x128xf32> -> vector<16x128xf32>
    %c0_14 = arith.constant 0 : index
    %c0_15 = arith.constant 0 : index
    %31 = vector.load %arg5[%c0_14, %c0_15] : memref<1x128xf32, #tpu.memory_space<vmem>>, vector<1x128xf32>
    %32 = vector.broadcast %31 : vector<1x128xf32> to vector<16x128xf32>
    %33 = arith.addf %30, %32 : vector<16x128xf32>
    %34 = vector.shape_cast %33 : vector<16x128xf32> to vector<1x16x128xf32>
    %c0_16 = arith.constant 0 : index
    %c0_17 = arith.constant 0 : index
    %c0_18 = arith.constant 0 : index
    %35 = vector.load %arg6[%c0_16, %c0_17, %c0_18] : memref<1x16x128xf32, #tpu.memory_space<vmem>>, vector<1x16x128xf32>
    tpu.vector_store %arg6[%c0_16, %c0_17, %c0_18], %34 {strides = array<i32>} : memref<1x16x128xf32, #tpu.memory_space<vmem>>, vector<1x16x128xf32>,
    return
  }
  func.func @transform_0(%arg0: i32) -> (i32, i32, i32) {
    %c0_i32 = arith.constant 0 : i32
    %c0_i32_0 = arith.constant 0 : i32
    %c0_i32_1 = arith.constant 0 : i32
    return %arg0, %c0_i32, %c0_i32_0 : i32, i32, i32
  }
  func.func @transform_1(%arg0: i32) -> (i32, i32) {
    %c0_i32 = arith.constant 0 : i32
    %c0_i32_0 = arith.constant 0 : i32
    %c0_i32_1 = arith.constant 0 : i32
    return %c0_i32, %c0_i32_0 : i32, i32
  }
  func.func @transform_2(%arg0: i32) -> (i32, i32) {
    %c0_i32 = arith.constant 0 : i32
    %c0_i32_0 = arith.constant 0 : i32
    %c0_i32_1 = arith.constant 0 : i32
    return %c0_i32, %c0_i32_0 : i32, i32
  }
  func.func @transform_3(%arg0: i32) -> (i32, i32) {
    %c0_i32 = arith.constant 0 : i32
    %c0_i32_0 = arith.constant 0 : i32
    %c0_i32_1 = arith.constant 0 : i32
    return %c0_i32, %c0_i32_0 : i32, i32
  }
  func.func @transform_4(%arg0: i32) -> (i32, i32) {
    %c0_i32 = arith.constant 0 : i32
    %c0_i32_0 = arith.constant 0 : i32
    %c0_i32_1 = arith.constant 0 : i32
    return %c0_i32, %c0_i32_0 : i32, i32
  }
  func.func @transform_5(%arg0: i32) -> (i32, i32, i32) {
    %c0_i32 = arith.constant 0 : i32
    %c0_i32_0 = arith.constant 0 : i32
    %c0_i32_1 = arith.constant 0 : i32
    return %arg0, %c0_i32, %c0_i32_0 : i32, i32, i32
  }
}

</mosaic_0001>

<llo_original>
// kernel: char_transformer_forward.3
$region0: #{char_transformer_forward.3}
  #allocation0 [shape = 'u32[]', space=smem, size = 0x4, offset = 0x4, fixed_abs, tag = 'smem constant byte address 0x4 - core index']
  #allocation1 [shape = 'u32[72,128]{1,0:T(1,128)}', space=vmem, size = 0x9000, scoped, tag = 'internal scratch']
  %s0 = inlined_call_operand.vmem [shape: f32[2,16,128], index: 0, kind: input, shape index: {}]
  %s1 = inlined_call_operand.vmem [shape: f32[1,128], index: 1, kind: input, shape index: {}]
  %s2 = inlined_call_operand.vmem [shape: f32[1,128], index: 2, kind: input, shape index: {}]
  %s3 = inlined_call_operand.vmem [shape: bf16[128,128], index: 3, kind: input, shape index: {}]
  %s4 = inlined_call_operand.vmem [shape: f32[1,128], index: 4, kind: input, shape index: {}]
  %s5 = inlined_call_operand.hbm [shape: f32[2,16,128], index: 5, kind: output, shape index: {}]
  %s6 = sld [smem:[#allocation0]]
  $region53: #{char_transformer_forward.3} parent=0
    _
  %s8 = ssub.s32 1, %s6
  %s9 = scalar_select 0, %s8, %s6
  $region1: #{char_transformer_forward.3} parent=0
    #allocation2 [shape = 'u8[16384]{0}', space=vmem, size = 0x4000, scoped, tag = 'output window, operand 0']
    #allocation3 [shape = 's32[2]{0}', space=sflag, size = 0x8, scoped, tag = 'scoped memory for char_transformer_forward.3']
    %10 = vsyncpa [#allocation3], 0
    %s11 = scalar_lea.sflag [#allocation3], 1
    %12 = vsyncpa %s11, 0
    loop: start=0, step=1, limit=4
    $region2: #{char_transformer_forward.3} parent=1 // loop_pre_header
      _
    $region3: #{char_transformer_forward.3} parent=1 // loop_header
      %s14 = sphi 0, %s18
      %p15 = scmp.ge.s32.totalorder %s14, 4
      %s24 = sphi 0, %s26
      %s27 = sphi 0, %s24
      %s28 = sphi 0, %s27
      %s44 = sphi 0, %s28
      %s48 = sphi 0, %s48
      %s50 = sphi 0, %s48
      %s51 = sphi 0, %s50
      %s65 = sphi 0, %s51
      %s69 = sphi 0, %s69
      %s71 = sphi 0, %s69
      %s72 = sphi 0, %s71
      %s86 = sphi 0, %s72
      %s90 = sphi 0, %s90
      %s92 = sphi 0, %s90
      %s93 = sphi 0, %s92
      %s107 = sphi 0, %s93
      %s111 = sphi 0, %s111
      %s113 = sphi 0, %s111
      %s114 = sphi 0, %s113
      %s128 = sphi 0, %s114
      %s134 = sphi 0, %s136
      %s137 = sphi 0, %s134
      %s138 = sphi 0, %s137
      %s154 = sphi 0, %s138
    $region4: #{char_transformer_forward.3} parent=1 // loop_header_branch
      %17 = sbr.rel (%p15) target = $region8
    $region5: #{char_transformer_forward.3} parent=1 // loop_body
      %s19 = ssub.s32 %s14, 1
      %s20 = ssub.s32 %s14, 2
      %s21 = sadd.s32 %s14, 1
      %s22 = ssub.s32 %s14, %s21
      %p23 = scmp.eq.s32.totalorder %s22, 0
      %s25 = sadd.s32 %s24, 1
      %s26 = scalar_select %p23, %s24, %s25
      %p29 = pneg %p23
      %p30 = scmp.eq.s32.totalorder %s14, 1
      %p31 = por %p29, %p30
      %p32 = scmp.ne.s32.totalorder %s24, %s27
      %p33 = scmp.eq.s32.totalorder %s14, 0
      %p34 = por %p32, %p33
      %p35 = scmp.ne.s32.totalorder %s24, %s27
      %p36 = scmp.eq.s32.totalorder %s19, 1
      %p37 = por %p35, %p36
      %p38 = scmp.ne.s32.totalorder %s27, %s28
      %p39 = scmp.eq.s32.totalorder %s19, 0
      %p40 = por %p38, %p39
      %p41 = scmp.ne.s32.totalorder %s27, %s28
      %p42 = scmp.eq.s32.totalorder %s20, 1
      %p43 = por %p41, %p42
      %p45 = scmp.ne.s32.totalorder %s28, %s44
      %p46 = scmp.eq.s32.totalorder %s20, 0
      %p47 = por %p45, %p46
      %s49 = sadd.s32 %s48, 1
      %p52 = scmp.eq.s32.totalorder %s14, 1
      %p53 = scmp.ne.s32.totalorder %s48, %s50
      %p54 = scmp.eq.s32.totalorder %s14, 0
      %p55 = por %p53, %p54
      %p56 = scmp.ne.s32.totalorder %s48, %s50
      %p57 = scmp.eq.s32.totalorder %s19, 1
      %p58 = por %p56, %p57
      %p59 = scmp.ne.s32.totalorder %s50, %s51
      %p60 = scmp.eq.s32.totalorder %s19, 0
      %p61 = por %p59, %p60
      %p62 = scmp.ne.s32.totalorder %s50, %s51
      %p63 = scmp.eq.s32.totalorder %s20, 1
      %p64 = por %p62, %p63
      %p66 = scmp.ne.s32.totalorder %s51, %s65
      %p67 = scmp.eq.s32.totalorder %s20, 0
      %p68 = por %p66, %p67
      %s70 = sadd.s32 %s69, 1
      %p73 = scmp.eq.s32.totalorder %s14, 1
      %p74 = scmp.ne.s32.totalorder %s69, %s71
      %p75 = scmp.eq.s32.totalorder %s14, 0
      %p76 = por %p74, %p75
      %p77 = scmp.ne.s32.totalorder %s69, %s71
      %p78 = scmp.eq.s32.totalorder %s19, 1
      %p79 = por %p77, %p78
      %p80 = scmp.ne.s32.totalorder %s71, %s72
      %p81 = scmp.eq.s32.totalorder %s19, 0
      %p82 = por %p80, %p81
      %p83 = scmp.ne.s32.totalorder %s71, %s72
      %p84 = scmp.eq.s32.totalorder %s20, 1
      %p85 = por %p83, %p84
      %p87 = scmp.ne.s32.totalorder %s72, %s86
      %p88 = scmp.eq.s32.totalorder %s20, 0
      %p89 = por %p87, %p88
      %s91 = sadd.s32 %s90, 1
      %p94 = scmp.eq.s32.totalorder %s14, 1
      %p95 = scmp.ne.s32.totalorder %s90, %s92
      %p96 = scmp.eq.s32.totalorder %s14, 0
      %p97 = por %p95, %p96
      %p98 = scmp.ne.s32.totalorder %s90, %s92
      %p99 = scmp.eq.s32.totalorder %s19, 1
      %p100 = por %p98, %p99
      %p101 = scmp.ne.s32.totalorder %s92, %s93
      %p102 = scmp.eq.s32.totalorder %s19, 0
      %p103 = por %p101, %p102
      %p104 = scmp.ne.s32.totalorder %s92, %s93
      %p105 = scmp.eq.s32.totalorder %s20, 1
      %p106 = por %p104, %p105
      %p108 = scmp.ne.s32.totalorder %s93, %s107
      %p109 = scmp.eq.s32.totalorder %s20, 0
      %p110 = por %p108, %p109
      %s112 = sadd.s32 %s111, 1
      %p115 = scmp.eq.s32.totalorder %s14, 1
      %p116 = scmp.ne.s32.totalorder %s111, %s113
      %p117 = scmp.eq.s32.totalorder %s14, 0
      %p118 = por %p116, %p117
      %p119 = scmp.ne.s32.totalorder %s111, %s113
      %p120 = scmp.eq.s32.totalorder %s19, 1
      %p121 = por %p119, %p120
      %p122 = scmp.ne.s32.totalorder %s113, %s114
      %p123 = scmp.eq.s32.totalorder %s19, 0
      %p124 = por %p122, %p123
      %p125 = scmp.ne.s32.totalorder %s113, %s114
      %p126 = scmp.eq.s32.totalorder %s20, 1
      %p127 = por %p125, %p126
      %p129 = scmp.ne.s32.totalorder %s114, %s128
      %p130 = scmp.eq.s32.totalorder %s20, 0
      %p131 = por %p129, %p130
      %s132 = ssub.s32 %s14, %s21
      %p133 = scmp.eq.s32.totalorder %s132, 0
      %s135 = sadd.s32 %s134, 1
      %s136 = scalar_select %p133, %s134, %s135
      %p139 = pneg %p133
      %p140 = scmp.eq.s32.totalorder %s14, 1
      %p141 = por %p139, %p140
      %p142 = scmp.ne.s32.totalorder %s134, %s137
      %p143 = scmp.eq.s32.totalorder %s14, 0
      %p144 = por %p142, %p143
      %p145 = scmp.ne.s32.totalorder %s134, %s137
      %p146 = scmp.eq.s32.totalorder %s19, 1
      %p147 = por %p145, %p146
      %p148 = scmp.ne.s32.totalorder %s137, %s138
      %p149 = scmp.eq.s32.totalorder %s19, 0
      %p150 = por %p148, %p149
      %p151 = scmp.ne.s32.totalorder %s137, %s138
      %p152 = scmp.eq.s32.totalorder %s20, 1
      %p153 = por %p151, %p152
      %p155 = scmp.ne.s32.totalorder %s138, %s154
      %p156 = scmp.eq.s32.totalorder %s20, 0
      %p157 = por %p155, %p156
      %p158 = scmp.le.s32.totalorder 1, %s14
      %p159 = scmp.lt.s32.totalorder %s14, 3
      %p160 = pnand %p158, %p159
      %p161 = pneg %p160
      // Predicated region
      $region9: #{char_transformer_forward.3} parent=5 // pred_check
        _
      $region10: #{char_transformer_forward.3} parent=5 // pred_check_branch
        %163 = sbr.rel (%p160) target = $region12
      $region11: #{char_transformer_forward.3} parent=5 // pred_region
        %s164 = ssub.s32 %s14, 1
        // Predicated region
        $region13: #{char_transformer_forward.3} parent=11 // pred_check
          %p165 = pneg %p61
        $region14: #{char_transformer_forward.3} parent=11 // pred_check_branch
          %167 = sbr.rel (%p165) target = $region16
        $region15: #{char_transformer_forward.3} parent=11 // pred_region
          _
        $region16: #{char_transformer_forward.3} parent=11 // pred_fallthru
          _
        // Predicated region
        $region17: #{char_transformer_forward.3} parent=11 // pred_check
          %p168 = pneg %p82
        $region18: #{char_transformer_forward.3} parent=11 // pred_check_branch
          %170 = sbr.rel (%p168) target = $region20
        $region19: #{char_transformer_forward.3} parent=11 // pred_region
          _
        $region20: #{char_transformer_forward.3} parent=11 // pred_fallthru
          _
        // Predicated region
        $region21: #{char_transformer_forward.3} parent=11 // pred_check
          %p171 = pneg %p103
        $region22: #{char_transformer_forward.3} parent=11 // pred_check_branch
          %173 = sbr.rel (%p171) target = $region24
        $region23: #{char_transformer_forward.3} parent=11 // pred_region
          _
        $region24: #{char_transformer_forward.3} parent=11 // pred_fallthru
          _
        // Predicated region
        $region25: #{char_transformer_forward.3} parent=11 // pred_check
          %p174 = pneg %p124
        $region26: #{char_transformer_forward.3} parent=11 // pred_check_branch
          %176 = sbr.rel (%p174) target = $region28
        $region27: #{char_transformer_forward.3} parent=11 // pred_region
          _
        $region28: #{char_transformer_forward.3} parent=11 // pred_fallthru
          _
      $region12: #{char_transformer_forward.3} parent=5 // pred_fallthru
        _
      %p177 = scmp.lt.s32.totalorder %s14, 2
      // Predicated region
      $region29: #{char_transformer_forward.3} parent=5 // pred_check
        %p178 = pneg %p177
      $region30: #{char_transformer_forward.3} parent=5 // pred_check_branch
        %180 = sbr.rel (%p178) target = $region32
      $region31: #{char_transformer_forward.3} parent=5 // pred_region
        // Predicated region
        $region33: #{char_transformer_forward.3} parent=31 // pred_check
          %p181 = pneg %p34
        $region34: #{char_transformer_forward.3} parent=31 // pred_check_branch
          %183 = sbr.rel (%p181) target = $region36
        $region35: #{char_transformer_forward.3} parent=31 // pred_region
          %p184 = scmp.lt.s32.totalorder %s14, 1
          %s185 = scalar_select %p184, %s14, 1
          %s186 = smul.addr %s185, 2
          %s187 = smul.addr %s186, 8
          %s188 = scalar_lea.vmem %s0, %s187
        $region36: #{char_transformer_forward.3} parent=31 // pred_fallthru
          _
      $region32: #{char_transformer_forward.3} parent=5 // pred_fallthru
        _
      %p189 = scmp.le.s32.totalorder 1, %s14
      %p190 = scmp.lt.s32.totalorder %s14, 3
      %p191 = pnand %p189, %p190
      %p192 = pneg %p191
      // Predicated region
      $region37: #{char_transformer_forward.3} parent=5 // pred_check
        _
      $region38: #{char_transformer_forward.3} parent=5 // pred_check_branch
        %194 = sbr.rel (%p191) target = $region40
      $region39: #{char_transformer_forward.3} parent=5 // pred_region
        %s195 = ssub.s32 %s14, 1
        %p196 = scmp.lt.s32.totalorder %s19, 1
        %s197 = scalar_select %p196, %s19, 1
        %s198 = smul.addr %s197, 2
        %s199 = smul.addr %s198, 8
        %s200 = scalar_lea.vmem %s0, %s199
        %p201 = pneg %p40
        %p202 = pneg %p37
        %p203 = pneg %p61
        %p204 = pneg %p58
        %p205 = pneg %p82
        %p206 = pneg %p79
        %p207 = pneg %p103
        %p208 = pneg %p100
        %p209 = pneg %p124
        %p210 = pneg %p121
        %p211 = pneg %p150
        %p212 = pneg %p147
        %s213 = sand.u32 %s137, 1
        %s214 = scalar_lea.sflag [#allocation3], %s213
        %s215 = sand.u32 %s137, 1
        %s216 = smul.addr %s215, 16
        %s217 = scalar_lea.vmem [#allocation2], %s216
        %p218 = scmp.lt.s32.totalorder %s19, 1
        %s219 = scalar_select %p218, %s19, 1
        %s220 = smul.addr %s219, 2
        %s221 = smul.addr %s220, 8
        %s222 = scalar_lea.vmem %s0, %s221
        %v223 = vld [vmem:[%s222] sm:$0xff]
        %v224 = vld [vmem:[%s222 + $0x8] sm:$0xff]
        %225 = vadd.xlane.f32.xlu0 %v223
        %v226 = vpop.xlane.xlu0 %225
        %227 = vadd.xlane.f32.xlu0 %v224
        %v228 = vpop.xlane.xlu0 %227
        %v229 = vrcp.pop 128.0
        %v230 = vmul.f32 128.0, %v229
        %v231 = vsub.f32 1.0, %v230
        %v232 = vmul.f32 %v229, %v231
        %v233 = vadd.f32 %v229, %v232
        %vm234 = vweird.f32 %v229
        %v235 = vsel %vm234, %v229, %v233
        %v236 = vmul.f32 %v226, %v235
        %v237 = vmul.f32 %v228, %v235
        %v238 = vmul.f32 %v223, %v223
        %v239 = vmul.f32 %v224, %v224
        %240 = vadd.xlane.f32.xlu0 %v238
        %v241 = vpop.xlane.xlu0 %240
        %242 = vadd.xlane.f32.xlu0 %v239
        %v243 = vpop.xlane.xlu0 %242
        %v244 = vmul.f32 %v241, %v235
        %v245 = vmul.f32 %v243, %v235
        %v246 = vmul.f32 %v236, %v236
        %v247 = vmul.f32 %v237, %v237
        %v248 = vsub.f32 %v244, %v246
        %v249 = vsub.f32 %v245, %v247
        %v250 = vmax.f32 %v248, 0.0
        %v251 = vmax.f32 %v249, 0.0
        %v252 = vsub.f32 %v223, %v236
        %v253 = vsub.f32 %v224, %v237
        %v254 = vadd.f32 %v250, 1e-05
        %v255 = vadd.f32 %v251, 1e-05
        %v256 = vrsqrt.pop %v254
        %v257 = vmul.f32 %v256, %v254
        %v258 = vmul.f32 %v257, %v256
        %v259 = vmul.f32 0.5, %v258
        %v260 = vsub.f32 1.5, %v259
        %v261 = vmul.f32 %v256, %v260
        %vm262 = vweird.f32 %v254
        %vm263 = vweird.f32 %v256
        %vm264 = vmor %vm262, %vm263
        %v265 = vsel %vm264, %v256, %v261
        %v266 = vrsqrt.pop %v255
        %v267 = vmul.f32 %v266, %v255
        %v268 = vmul.f32 %v267, %v266
        %v269 = vmul.f32 0.5, %v268
        %v270 = vsub.f32 1.5, %v269
        %v271 = vmul.f32 %v266, %v270
        %vm272 = vweird.f32 %v255
        %vm273 = vweird.f32 %v266
        %vm274 = vmor %vm272, %vm273
        %v275 = vsel %vm274, %v266, %v271
        %v276 = vmul.f32 %v252, %v265
        %v277 = vmul.f32 %v253, %v275
        %v278 = vld [vmem:[%s1] sm:$0x1]
        %v280 = vperm.slane %v278, 0
        %v282 = vmul.f32 %v276, %v280
        %v283 = vmul.f32 %v277, %v280
        %v284 = vld [vmem:[%s2] sm:$0x1]
        %v286 = vperm.slane %v284, 0
        %v288 = vadd.f32 %v282, %v286
        %v289 = vadd.f32 %v283, %v286
        %v290 = vpack.c.bf16 %v289, %v288
        %v291 = vld [vmem:[%s3] sm:$0xf]
        %v292 = vld [vmem:[%s3 + $0x4] sm:$0xf]
        %v293 = vld [vmem:[%s3 + $0x8] sm:$0xf]
        %v294 = vld [vmem:[%s3 + $0xc] sm:$0xf]
        %v295 = vld [vmem:[%s3 + $0x10] sm:$0xf]
        %v296 = vld [vmem:[%s3 + $0x14] sm:$0xf]
        %v297 = vld [vmem:[%s3 + $0x18] sm:$0xf]
        %v298 = vld [vmem:[%s3 + $0x1c] sm:$0xf]
        %v299 = vld [vmem:[%s3 + $0x20] sm:$0xf]
        %v300 = vld [vmem:[%s3 + $0x24] sm:$0xf]
        %v301 = vld [vmem:[%s3 + $0x28] sm:$0xf]
        %v302 = vld [vmem:[%s3 + $0x2c] sm:$0xf]
        %v303 = vld [vmem:[%s3 + $0x30] sm:$0xf]
        %v304 = vld [vmem:[%s3 + $0x34] sm:$0xf]
        %v305 = vld [vmem:[%s3 + $0x38] sm:$0xf]
        %v306 = vld [vmem:[%s3 + $0x3c] sm:$0xf]
        %v307 = vld [vmem:[%s4] sm:$0x1]
        %v309 = vperm.slane %v307, 0
        %v327 = vunpack.c.l.b16 %v291
        %v328 = vunpack.c.l.b16 %v292
        %v329 = vunpack.c.l.b16 %v293
        %v330 = vunpack.c.l.b16 %v294
        %v331 = vunpack.c.l.b16 %v295
        %v332 = vunpack.c.l.b16 %v296
        %v333 = vunpack.c.l.b16 %v297
        %v334 = vunpack.c.l.b16 %v298
        %v335 = vunpack.c.l.b16 %v299
        %v336 = vunpack.c.l.b16 %v300
        %v337 = vunpack.c.l.b16 %v301
        %v338 = vunpack.c.l.b16 %v302
        %v339 = vunpack.c.l.b16 %v303
        %v340 = vunpack.c.l.b16 %v304
        %v341 = vunpack.c.l.b16 %v305
        %v342 = vunpack.c.l.b16 %v306
        %v343 = vpack.c.b16 %v328, %v327
        %v344 = vpack.c.b16 %v330, %v329
        %v345 = vpack.c.b16 %v332, %v331
        %v346 = vpack.c.b16 %v334, %v333
        %v347 = vpack.c.b16 %v336, %v335
        %v348 = vpack.c.b16 %v338, %v337
        %v349 = vpack.c.b16 %v340, %v339
        %v350 = vpack.c.b16 %v342, %v341
        %359 = vmatpush.bf16.msra.mxu0 %v350
        %360 = vmatpush.bf16.msra.mxu0 %v349
        %361 = vmatpush.bf16.msra.mxu0 %v348
        %362 = vmatpush.bf16.msra.mxu0 %v347
        %363 = vmatpush.bf16.msra.mxu0 %v346
        %364 = vmatpush.bf16.msra.mxu0 %v345
        %365 = vmatpush.bf16.msra.mxu0 %v344
        %366 = vmatpush.bf16.msra.mxu0 %v343
        %367 = vmatmul.bf16.gmra.mxu0 %v290
        %v368 = vpop.f32.mrf.mxu0
        %v369 = vadd.f32 %v309, %v368
        %v370 = vpop.f32.mrf.mxu0
        %v371 = vadd.f32 %v309, %v370
        %372 = vdwg.mxu0
        %373 = vst [vmem:[%s217] sm:$0xff] %v369
        %374 = vst [vmem:[%s217 + $0x8] sm:$0xff] %v371
        %s375 = sand.u32 %s137, 1
        %s376 = scalar_lea.sflag [#allocation3], %s375
        %s377 = sand.u32 %s137, 1
        %s378 = smul.addr %s377, 16
        %s379 = scalar_lea.vmem [#allocation2], %s378
        // Predicated region
        $region41: #{char_transformer_forward.3} parent=39 // pred_check
          %p380 = pneg %p147
        $region42: #{char_transformer_forward.3} parent=39 // pred_check_branch
          %382 = sbr.rel (%p380) target = $region44
        $region43: #{char_transformer_forward.3} parent=39 // pred_region
          %384 = vsyncadd %s376, 0
          %s385 = smul.addr %s19, 2
          %s386 = smul.addr %s385, 8
          %s387 = scalar_lea.hbm %s5, %s386
          %s388 = sshll.u32 %s379, 4
          %s389 = int_to_ptr.vmem [resolvable:$true] %s388
          %s390 = sshll.u32 %s387, 4
          %s391 = int_to_ptr.hbm [resolvable:$true] %s390
          %396 = dma.vmem_to_hbm [thread:$0]  %s389, 256, %s391, %s376, 128, 128, 8
        $region44: #{char_transformer_forward.3} parent=39 // pred_fallthru
          _
      $region40: #{char_transformer_forward.3} parent=5 // pred_fallthru
        _
      %p397 = scmp.le.s32.totalorder 2, %s14
      // Predicated region
      $region45: #{char_transformer_forward.3} parent=5 // pred_check
        %p398 = pneg %p397
      $region46: #{char_transformer_forward.3} parent=5 // pred_check_branch
        %400 = sbr.rel (%p398) target = $region48
      $region47: #{char_transformer_forward.3} parent=5 // pred_region
        %s401 = ssub.s32 %s14, 2
        // Predicated region
        $region49: #{char_transformer_forward.3} parent=47 // pred_check
          %p402 = pneg %p153
        $region50: #{char_transformer_forward.3} parent=47 // pred_check_branch
          %404 = sbr.rel (%p402) target = $region52
        $region51: #{char_transformer_forward.3} parent=47 // pred_region
          %s405 = sand.u32 %s138, 1
          %s406 = scalar_lea.sflag [#allocation3], %s405
          %s407 = sand.u32 %s138, 1
          %s408 = smul.addr %s407, 16
          %s409 = scalar_lea.vmem [#allocation2], %s408
          %411 = dma.done %s406, 256
        $region52: #{char_transformer_forward.3} parent=47 // pred_fallthru
          _
      $region48: #{char_transformer_forward.3} parent=5 // pred_fallthru
        _
    $region6: #{char_transformer_forward.3} parent=1 // loop_footer
      %s18 = sadd.s32 1, %s14
    $region7: #{char_transformer_forward.3} parent=1 // loop_footer_branch
      %13 = sbr.rel target = $region3
    $region8: #{char_transformer_forward.3} parent=1 // loop_exit
      _
    %412 = vsyncpa [#allocation3], 1
    %s413 = scalar_lea.sflag [#allocation3], 1
    %414 = vsyncpa %s413, 1

// kernel: char_transformer_forward.2
$region0: #{char_transformer_forward.2}
  #allocation0 [shape = 'u32[]', space=smem, size = 0x4, offset = 0x4, fixed_abs, tag = 'smem constant byte address 0x4 - core index']
  #allocation1 [shape = 'u32[72,128]{1,0:T(1,128)}', space=vmem, size = 0x9000, scoped, tag = 'internal scratch']
  #allocation2 [shape = 'f32[16,128]{1,0:T(8,128)}', space=vmem, size = 0x2000, scoped, tag = 'scratch operand']
  %s0 = inlined_call_operand.vmem [shape: f32[2,16,128], index: 0, kind: input, shape index: {}]
  %s1 = inlined_call_operand.vmem [shape: f32[2,1,128], index: 1, kind: input, shape index: {}]
  %s2 = inlined_call_operand.vmem [shape: f32[2,1,128], index: 2, kind: input, shape index: {}]
  %s3 = inlined_call_operand.vmem [shape: bf16[2,128,384], index: 3, kind: input, shape index: {}]
  %s4 = inlined_call_operand.vmem [shape: f32[2,1,384], index: 4, kind: input, shape index: {}]
  %s5 = inlined_call_operand.vmem [shape: bf16[2,128,128], index: 5, kind: input, shape index: {}]
  %s6 = inlined_call_operand.vmem [shape: f32[2,1,128], index: 6, kind: input, shape index: {}]
  %s7 = inlined_call_operand.vmem [shape: f32[2,1,128], index: 7, kind: input, shape index: {}]
  %s8 = inlined_call_operand.vmem [shape: f32[2,1,128], index: 8, kind: input, shape index: {}]
  %s9 = inlined_call_operand.vmem [shape: bf16[2,128,512], index: 9, kind: input, shape index: {}]
  %s10 = inlined_call_operand.vmem [shape: f32[2,1,512], index: 10, kind: input, shape index: {}]
  %s11 = inlined_call_operand.vmem [shape: bf16[2,512,128], index: 11, kind: input, shape index: {}]
  %s12 = inlined_call_operand.vmem [shape: f32[2,1,128], index: 12, kind: input, shape index: {}]
  %s13 = inlined_call_operand.vmem [shape: f32[2,16,128], index: 13, kind: output, shape index: {}]
  %s14 = sld [smem:[#allocation0]]
  $region93: #{char_transformer_forward.2} parent=0
    _
  %s16 = ssub.s32 1, %s14
  %s17 = scalar_select 0, %s16, %s14
  loop: start=0, step=1, limit=6
  $region2: #{char_transformer_forward.2} parent=0 // loop_pre_header
    _
  $region3: #{char_transformer_forward.2} parent=0 // loop_header
    %s19 = sphi 0, %s23
    %p20 = scmp.ge.s32.totalorder %s19, 6
    %s26 = sphi 0, %s38
    %s27 = sphi 0, %s34
    %s28 = sphi 0, %s26
    %s29 = sphi 0, %s27
    %s30 = sphi 0, %s28
    %s31 = sphi 0, %s29
    %s41 = sphi 0, %s43
    %s44 = sphi 0, %s41
    %s45 = sphi 0, %s44
    %s61 = sphi 0, %s45
    %s67 = sphi 0, %s69
    %s70 = sphi 0, %s67
    %s71 = sphi 0, %s70
    %s87 = sphi 0, %s71
    %s93 = sphi 0, %s95
    %s96 = sphi 0, %s93
    %s97 = sphi 0, %s96
    %s113 = sphi 0, %s97
    %s119 = sphi 0, %s121
    %s122 = sphi 0, %s119
    %s123 = sphi 0, %s122
    %s139 = sphi 0, %s123
    %s145 = sphi 0, %s147
    %s148 = sphi 0, %s145
    %s149 = sphi 0, %s148
    %s165 = sphi 0, %s149
    %s171 = sphi 0, %s173
    %s174 = sphi 0, %s171
    %s175 = sphi 0, %s174
    %s191 = sphi 0, %s175
    %s197 = sphi 0, %s199
    %s200 = sphi 0, %s197
    %s201 = sphi 0, %s200
    %s217 = sphi 0, %s201
    %s223 = sphi 0, %s225
    %s226 = sphi 0, %s223
    %s227 = sphi 0, %s226
    %s243 = sphi 0, %s227
    %s249 = sphi 0, %s251
    %s252 = sphi 0, %s249
    %s253 = sphi 0, %s252
    %s269 = sphi 0, %s253
    %s275 = sphi 0, %s277
    %s278 = sphi 0, %s275
    %s279 = sphi 0, %s278
    %s295 = sphi 0, %s279
    %s301 = sphi 0, %s303
    %s304 = sphi 0, %s301
    %s305 = sphi 0, %s304
    %s321 = sphi 0, %s305
    %s327 = sphi 0, %s329
    %s330 = sphi 0, %s327
    %s331 = sphi 0, %s330
    %s347 = sphi 0, %s331
    %s353 = sphi 0, %s355
    %s356 = sphi 0, %s353
    %s357 = sphi 0, %s356
    %s373 = sphi 0, %s357
    %s379 = sphi 0, %s381
    %s382 = sphi 0, %s379
    %s383 = sphi 0, %s382
    %s399 = sphi 0, %s383
  $region4: #{char_transformer_forward.2} parent=0 // loop_header_branch
    %22 = sbr.rel (%p20) target = $region8
  $region5: #{char_transformer_forward.2} parent=0 // loop_body
    %s24 = ssub.s32 %s19, 1
    %s25 = ssub.s32 %s19, 2
    %s32 = sadd.s32 1, %s27
    %p33 = scmp.ge.s32.totalorder %s32, 2
    %s34 = scalar_select %p33, 0, %s32
    %s35 = sadd.s32 1, %s26
    %s36 = scalar_select %p33, %s35, %s26
    %p37 = scmp.ge.s32.totalorder %s36, 2
    %s38 = scalar_select %p37, 0, %s36
    %s39 = ssub.s32 %s26, %s38
    %p40 = scmp.eq.s32.totalorder %s39, 0
    %s42 = sadd.s32 %s41, 1
    %s43 = scalar_select %p40, %s41, %s42
    %p46 = pneg %p40
    %p47 = scmp.eq.s32.totalorder %s19, 3
    %p48 = por %p46, %p47
    %p49 = scmp.ne.s32.totalorder %s41, %s44
    %p50 = scmp.eq.s32.totalorder %s19, 0
    %p51 = por %p49, %p50
    %p52 = scmp.ne.s32.totalorder %s41, %s44
    %p53 = scmp.eq.s32.totalorder %s24, 3
    %p54 = por %p52, %p53
    %p55 = scmp.ne.s32.totalorder %s44, %s45
    %p56 = scmp.eq.s32.totalorder %s24, 0
    %p57 = por %p55, %p56
    %p58 = scmp.ne.s32.totalorder %s44, %s45
    %p59 = scmp.eq.s32.totalorder %s25, 3
    %p60 = por %p58, %p59
    %p62 = scmp.ne.s32.totalorder %s45, %s61
    %p63 = scmp.eq.s32.totalorder %s25, 0
    %p64 = por %p62, %p63
    %s65 = ssub.s32 %s27, %s34
    %p66 = scmp.eq.s32.totalorder %s65, 0
    %s68 = sadd.s32 %s67, 1
    %s69 = scalar_select %p66, %s67, %s68
    %p72 = pneg %p66
    %p73 = scmp.eq.s32.totalorder %s19, 3
    %p74 = por %p72, %p73
    %p75 = scmp.ne.s32.totalorder %s67, %s70
    %p76 = scmp.eq.s32.totalorder %s19, 0
    %p77 = por %p75, %p76
    %p78 = scmp.ne.s32.totalorder %s67, %s70
    %p79 = scmp.eq.s32.totalorder %s24, 3
    %p80 = por %p78, %p79
    %p81 = scmp.ne.s32.totalorder %s70, %s71
    %p82 = scmp.eq.s32.totalorder %s24, 0
    %p83 = por %p81, %p82
    %p84 = scmp.ne.s32.totalorder %s70, %s71
    %p85 = scmp.eq.s32.totalorder %s25, 3
    %p86 = por %p84, %p85
    %p88 = scmp.ne.s32.totalorder %s71, %s87
    %p89 = scmp.eq.s32.totalorder %s25, 0
    %p90 = por %p88, %p89
    %s91 = ssub.s32 %s27, %s34
    %p92 = scmp.eq.s32.totalorder %s91, 0
    %s94 = sadd.s32 %s93, 1
    %s95 = scalar_select %p92, %s93, %s94
    %p98 = pneg %p92
    %p99 = scmp.eq.s32.totalorder %s19, 3
    %p100 = por %p98, %p99
    %p101 = scmp.ne.s32.totalorder %s93, %s96
    %p102 = scmp.eq.s32.totalorder %s19, 0
    %p103 = por %p101, %p102
    %p104 = scmp.ne.s32.totalorder %s93, %s96
    %p105 = scmp.eq.s32.totalorder %s24, 3
    %p106 = por %p104, %p105
    %p107 = scmp.ne.s32.totalorder %s96, %s97
    %p108 = scmp.eq.s32.totalorder %s24, 0
    %p109 = por %p107, %p108
    %p110 = scmp.ne.s32.totalorder %s96, %s97
    %p111 = scmp.eq.s32.totalorder %s25, 3
    %p112 = por %p110, %p111
    %p114 = scmp.ne.s32.totalorder %s97, %s113
    %p115 = scmp.eq.s32.totalorder %s25, 0
    %p116 = por %p114, %p115
    %s117 = ssub.s32 %s27, %s34
    %p118 = scmp.eq.s32.totalorder %s117, 0
    %s120 = sadd.s32 %s119, 1
    %s121 = scalar_select %p118, %s119, %s120
    %p124 = pneg %p118
    %p125 = scmp.eq.s32.totalorder %s19, 3
    %p126 = por %p124, %p125
    %p127 = scmp.ne.s32.totalorder %s119, %s122
    %p128 = scmp.eq.s32.totalorder %s19, 0
    %p129 = por %p127, %p128
    %p130 = scmp.ne.s32.totalorder %s119, %s122
    %p131 = scmp.eq.s32.totalorder %s24, 3
    %p132 = por %p130, %p131
    %p133 = scmp.ne.s32.totalorder %s122, %s123
    %p134 = scmp.eq.s32.totalorder %s24, 0
    %p135 = por %p133, %p134
    %p136 = scmp.ne.s32.totalorder %s122, %s123
    %p137 = scmp.eq.s32.totalorder %s25, 3
    %p138 = por %p136, %p137
    %p140 = scmp.ne.s32.totalorder %s123, %s139
    %p141 = scmp.eq.s32.totalorder %s25, 0
    %p142 = por %p140, %p141
    %s143 = ssub.s32 %s27, %s34
    %p144 = scmp.eq.s32.totalorder %s143, 0
    %s146 = sadd.s32 %s145, 1
    %s147 = scalar_select %p144, %s145, %s146
    %p150 = pneg %p144
    %p151 = scmp.eq.s32.totalorder %s19, 3
    %p152 = por %p150, %p151
    %p153 = scmp.ne.s32.totalorder %s145, %s148
    %p154 = scmp.eq.s32.totalorder %s19, 0
    %p155 = por %p153, %p154
    %p156 = scmp.ne.s32.totalorder %s145, %s148
    %p157 = scmp.eq.s32.totalorder %s24, 3
    %p158 = por %p156, %p157
    %p159 = scmp.ne.s32.totalorder %s148, %s149
    %p160 = scmp.eq.s32.totalorder %s24, 0
    %p161 = por %p159, %p160
    %p162 = scmp.ne.s32.totalorder %s148, %s149
    %p163 = scmp.eq.s32.totalorder %s25, 3
    %p164 = por %p162, %p163
    %p166 = scmp.ne.s32.totalorder %s149, %s165
    %p167 = scmp.eq.s32.totalorder %s25, 0
    %p168 = por %p166, %p167
    %s169 = ssub.s32 %s27, %s34
    %p170 = scmp.eq.s32.totalorder %s169, 0
    %s172 = sadd.s32 %s171, 1
    %s173 = scalar_select %p170, %s171, %s172
    %p176 = pneg %p170
    %p177 = scmp.eq.s32.totalorder %s19, 3
    %p178 = por %p176, %p177
    %p179 = scmp.ne.s32.totalorder %s171, %s174
    %p180 = scmp.eq.s32.totalorder %s19, 0
    %p181 = por %p179, %p180
    %p182 = scmp.ne.s32.totalorder %s171, %s174
    %p183 = scmp.eq.s32.totalorder %s24, 3
    %p184 = por %p182, %p183
    %p185 = scmp.ne.s32.totalorder %s174, %s175
    %p186 = scmp.eq.s32.totalorder %s24, 0
    %p187 = por %p185, %p186
    %p188 = scmp.ne.s32.totalorder %s174, %s175
    %p189 = scmp.eq.s32.totalorder %s25, 3
    %p190 = por %p188, %p189
    %p192 = scmp.ne.s32.totalorder %s175, %s191
    %p193 = scmp.eq.s32.totalorder %s25, 0
    %p194 = por %p192, %p193
    %s195 = ssub.s32 %s27, %s34
    %p196 = scmp.eq.s32.totalorder %s195, 0
    %s198 = sadd.s32 %s197, 1
    %s199 = scalar_select %p196, %s197, %s198
    %p202 = pneg %p196
    %p203 = scmp.eq.s32.totalorder %s19, 3
    %p204 = por %p202, %p203
    %p205 = scmp.ne.s32.totalorder %s197, %s200
    %p206 = scmp.eq.s32.totalorder %s19, 0
    %p207 = por %p205, %p206
    %p208 = scmp.ne.s32.totalorder %s197, %s200
    %p209 = scmp.eq.s32.totalorder %s24, 3
    %p210 = por %p208, %p209
    %p211 = scmp.ne.s32.totalorder %s200, %s201
    %p212 = scmp.eq.s32.totalorder %s24, 0
    %p213 = por %p211, %p212
    %p214 = scmp.ne.s32.totalorder %s200, %s201
    %p215 = scmp.eq.s32.totalorder %s25, 3
    %p216 = por %p214, %p215
    %p218 = scmp.ne.s32.totalorder %s201, %s217
    %p219 = scmp.eq.s32.totalorder %s25, 0
    %p220 = por %p218, %p219
    %s221 = ssub.s32 %s27, %s34
    %p222 = scmp.eq.s32.totalorder %s221, 0
    %s224 = sadd.s32 %s223, 1
    %s225 = scalar_select %p222, %s223, %s224
    %p228 = pneg %p222
    %p229 = scmp.eq.s32.totalorder %s19, 3
    %p230 = por %p228, %p229
    %p231 = scmp.ne.s32.totalorder %s223, %s226
    %p232 = scmp.eq.s32.totalorder %s19, 0
    %p233 = por %p231, %p232
    %p234 = scmp.ne.s32.totalorder %s223, %s226
    %p235 = scmp.eq.s32.totalorder %s24, 3
    %p236 = por %p234, %p235
    %p237 = scmp.ne.s32.totalorder %s226, %s227
    %p238 = scmp.eq.s32.totalorder %s24, 0
    %p239 = por %p237, %p238
    %p240 = scmp.ne.s32.totalorder %s226, %s227
    %p241 = scmp.eq.s32.totalorder %s25, 3
    %p242 = por %p240, %p241
    %p244 = scmp.ne.s32.totalorder %s227, %s243
    %p245 = scmp.eq.s32.totalorder %s25, 0
    %p246 = por %p244, %p245
    %s247 = ssub.s32 %s27, %s34
    %p248 = scmp.eq.s32.totalorder %s247, 0
    %s250 = sadd.s32 %s249, 1
    %s251 = scalar_select %p248, %s249, %s250
    %p254 = pneg %p248
    %p255 = scmp.eq.s32.totalorder %s19, 3
    %p256 = por %p254, %p255
    %p257 = scmp.ne.s32.totalorder %s249, %s252
    %p258 = scmp.eq.s32.totalorder %s19, 0
    %p259 = por %p257, %p258
    %p260 = scmp.ne.s32.totalorder %s249, %s252
    %p261 = scmp.eq.s32.totalorder %s24, 3
    %p262 = por %p260, %p261
    %p263 = scmp.ne.s32.totalorder %s252, %s253
    %p264 = scmp.eq.s32.totalorder %s24, 0
    %p265 = por %p263, %p264
    %p266 = scmp.ne.s32.totalorder %s252, %s253
    %p267 = scmp.eq.s32.totalorder %s25, 3
    %p268 = por %p266, %p267
    %p270 = scmp.ne.s32.totalorder %s253, %s269
    %p271 = scmp.eq.s32.totalorder %s25, 0
    %p272 = por %p270, %p271
    %s273 = ssub.s32 %s27, %s34
    %p274 = scmp.eq.s32.totalorder %s273, 0
    %s276 = sadd.s32 %s275, 1
    %s277 = scalar_select %p274, %s275, %s276
    %p280 = pneg %p274
    %p281 = scmp.eq.s32.totalorder %s19, 3
    %p282 = por %p280, %p281
    %p283 = scmp.ne.s32.totalorder %s275, %s278
    %p284 = scmp.eq.s32.totalorder %s19, 0
    %p285 = por %p283, %p284
    %p286 = scmp.ne.s32.totalorder %s275, %s278
    %p287 = scmp.eq.s32.totalorder %s24, 3
    %p288 = por %p286, %p287
    %p289 = scmp.ne.s32.totalorder %s278, %s279
    %p290 = scmp.eq.s32.totalorder %s24, 0
    %p291 = por %p289, %p290
    %p292 = scmp.ne.s32.totalorder %s278, %s279
    %p293 = scmp.eq.s32.totalorder %s25, 3
    %p294 = por %p292, %p293
    %p296 = scmp.ne.s32.totalorder %s279, %s295
    %p297 = scmp.eq.s32.totalorder %s25, 0
    %p298 = por %p296, %p297
    %s299 = ssub.s32 %s27, %s34
    %p300 = scmp.eq.s32.totalorder %s299, 0
    %s302 = sadd.s32 %s301, 1
    %s303 = scalar_select %p300, %s301, %s302
    %p306 = pneg %p300
    %p307 = scmp.eq.s32.totalorder %s19, 3
    %p308 = por %p306, %p307
    %p309 = scmp.ne.s32.totalorder %s301, %s304
    %p310 = scmp.eq.s32.totalorder %s19, 0
    %p311 = por %p309, %p310
    %p312 = scmp.ne.s32.totalorder %s301, %s304
    %p313 = scmp.eq.s32.totalorder %s24, 3
    %p314 = por %p312, %p313
    %p315 = scmp.ne.s32.totalorder %s304, %s305
    %p316 = scmp.eq.s32.totalorder %s24, 0
    %p317 = por %p315, %p316
    %p318 = scmp.ne.s32.totalorder %s304, %s305
    %p319 = scmp.eq.s32.totalorder %s25, 3
    %p320 = por %p318, %p319
    %p322 = scmp.ne.s32.totalorder %s305, %s321
    %p323 = scmp.eq.s32.totalorder %s25, 0
    %p324 = por %p322, %p323
    %s325 = ssub.s32 %s27, %s34
    %p326 = scmp.eq.s32.totalorder %s325, 0
    %s328 = sadd.s32 %s327, 1
    %s329 = scalar_select %p326, %s327, %s328
    %p332 = pneg %p326
    %p333 = scmp.eq.s32.totalorder %s19, 3
    %p334 = por %p332, %p333
    %p335 = scmp.ne.s32.totalorder %s327, %s330
    %p336 = scmp.eq.s32.totalorder %s19, 0
    %p337 = por %p335, %p336
    %p338 = scmp.ne.s32.totalorder %s327, %s330
    %p339 = scmp.eq.s32.totalorder %s24, 3
    %p340 = por %p338, %p339
    %p341 = scmp.ne.s32.totalorder %s330, %s331
    %p342 = scmp.eq.s32.totalorder %s24, 0
    %p343 = por %p341, %p342
    %p344 = scmp.ne.s32.totalorder %s330, %s331
    %p345 = scmp.eq.s32.totalorder %s25, 3
    %p346 = por %p344, %p345
    %p348 = scmp.ne.s32.totalorder %s331, %s347
    %p349 = scmp.eq.s32.totalorder %s25, 0
    %p350 = por %p348, %p349
    %s351 = ssub.s32 %s27, %s34
    %p352 = scmp.eq.s32.totalorder %s351, 0
    %s354 = sadd.s32 %s353, 1
    %s355 = scalar_select %p352, %s353, %s354
    %p358 = pneg %p352
    %p359 = scmp.eq.s32.totalorder %s19, 3
    %p360 = por %p358, %p359
    %p361 = scmp.ne.s32.totalorder %s353, %s356
    %p362 = scmp.eq.s32.totalorder %s19, 0
    %p363 = por %p361, %p362
    %p364 = scmp.ne.s32.totalorder %s353, %s356
    %p365 = scmp.eq.s32.totalorder %s24, 3
    %p366 = por %p364, %p365
    %p367 = scmp.ne.s32.totalorder %s356, %s357
    %p368 = scmp.eq.s32.totalorder %s24, 0
    %p369 = por %p367, %p368
    %p370 = scmp.ne.s32.totalorder %s356, %s357
    %p371 = scmp.eq.s32.totalorder %s25, 3
    %p372 = por %p370, %p371
    %p374 = scmp.ne.s32.totalorder %s357, %s373
    %p375 = scmp.eq.s32.totalorder %s25, 0
    %p376 = por %p374, %p375
    %s377 = ssub.s32 %s26, %s38
    %p378 = scmp.eq.s32.totalorder %s377, 0
    %s380 = sadd.s32 %s379, 1
    %s381 = scalar_select %p378, %s379, %s380
    %p384 = pneg %p378
    %p385 = scmp.eq.s32.totalorder %s19, 3
    %p386 = por %p384, %p385
    %p387 = scmp.ne.s32.totalorder %s379, %s382
    %p388 = scmp.eq.s32.totalorder %s19, 0
    %p389 = por %p387, %p388
    %p390 = scmp.ne.s32.totalorder %s379, %s382
    %p391 = scmp.eq.s32.totalorder %s24, 3
    %p392 = por %p390, %p391
    %p393 = scmp.ne.s32.totalorder %s382, %s383
    %p394 = scmp.eq.s32.totalorder %s24, 0
    %p395 = por %p393, %p394
    %p396 = scmp.ne.s32.totalorder %s382, %s383
    %p397 = scmp.eq.s32.totalorder %s25, 3
    %p398 = por %p396, %p397
    %p400 = scmp.ne.s32.totalorder %s383, %s399
    %p401 = scmp.eq.s32.totalorder %s25, 0
    %p402 = por %p400, %p401
    %p403 = scmp.le.s32.totalorder 1, %s19
    %p404 = scmp.lt.s32.totalorder %s19, 5
    %p405 = pnand %p403, %p404
    %p406 = pneg %p405
    // Predicated region
    $region9: #{char_transformer_forward.2} parent=5 // pred_check
      _
    $region10: #{char_transformer_forward.2} parent=5 // pred_check_branch
      %408 = sbr.rel (%p405) target = $region12
    $region11: #{char_transformer_forward.2} parent=5 // pred_region
      %s409 = ssub.s32 %s19, 1
    $region12: #{char_transformer_forward.2} parent=5 // pred_fallthru
      _
    %p410 = scmp.lt.s32.totalorder %s19, 4
    // Predicated region
    $region13: #{char_transformer_forward.2} parent=5 // pred_check
      %p411 = pneg %p410
    $region14: #{char_transformer_forward.2} parent=5 // pred_check_branch
      %413 = sbr.rel (%p411) target = $region16
    $region15: #{char_transformer_forward.2} parent=5 // pred_region
      // Predicated region
      $region17: #{char_transformer_forward.2} parent=15 // pred_check
        %p414 = pneg %p51
      $region18: #{char_transformer_forward.2} parent=15 // pred_check_branch
        %416 = sbr.rel (%p414) target = $region20
      $region19: #{char_transformer_forward.2} parent=15 // pred_region
        %p417 = scmp.lt.s32.totalorder %s26, 1
        %s418 = scalar_select %p417, %s26, 1
        %s419 = smul.addr %s418, 2
        %s420 = smul.addr %s419, 8
        %s421 = scalar_lea.vmem %s0, %s420
      $region20: #{char_transformer_forward.2} parent=15 // pred_fallthru
        _
      // Predicated region
      $region21: #{char_transformer_forward.2} parent=15 // pred_check
        %p422 = pneg %p77
      $region22: #{char_transformer_forward.2} parent=15 // pred_check_branch
        %424 = sbr.rel (%p422) target = $region24
      $region23: #{char_transformer_forward.2} parent=15 // pred_region
        %p425 = scmp.lt.s32.totalorder %s27, 1
        %s426 = scalar_select %p425, %s27, 1
        %s427 = scalar_lea.vmem %s1, %s426
      $region24: #{char_transformer_forward.2} parent=15 // pred_fallthru
        _
      // Predicated region
      $region25: #{char_transformer_forward.2} parent=15 // pred_check
        %p428 = pneg %p103
      $region26: #{char_transformer_forward.2} parent=15 // pred_check_branch
        %430 = sbr.rel (%p428) target = $region28
      $region27: #{char_transformer_forward.2} parent=15 // pred_region
        %p431 = scmp.lt.s32.totalorder %s27, 1
        %s432 = scalar_select %p431, %s27, 1
        %s433 = scalar_lea.vmem %s2, %s432
      $region28: #{char_transformer_forward.2} parent=15 // pred_fallthru
        _
      // Predicated region
      $region29: #{char_transformer_forward.2} parent=15 // pred_check
        %p434 = pneg %p129
      $region30: #{char_transformer_forward.2} parent=15 // pred_check_branch
        %436 = sbr.rel (%p434) target = $region32
      $region31: #{char_transformer_forward.2} parent=15 // pred_region
        %p437 = scmp.lt.s32.totalorder %s27, 1
        %s438 = scalar_select %p437, %s27, 1
        %s439 = smul.addr %s438, 48
        %s440 = smul.addr %s439, 4
        %s441 = scalar_lea.vmem %s3, %s440
      $region32: #{char_transformer_forward.2} parent=15 // pred_fallthru
        _
      // Predicated region
      $region33: #{char_transformer_forward.2} parent=15 // pred_check
        %p442 = pneg %p155
      $region34: #{char_transformer_forward.2} parent=15 // pred_check_branch
        %444 = sbr.rel (%p442) target = $region36
      $region35: #{char_transformer_forward.2} parent=15 // pred_region
        %p445 = scmp.lt.s32.totalorder %s27, 1
        %s446 = scalar_select %p445, %s27, 1
        %s447 = smul.addr %s446, 3
        %s448 = scalar_lea.vmem %s4, %s447
      $region36: #{char_transformer_forward.2} parent=15 // pred_fallthru
        _
      // Predicated region
      $region37: #{char_transformer_forward.2} parent=15 // pred_check
        %p449 = pneg %p181
      $region38: #{char_transformer_forward.2} parent=15 // pred_check_branch
        %451 = sbr.rel (%p449) target = $region40
      $region39: #{char_transformer_forward.2} parent=15 // pred_region
        %p452 = scmp.lt.s32.totalorder %s27, 1
        %s453 = scalar_select %p452, %s27, 1
        %s454 = smul.addr %s453, 16
        %s455 = smul.addr %s454, 4
        %s456 = scalar_lea.vmem %s5, %s455
      $region40: #{char_transformer_forward.2} parent=15 // pred_fallthru
        _
      // Predicated region
      $region41: #{char_transformer_forward.2} parent=15 // pred_check
        %p457 = pneg %p207
      $region42: #{char_transformer_forward.2} parent=15 // pred_check_branch
        %459 = sbr.rel (%p457) target = $region44
      $region43: #{char_transformer_forward.2} parent=15 // pred_region
        %p460 = scmp.lt.s32.totalorder %s27, 1
        %s461 = scalar_select %p460, %s27, 1
        %s462 = scalar_lea.vmem %s6, %s461
      $region44: #{char_transformer_forward.2} parent=15 // pred_fallthru
        _
      // Predicated region
      $region45: #{char_transformer_forward.2} parent=15 // pred_check
        %p463 = pneg %p233
      $region46: #{char_transformer_forward.2} parent=15 // pred_check_branch
        %465 = sbr.rel (%p463) target = $region48
      $region47: #{char_transformer_forward.2} parent=15 // pred_region
        %p466 = scmp.lt.s32.totalorder %s27, 1
        %s467 = scalar_select %p466, %s27, 1
        %s468 = scalar_lea.vmem %s7, %s467
      $region48: #{char_transformer_forward.2} parent=15 // pred_fallthru
        _
      // Predicated region
      $region49: #{char_transformer_forward.2} parent=15 // pred_check
        %p469 = pneg %p259
      $region50: #{char_transformer_forward.2} parent=15 // pred_check_branch
        %471 = sbr.rel (%p469) target = $region52
      $region51: #{char_transformer_forward.2} parent=15 // pred_region
        %p472 = scmp.lt.s32.totalorder %s27, 1
        %s473 = scalar_select %p472, %s27, 1
        %s474 = scalar_lea.vmem %s8, %s473
      $region52: #{char_transformer_forward.2} parent=15 // pred_fallthru
        _
      // Predicated region
      $region53: #{char_transformer_forward.2} parent=15 // pred_check
        %p475 = pneg %p285
      $region54: #{char_transformer_forward.2} parent=15 // pred_check_branch
        %477 = sbr.rel (%p475) target = $region56
      $region55: #{char_transformer_forward.2} parent=15 // pred_region
        %p478 = scmp.lt.s32.totalorder %s27, 1
        %s479 = scalar_select %p478, %s27, 1
        %s480 = smul.addr %s479, 64
        %s481 = smul.addr %s480, 4
        %s482 = scalar_lea.vmem %s9, %s481
      $region56: #{char_transformer_forward.2} parent=15 // pred_fallthru
        _
      // Predicated region
      $region57: #{char_transformer_forward.2} parent=15 // pred_check
        %p483 = pneg %p311
      $region58: #{char_transformer_forward.2} parent=15 // pred_check_branch
        %485 = sbr.rel (%p483) target = $region60
      $region59: #{char_transformer_forward.2} parent=15 // pred_region
        %p486 = scmp.lt.s32.totalorder %s27, 1
        %s487 = scalar_select %p486, %s27, 1
        %s488 = smul.addr %s487, 4
        %s489 = scalar_lea.vmem %s10, %s488
      $region60: #{char_transformer_forward.2} parent=15 // pred_fallthru
        _
      // Predicated region
      $region61: #{char_transformer_forward.2} parent=15 // pred_check
        %p490 = pneg %p337
      $region62: #{char_transformer_forward.2} parent=15 // pred_check_branch
        %492 = sbr.rel (%p490) target = $region64
      $region63: #{char_transformer_forward.2} parent=15 // pred_region
        %p493 = scmp.lt.s32.totalorder %s27, 1
        %s494 = scalar_select %p493, %s27, 1
        %s495 = smul.addr %s494, 64
        %s496 = smul.addr %s495, 4
        %s497 = scalar_lea.vmem %s11, %s496
      $region64: #{char_transformer_forward.2} parent=15 // pred_fallthru
        _
      // Predicated region
      $region65: #{char_transformer_forward.2} parent=15 // pred_check
        %p498 = pneg %p363
      $region66: #{char_transformer_forward.2} parent=15 // pred_check_branch
        %500 = sbr.rel (%p498) target = $region68
      $region67: #{char_transformer_forward.2} parent=15 // pred_region
        %p501 = scmp.lt.s32.totalorder %s27, 1
        %s502 = scalar_select %p501, %s27, 1
        %s503 = scalar_lea.vmem %s12, %s502
      $region68: #{char_transformer_forward.2} parent=15 // pred_fallthru
        _
    $region16: #{char_transformer_forward.2} parent=5 // pred_fallthru
      _
    %p504 = scmp.le.s32.totalorder 1, %s19
    %p505 = scmp.lt.s32.totalorder %s19, 5
    %p506 = pnand %p504, %p505
    %p507 = pneg %p506
    // Predicated region
    $region69: #{char_transformer_forward.2} parent=5 // pred_check
      _
    $region70: #{char_transformer_forward.2} parent=5 // pred_check_branch
      %509 = sbr.rel (%p506) target = $region72
    $region71: #{char_transformer_forward.2} parent=5 // pred_region
      %s510 = ssub.s32 %s19, 1
      %p511 = scmp.lt.s32.totalorder %s28, 1
      %s512 = scalar_select %p511, %s28, 1
      %s513 = smul.addr %s512, 2
      %s514 = smul.addr %s513, 8
      %s515 = scalar_lea.vmem %s0, %s514
      %p516 = pneg %p57
      %p517 = pneg %p54
      %p518 = scmp.lt.s32.totalorder %s29, 1
      %s519 = scalar_select %p518, %s29, 1
      %s520 = scalar_lea.vmem %s1, %s519
      %p521 = pneg %p83
      %p522 = pneg %p80
      %p523 = scmp.lt.s32.totalorder %s29, 1
      %s524 = scalar_select %p523, %s29, 1
      %s525 = scalar_lea.vmem %s2, %s524
      %p526 = pneg %p109
      %p527 = pneg %p106
      %p528 = scmp.lt.s32.totalorder %s29, 1
      %s529 = scalar_select %p528, %s29, 1
      %s530 = smul.addr %s529, 48
      %s531 = smul.addr %s530, 4
      %s532 = scalar_lea.vmem %s3, %s531
      %p533 = pneg %p135
      %p534 = pneg %p132
      %p535 = scmp.lt.s32.totalorder %s29, 1
      %s536 = scalar_select %p535, %s29, 1
      %s537 = smul.addr %s536, 3
      %s538 = scalar_lea.vmem %s4, %s537
      %p539 = pneg %p161
      %p540 = pneg %p158
      %p541 = scmp.lt.s32.totalorder %s29, 1
      %s542 = scalar_select %p541, %s29, 1
      %s543 = smul.addr %s542, 16
      %s544 = smul.addr %s543, 4
      %s545 = scalar_lea.vmem %s5, %s544
      %p546 = pneg %p187
      %p547 = pneg %p184
      %p548 = scmp.lt.s32.totalorder %s29, 1
      %s549 = scalar_select %p548, %s29, 1
      %s550 = scalar_lea.vmem %s6, %s549
      %p551 = pneg %p213
      %p552 = pneg %p210
      %p553 = scmp.lt.s32.totalorder %s29, 1
      %s554 = scalar_select %p553, %s29, 1
      %s555 = scalar_lea.vmem %s7, %s554
      %p556 = pneg %p239
      %p557 = pneg %p236
      %p558 = scmp.lt.s32.totalorder %s29, 1
      %s559 = scalar_select %p558, %s29, 1
      %s560 = scalar_lea.vmem %s8, %s559
      %p561 = pneg %p265
      %p562 = pneg %p262
      %p563 = scmp.lt.s32.totalorder %s29, 1
      %s564 = scalar_select %p563, %s29, 1
      %s565 = smul.addr %s564, 64
      %s566 = smul.addr %s565, 4
      %s567 = scalar_lea.vmem %s9, %s566
      %p568 = pneg %p291
      %p569 = pneg %p288
      %p570 = scmp.lt.s32.totalorder %s29, 1
      %s571 = scalar_select %p570, %s29, 1
      %s572 = smul.addr %s571, 4
      %s573 = scalar_lea.vmem %s10, %s572
      %p574 = pneg %p317
      %p575 = pneg %p314
      %p576 = scmp.lt.s32.totalorder %s29, 1
      %s577 = scalar_select %p576, %s29, 1
      %s578 = smul.addr %s577, 64
      %s579 = smul.addr %s578, 4
      %s580 = scalar_lea.vmem %s11, %s579
      %p581 = pneg %p343
      %p582 = pneg %p340
      %p583 = scmp.lt.s32.totalorder %s29, 1
      %s584 = scalar_select %p583, %s29, 1
      %s585 = scalar_lea.vmem %s12, %s584
      %p586 = pneg %p369
      %p587 = pneg %p366
      %p588 = pneg %p395
      %p589 = pneg %p392
      %p590 = scmp.lt.s32.totalorder %s28, 1
      %s591 = scalar_select %p590, %s28, 1
      %s592 = smul.addr %s591, 2
      %s593 = smul.addr %s592, 8
      %s594 = scalar_lea.vmem %s13, %s593
      %p595 = scmp.lt.s32.totalorder %s28, 1
      %s596 = scalar_select %p595, %s28, 1
      %s597 = smul.addr %s596, 2
      %s598 = smul.addr %s597, 8
      %s599 = scalar_lea.vmem %s0, %s598
      %p600 = scmp.lt.s32.totalorder %s29, 1
      %s601 = scalar_select %p600, %s29, 1
      %s602 = scalar_lea.vmem %s1, %s601
      %p603 = scmp.lt.s32.totalorder %s29, 1
      %s604 = scalar_select %p603, %s29, 1
      %s605 = scalar_lea.vmem %s2, %s604
      %p606 = scmp.lt.s32.totalorder %s29, 1
      %s607 = scalar_select %p606, %s29, 1
      %s608 = smul.addr %s607, 48
      %s609 = smul.addr %s608, 4
      %s610 = scalar_lea.vmem %s3, %s609
      %p611 = scmp.lt.s32.totalorder %s29, 1
      %s612 = scalar_select %p611, %s29, 1
      %s613 = smul.addr %s612, 3
      %s614 = scalar_lea.vmem %s4, %s613
      %p615 = scmp.lt.s32.totalorder %s29, 1
      %s616 = scalar_select %p615, %s29, 1
      %s617 = smul.addr %s616, 16
      %s618 = smul.addr %s617, 4
      %s619 = scalar_lea.vmem %s5, %s618
      %p620 = scmp.lt.s32.totalorder %s29, 1
      %s621 = scalar_select %p620, %s29, 1
      %s622 = scalar_lea.vmem %s6, %s621
      %p623 = scmp.lt.s32.totalorder %s29, 1
      %s624 = scalar_select %p623, %s29, 1
      %s625 = scalar_lea.vmem %s7, %s624
      %p626 = scmp.lt.s32.totalorder %s29, 1
      %s627 = scalar_select %p626, %s29, 1
      %s628 = scalar_lea.vmem %s8, %s627
      %p629 = scmp.lt.s32.totalorder %s29, 1
      %s630 = scalar_select %p629, %s29, 1
      %s631 = smul.addr %s630, 64
      %s632 = smul.addr %s631, 4
      %s633 = scalar_lea.vmem %s9, %s632
      %p634 = scmp.lt.s32.totalorder %s29, 1
      %s635 = scalar_select %p634, %s29, 1
      %s636 = smul.addr %s635, 4
      %s637 = scalar_lea.vmem %s10, %s636
      %p638 = scmp.lt.s32.totalorder %s29, 1
      %s639 = scalar_select %p638, %s29, 1
      %s640 = smul.addr %s639, 64
      %s641 = smul.addr %s640, 4
      %s642 = scalar_lea.vmem %s11, %s641
      %p643 = scmp.lt.s32.totalorder %s29, 1
      %s644 = scalar_select %p643, %s29, 1
      %s645 = scalar_lea.vmem %s12, %s644
      %p646 = scmp.lt.s32.totalorder %s28, 1
      %s647 = scalar_select %p646, %s28, 1
      %s648 = smul.addr %s647, 2
      %s649 = smul.addr %s648, 8
      %s650 = scalar_lea.vmem %s13, %s649
      %p652 = scmp.eq.s32.totalorder %s29, 0
      // Predicated region
      $region73: #{char_transformer_forward.2} parent=71 // pred_check
        %p653 = pneg %p652
      $region74: #{char_transformer_forward.2} parent=71 // pred_check_branch
        %655 = sbr.rel (%p653) target = $region76
      $region75: #{char_transformer_forward.2} parent=71 // pred_region
        %v656 = vld [vmem:[%s599] sm:$0xff]
        %v657 = vld [vmem:[%s599 + $0x8] sm:$0xff]
        %658 = vst [vmem:[#allocation2] sm:$0xff] %v656
        %659 = vst [vmem:[#allocation2 + $0x8] sm:$0xff] %v657
      $region76: #{char_transformer_forward.2} parent=71 // pred_fallthru
        _
      %v660 = vld [vmem:[#allocation2] sm:$0xff]
      %v661 = vld [vmem:[#allocation2 + $0x8] sm:$0xff]
      %v662 = vld [vmem:[%s602] sm:$0x1]
      %v663 = vld [vmem:[%s605] sm:$0x1]
      %664 = vadd.xlane.f32.xlu0 %v660
      %v665 = vpop.xlane.xlu0 %664
      %666 = vadd.xlane.f32.xlu0 %v661
      %v667 = vpop.xlane.xlu0 %666
      %v668 = vrcp.pop 128.0
      %v669 = vmul.f32 128.0, %v668
      %v670 = vsub.f32 1.0, %v669
      %v671 = vmul.f32 %v668, %v670
      %v672 = vadd.f32 %v668, %v671
      %vm673 = vweird.f32 %v668
      %v674 = vsel %vm673, %v668, %v672
      %v675 = vmul.f32 %v665, %v674
      %v676 = vmul.f32 %v667, %v674
      %v677 = vmul.f32 %v660, %v660
      %v678 = vmul.f32 %v661, %v661
      %679 = vadd.xlane.f32.xlu0 %v677
      %v680 = vpop.xlane.xlu0 %679
      %681 = vadd.xlane.f32.xlu0 %v678
      %v682 = vpop.xlane.xlu0 %681
      %v683 = vmul.f32 %v680, %v674
      %v684 = vmul.f32 %v682, %v674
      %v685 = vmul.f32 %v675, %v675
      %v686 = vmul.f32 %v676, %v676
      %v687 = vsub.f32 %v683, %v685
      %v688 = vsub.f32 %v684, %v686
      %v689 = vmax.f32 %v687, 0.0
      %v690 = vmax.f32 %v688, 0.0
      %v691 = vsub.f32 %v660, %v675
      %v692 = vsub.f32 %v661, %v676
      %v693 = vadd.f32 %v689, 1e-05
      %v694 = vadd.f32 %v690, 1e-05
      %v695 = vrsqrt.pop %v693
      %v696 = vmul.f32 %v695, %v693
      %v697 = vmul.f32 %v696, %v695
      %v698 = vmul.f32 0.5, %v697
      %v699 = vsub.f32 1.5, %v698
      %v700 = vmul.f32 %v695, %v699
      %vm701 = vweird.f32 %v693
      %vm702 = vweird.f32 %v695
      %vm703 = vmor %vm701, %vm702
      %v704 = vsel %vm703, %v695, %v700
      %v705 = vrsqrt.pop %v694
      %v706 = vmul.f32 %v705, %v694
      %v707 = vmul.f32 %v706, %v705
      %v708 = vmul.f32 0.5, %v707
      %v709 = vsub.f32 1.5, %v708
      %v710 = vmul.f32 %v705, %v709
      %vm711 = vweird.f32 %v694
      %vm712 = vweird.f32 %v705
      %vm713 = vmor %vm711, %vm712
      %v714 = vsel %vm713, %v705, %v710
      %v715 = vmul.f32 %v691, %v704
      %v716 = vmul.f32 %v692, %v714
      %v718 = vperm.slane %v662, 0
      %v720 = vmul.f32 %v715, %v718
      %v721 = vmul.f32 %v716, %v718
      %v723 = vperm.slane %v663, 0
      %v725 = vadd.f32 %v720, %v723
      %v726 = vadd.f32 %v721, %v723
      %v727 = vpack.c.bf16 %v726, %v725
      %v728 = vld [vmem:[%s610] sm:$0xff]
      %v729 = vld [vmem:[%s610 + $0x8] sm:$0xf]
      %v730 = vld [vmem:[%s610 + $0xc] sm:$0xff]
      %v731 = vld [vmem:[%s610 + $0x14] sm:$0xf]
      %v732 = vld [vmem:[%s610 + $0x18] sm:$0xff]
      %v733 = vld [vmem:[%s610 + $0x20] sm:$0xf]
      %v734 = vld [vmem:[%s610 + $0x24] sm:$0xff]
      %v735 = vld [vmem:[%s610 + $0x2c] sm:$0xf]
      %v736 = vld [vmem:[%s610 + $0x30] sm:$0xff]
      %v737 = vld [vmem:[%s610 + $0x38] sm:$0xf]
      %v738 = vld [vmem:[%s610 + $0x3c] sm:$0xff]
      %v739 = vld [vmem:[%s610 + $0x44] sm:$0xf]
      %v740 = vld [vmem:[%s610 + $0x48] sm:$0xff]
      %v741 = vld [vmem:[%s610 + $0x50] sm:$0xf]
      %v742 = vld [vmem:[%s610 + $0x54] sm:$0xff]
      %v743 = vld [vmem:[%s610 + $0x5c] sm:$0xf]
      %v744 = vld [vmem:[%s610 + $0x60] sm:$0xff]
      %v745 = vld [vmem:[%s610 + $0x68] sm:$0xf]
      %v746 = vld [vmem:[%s610 + $0x6c] sm:$0xff]
      %v747 = vld [vmem:[%s610 + $0x74] sm:$0xf]
      %v748 = vld [vmem:[%s610 + $0x78] sm:$0xff]
      %v749 = vld [vmem:[%s610 + $0x80] sm:$0xf]
      %v750 = vld [vmem:[%s610 + $0x84] sm:$0xff]
      %v751 = vld [vmem:[%s610 + $0x8c] sm:$0xf]
      %v752 = vld [vmem:[%s610 + $0x90] sm:$0xff]
      %v753 = vld [vmem:[%s610 + $0x98] sm:$0xf]
      %v754 = vld [vmem:[%s610 + $0x9c] sm:$0xff]
      %v755 = vld [vmem:[%s610 + $0xa4] sm:$0xf]
      %v756 = vld [vmem:[%s610 + $0xa8] sm:$0xff]
      %v757 = vld [vmem:[%s610 + $0xb0] sm:$0xf]
      %v758 = vld [vmem:[%s610 + $0xb4] sm:$0xff]
      %v759 = vld [vmem:[%s610 + $0xbc] sm:$0xf]
      %v760 = vld [vmem:[%s614] sm:$0x7]
      %v762 = vperm.slane %v760, 0
      %v763 = vperm.slane %v760, 1
      %v764 = vperm.slane %v760, 2
      %v800 = vunpack.c.l.b16 %v728
      %v801 = vunpack.c.h.b16 %v728
      %v802 = vunpack.c.l.b16 %v729
      %v803 = vunpack.c.l.b16 %v730
      %v804 = vunpack.c.h.b16 %v730
      %v805 = vunpack.c.l.b16 %v731
      %v806 = vunpack.c.l.b16 %v732
      %v807 = vunpack.c.h.b16 %v732
      %v808 = vunpack.c.l.b16 %v733
      %v809 = vunpack.c.l.b16 %v734
      %v810 = vunpack.c.h.b16 %v734
      %v811 = vunpack.c.l.b16 %v735
      %v812 = vunpack.c.l.b16 %v736
      %v813 = vunpack.c.h.b16 %v736
      %v814 = vunpack.c.l.b16 %v737
      %v815 = vunpack.c.l.b16 %v738
      %v816 = vunpack.c.h.b16 %v738
      %v817 = vunpack.c.l.b16 %v739
      %v818 = vunpack.c.l.b16 %v740
      %v819 = vunpack.c.h.b16 %v740
      %v820 = vunpack.c.l.b16 %v741
      %v821 = vunpack.c.l.b16 %v742
      %v822 = vunpack.c.h.b16 %v742
      %v823 = vunpack.c.l.b16 %v743
      %v824 = vunpack.c.l.b16 %v744
      %v825 = vunpack.c.h.b16 %v744
      %v826 = vunpack.c.l.b16 %v745
      %v827 = vunpack.c.l.b16 %v746
      %v828 = vunpack.c.h.b16 %v746
      %v829 = vunpack.c.l.b16 %v747
      %v830 = vunpack.c.l.b16 %v748
      %v831 = vunpack.c.h.b16 %v748
      %v832 = vunpack.c.l.b16 %v749
      %v833 = vunpack.c.l.b16 %v750
      %v834 = vunpack.c.h.b16 %v750
      %v835 = vunpack.c.l.b16 %v751
      %v836 = vunpack.c.l.b16 %v752
      %v837 = vunpack.c.h.b16 %v752
      %v838 = vunpack.c.l.b16 %v753
      %v839 = vunpack.c.l.b16 %v754
      %v840 = vunpack.c.h.b16 %v754
      %v841 = vunpack.c.l.b16 %v755
      %v842 = vunpack.c.l.b16 %v756
      %v843 = vunpack.c.h.b16 %v756
      %v844 = vunpack.c.l.b16 %v757
      %v845 = vunpack.c.l.b16 %v758
      %v846 = vunpack.c.h.b16 %v758
      %v847 = vunpack.c.l.b16 %v759
      %v848 = vpack.c.b16 %v803, %v800
      %v849 = vpack.c.b16 %v804, %v801
      %v850 = vpack.c.b16 %v805, %v802
      %v851 = vpack.c.b16 %v809, %v806
      %v852 = vpack.c.b16 %v810, %v807
      %v853 = vpack.c.b16 %v811, %v808
      %v854 = vpack.c.b16 %v815, %v812
      %v855 = vpack.c.b16 %v816, %v813
      %v856 = vpack.c.b16 %v817, %v814
      %v857 = vpack.c.b16 %v821, %v818
      %v858 = vpack.c.b16 %v822, %v819
      %v859 = vpack.c.b16 %v823, %v820
      %v860 = vpack.c.b16 %v827, %v824
      %v861 = vpack.c.b16 %v828, %v825
      %v862 = vpack.c.b16 %v829, %v826
      %v863 = vpack.c.b16 %v833, %v830
      %v864 = vpack.c.b16 %v834, %v831
      %v865 = vpack.c.b16 %v835, %v832
      %v866 = vpack.c.b16 %v839, %v836
      %v867 = vpack.c.b16 %v840, %v837
      %v868 = vpack.c.b16 %v841, %v838
      %v869 = vpack.c.b16 %v845, %v842
      %v870 = vpack.c.b16 %v846, %v843
      %v871 = vpack.c.b16 %v847, %v844
      %896 = vmatpush.bf16.msra.mxu0 %v869
      %897 = vmatpush.bf16.msra.mxu0 %v866
      %898 = vmatpush.bf16.msra.mxu0 %v863
      %899 = vmatpush.bf16.msra.mxu0 %v860
      %900 = vmatpush.bf16.msra.mxu0 %v857
      %901 = vmatpush.bf16.msra.mxu0 %v854
      %902 = vmatpush.bf16.msra.mxu0 %v851
      %903 = vmatpush.bf16.msra.mxu0 %v848
      %904 = vmatmul.bf16.gmra.mxu0 %v727
      %v905 = vpop.f32.mrf.mxu0
      %v906 = vadd.f32 %v762, %v905
      %v907 = vpop.f32.mrf.mxu0
      %v908 = vadd.f32 %v762, %v907
      %909 = vdwg.mxu0
      %910 = vmatpush.bf16.msra.mxu0 %v870
      %911 = vmatpush.bf16.msra.mxu0 %v867
      %912 = vmatpush.bf16.msra.mxu0 %v864
      %913 = vmatpush.bf16.msra.mxu0 %v861
      %914 = vmatpush.bf16.msra.mxu0 %v858
      %915 = vmatpush.bf16.msra.mxu0 %v855
      %916 = vmatpush.bf16.msra.mxu0 %v852
      %917 = vmatpush.bf16.msra.mxu0 %v849
      %918 = vmatmul.bf16.gmra.mxu0 %v727
      %v919 = vpop.f32.mrf.mxu0
      %v920 = vadd.f32 %v763, %v919
      %v921 = vpop.f32.mrf.mxu0
      %v922 = vadd.f32 %v763, %v921
      %923 = vdwg.mxu0
      %924 = vmatpush.bf16.msra.mxu0 %v871
      %925 = vmatpush.bf16.msra.mxu0 %v868
      %926 = vmatpush.bf16.msra.mxu0 %v865
      %927 = vmatpush.bf16.msra.mxu0 %v862
      %928 = vmatpush.bf16.msra.mxu0 %v859
      %929 = vmatpush.bf16.msra.mxu0 %v856
      %930 = vmatpush.bf16.msra.mxu0 %v853
      %931 = vmatpush.bf16.msra.mxu0 %v850
      %932 = vmatmul.bf16.gmra.mxu0 %v727
      %v933 = vpop.f32.mrf.mxu0
      %v934 = vadd.f32 %v764, %v933
      %v935 = vpop.f32.mrf.mxu0
      %v936 = vadd.f32 %v764, %v935
      %937 = vdwg.mxu0
      %940 = vrot.lane.b32.xlu0 %v906, 96
      %v941 = vpop.permute.xlu0 %940
      %942 = vrot.lane.b32.xlu0 %v908, 96
      %v943 = vpop.permute.xlu0 %942
      %946 = vrot.lane.b32.xlu0 %v906, 64
      %v947 = vpop.permute.xlu0 %946
      %948 = vrot.lane.b32.xlu0 %v908, 64
      %v949 = vpop.permute.xlu0 %948
      %952 = vrot.lane.b32.xlu0 %v906, 32
      %v953 = vpop.permute.xlu0 %952
      %954 = vrot.lane.b32.xlu0 %v908, 32
      %v955 = vpop.permute.xlu0 %954
      %v958 = vpack.c.bf16 %v906, %v906
      %v959 = vpack.c.bf16 %v908, %v908
      %v960 = vpack.c.bf16 %v941, %v941
      %v961 = vpack.c.bf16 %v943, %v943
      %v962 = vpack.c.bf16 %v947, %v947
      %v963 = vpack.c.bf16 %v949, %v949
      %v964 = vpack.c.bf16 %v953, %v953
      %v965 = vpack.c.bf16 %v955, %v955
      %968 = vrot.lane.b32.xlu0 %v920, 96
      %v969 = vpop.permute.xlu0 %968
      %970 = vrot.lane.b32.xlu0 %v922, 96
      %v971 = vpop.permute.xlu0 %970
      %974 = vrot.lane.b32.xlu0 %v920, 64
      %v975 = vpop.permute.xlu0 %974
      %976 = vrot.lane.b32.xlu0 %v922, 64
      %v977 = vpop.permute.xlu0 %976
      %980 = vrot.lane.b32.xlu0 %v920, 32
      %v981 = vpop.permute.xlu0 %980
      %982 = vrot.lane.b32.xlu0 %v922, 32
      %v983 = vpop.permute.xlu0 %982
      %v986 = vpack.c.bf16 %v920, %v920
      %v987 = vpack.c.bf16 %v922, %v922
      %v988 = vpack.c.bf16 %v969, %v969
      %v989 = vpack.c.bf16 %v971, %v971
      %v990 = vpack.c.bf16 %v975, %v975
      %v991 = vpack.c.bf16 %v977, %v977
      %v992 = vpack.c.bf16 %v981, %v981
      %v993 = vpack.c.bf16 %v983, %v983
      %996 = vrot.lane.b32.xlu0 %v934, 96
      %v997 = vpop.permute.xlu0 %996
      %998 = vrot.lane.b32.xlu0 %v936, 96
      %v999 = vpop.permute.xlu0 %998
      %1002 = vrot.lane.b32.xlu0 %v934, 64
      %v1003 = vpop.permute.xlu0 %1002
      %1004 = vrot.lane.b32.xlu0 %v936, 64
      %v1005 = vpop.permute.xlu0 %1004
      %1008 = vrot.lane.b32.xlu0 %v934, 32
      %v1009 = vpop.permute.xlu0 %1008
      %1010 = vrot.lane.b32.xlu0 %v936, 32
      %v1011 = vpop.permute.xlu0 %1010
      %v1014 = vpack.c.bf16 %v934, %v934
      %v1015 = vpack.c.bf16 %v936, %v936
      %v1016 = vpack.c.bf16 %v997, %v997
      %v1017 = vpack.c.bf16 %v999, %v999
      %v1018 = vpack.c.bf16 %v1003, %v1003
      %v1019 = vpack.c.bf16 %v1005, %v1005
      %v1020 = vpack.c.bf16 %v1009, %v1009
      %v1021 = vpack.c.bf16 %v1011, %v1011
      %v1022 = vlaneseq
      %v1023 = vshrl.u32 %v1022, 7
      %v1024 = vadd.s32 %v1023, 8
      %v1025 = vlaneseq
      %v1026 = vand.u32 %v1025, 127
      %vm1027 = vcmp.le.s32.totalorder %v1026, %v1023
      %vm1028 = vcmp.le.s32.totalorder %v1026, %v1024
      %v1029 = vsel %vm1027, 0.0, -1e+30
      %v1030 = vsel %vm1028, 0.0, -1e+30
      %v1033 = vunpack.c.l.b16 %v958
      %v1034 = vunpack.c.l.b16 %v959
      %v1035 = vpack.c.b16 %v1034, %v1033
      %v1038 = vunpack.c.l.b16 %v986
      %v1039 = vunpack.c.l.b16 %v987
      %v1040 = vpack.c.b16 %v1039, %v1038
      %vm1041 = vcmask 261120
      %v1043 = vsel %vm1041, %v1035, 0
      %v1046 = vsel %vm1041, %v1040, 0
      %1048 = vmatpush.bf16.xpose.msra.mxu0 0
      %1049 = vmatpush.bf16.xpose.msra.mxu0 0
      %1050 = vmatpush.bf16.xpose.msra.mxu0 0
      %1051 = vmatpush.bf16.xpose.msra.mxu0 0
      %1052 = vmatpush.bf16.xpose.msra.mxu0 0
      %1053 = vmatpush.bf16.xpose.msra.mxu0 0
      %1054 = vmatpush.bf16.xpose.msra.mxu0 0
      %1055 = vmatpush.bf16.xpose.msra.mxu0 %v1046
      %1056 = vmatmul.bf16.gmra.mxu0 %v1043
      %v1057 = vpop.f32.mrf.mxu0
      %v1058 = vadd.f32 %v1029, %v1057
      %v1059 = vpop.f32.mrf.mxu0
      %v1060 = vadd.f32 %v1030, %v1059
      %1061 = vdwg.mxu0
      %v1064 = vunpack.c.l.b16 %v960
      %v1065 = vunpack.c.l.b16 %v961
      %v1066 = vpack.c.b16 %v1065, %v1064
      %v1069 = vunpack.c.l.b16 %v988
      %v1070 = vunpack.c.l.b16 %v989
      %v1071 = vpack.c.b16 %v1070, %v1069
      %v1073 = vsel %vm1041, %v1066, 0
      %v1076 = vsel %vm1041, %v1071, 0
      %1078 = vmatpush.bf16.xpose.msra.mxu0 0
      %1079 = vmatpush.bf16.xpose.msra.mxu0 0
      %1080 = vmatpush.bf16.xpose.msra.mxu0 0
      %1081 = vmatpush.bf16.xpose.msra.mxu0 0
      %1082 = vmatpush.bf16.xpose.msra.mxu0 0
      %1083 = vmatpush.bf16.xpose.msra.mxu0 0
      %1084 = vmatpush.bf16.xpose.msra.mxu0 0
      %1085 = vmatpush.bf16.xpose.msra.mxu0 %v1076
      %1086 = vmatmul.bf16.gmra.mxu0 %v1073
      %v1087 = vpop.f32.mrf.mxu0
      %v1088 = vadd.f32 %v1029, %v1087
      %v1089 = vpop.f32.mrf.mxu0
      %v1090 = vadd.f32 %v1030, %v1089
      %1091 = vdwg.mxu0
      %v1094 = vunpack.c.l.b16 %v962
      %v1095 = vunpack.c.l.b16 %v963
      %v1096 = vpack.c.b16 %v1095, %v1094
      %v1099 = vunpack.c.l.b16 %v990
      %v1100 = vunpack.c.l.b16 %v991
      %v1101 = vpack.c.b16 %v1100, %v1099
      %v1103 = vsel %vm1041, %v1096, 0
      %v1106 = vsel %vm1041, %v1101, 0
      %1108 = vmatpush.bf16.xpose.msra.mxu0 0
      %1109 = vmatpush.bf16.xpose.msra.mxu0 0
      %1110 = vmatpush.bf16.xpose.msra.mxu0 0
      %1111 = vmatpush.bf16.xpose.msra.mxu0 0
      %1112 = vmatpush.bf16.xpose.msra.mxu0 0
      %1113 = vmatpush.bf16.xpose.msra.mxu0 0
      %1114 = vmatpush.bf16.xpose.msra.mxu0 0
      %1115 = vmatpush.bf16.xpose.msra.mxu0 %v1106
      %1116 = vmatmul.bf16.gmra.mxu0 %v1103
      %v1117 = vpop.f32.mrf.mxu0
      %v1118 = vadd.f32 %v1029, %v1117
      %v1119 = vpop.f32.mrf.mxu0
      %v1120 = vadd.f32 %v1030, %v1119
      %1121 = vdwg.mxu0
      %v1124 = vunpack.c.l.b16 %v964
      %v1125 = vunpack.c.l.b16 %v965
      %v1126 = vpack.c.b16 %v1125, %v1124
      %v1129 = vunpack.c.l.b16 %v992
      %v1130 = vunpack.c.l.b16 %v993
      %v1131 = vpack.c.b16 %v1130, %v1129
      %v1133 = vsel %vm1041, %v1126, 0
      %v1136 = vsel %vm1041, %v1131, 0
      %1138 = vmatpush.bf16.xpose.msra.mxu0 0
      %1139 = vmatpush.bf16.xpose.msra.mxu0 0
      %1140 = vmatpush.bf16.xpose.msra.mxu0 0
      %1141 = vmatpush.bf16.xpose.msra.mxu0 0
      %1142 = vmatpush.bf16.xpose.msra.mxu0 0
      %1143 = vmatpush.bf16.xpose.msra.mxu0 0
      %1144 = vmatpush.bf16.xpose.msra.mxu0 0
      %1145 = vmatpush.bf16.xpose.msra.mxu0 %v1136
      %1146 = vmatmul.bf16.gmra.mxu0 %v1133
      %v1147 = vpop.f32.mrf.mxu0
      %v1148 = vadd.f32 %v1029, %v1147
      %v1149 = vpop.f32.mrf.mxu0
      %v1150 = vadd.f32 %v1030, %v1149
      %1151 = vdwg.mxu0
      %vm1152 = vcmask 130048
      %v1153 = vsel %vm1152, %v1058, -inf
      %1154 = vmax.xlane.f32.xlu0 %v1153
      %v1155 = vpop.xlane.xlu0 %1154
      %v1156 = vsel %vm1152, %v1060, -inf
      %1157 = vmax.xlane.f32.xlu0 %v1156
      %v1158 = vpop.xlane.xlu0 %1157
      %v1159 = vsel %vm1152, %v1088, -inf
      %1160 = vmax.xlane.f32.xlu0 %v1159
      %v1161 = vpop.xlane.xlu0 %1160
      %v1162 = vsel %vm1152, %v1090, -inf
      %1163 = vmax.xlane.f32.xlu0 %v1162
      %v1164 = vpop.xlane.xlu0 %1163
      %v1165 = vsel %vm1152, %v1118, -inf
      %1166 = vmax.xlane.f32.xlu0 %v1165
      %v1167 = vpop.xlane.xlu0 %1166
      %v1168 = vsel %vm1152, %v1120, -inf
      %1169 = vmax.xlane.f32.xlu0 %v1168
      %v1170 = vpop.xlane.xlu0 %1169
      %v1171 = vsel %vm1152, %v1148, -inf
      %1172 = vmax.xlane.f32.xlu0 %v1171
      %v1173 = vpop.xlane.xlu0 %1172
      %v1174 = vsel %vm1152, %v1150, -inf
      %1175 = vmax.xlane.f32.xlu0 %v1174
      %v1176 = vpop.xlane.xlu0 %1175
      %v1177 = vsub.f32 %v1058, %v1155
      %v1178 = vsub.f32 %v1060, %v1158
      %v1179 = vsub.f32 %v1088, %v1161
      %v1180 = vsub.f32 %v1090, %v1164
      %v1181 = vsub.f32 %v1118, %v1167
      %v1182 = vsub.f32 %v1120, %v1170
      %v1183 = vsub.f32 %v1148, %v1173
      %v1184 = vsub.f32 %v1150, %v1176
      %v1185 = vmul.f32 %v1177, 1.442695
      %v1186 = vpow.pop %v1185
      %v1187 = vmul.f32 %v1178, 1.442695
      %v1188 = vpow.pop %v1187
      %v1189 = vmul.f32 %v1179, 1.442695
      %v1190 = vpow.pop %v1189
      %v1191 = vmul.f32 %v1180, 1.442695
      %v1192 = vpow.pop %v1191
      %v1193 = vmul.f32 %v1181, 1.442695
      %v1194 = vpow.pop %v1193
      %v1195 = vmul.f32 %v1182, 1.442695
      %v1196 = vpow.pop %v1195
      %v1197 = vmul.f32 %v1183, 1.442695
      %v1198 = vpow.pop %v1197
      %v1199 = vmul.f32 %v1184, 1.442695
      %v1200 = vpow.pop %v1199
      %v1201 = vsel %vm1152, %v1186, 0.0
      %1202 = vadd.xlane.f32.xlu0 %v1201
      %v1203 = vpop.xlane.xlu0 %1202
      %v1204 = vsel %vm1152, %v1188, 0.0
      %1205 = vadd.xlane.f32.xlu0 %v1204
      %v1206 = vpop.xlane.xlu0 %1205
      %v1207 = vsel %vm1152, %v1190, 0.0
      %1208 = vadd.xlane.f32.xlu0 %v1207
      %v1209 = vpop.xlane.xlu0 %1208
      %v1210 = vsel %vm1152, %v1192, 0.0
      %1211 = vadd.xlane.f32.xlu0 %v1210
      %v1212 = vpop.xlane.xlu0 %1211
      %v1213 = vsel %vm1152, %v1194, 0.0
      %1214 = vadd.xlane.f32.xlu0 %v1213
      %v1215 = vpop.xlane.xlu0 %1214
      %v1216 = vsel %vm1152, %v1196, 0.0
      %1217 = vadd.xlane.f32.xlu0 %v1216
      %v1218 = vpop.xlane.xlu0 %1217
      %v1219 = vsel %vm1152, %v1198, 0.0
      %1220 = vadd.xlane.f32.xlu0 %v1219
      %v1221 = vpop.xlane.xlu0 %1220
      %v1222 = vsel %vm1152, %v1200, 0.0
      %1223 = vadd.xlane.f32.xlu0 %v1222
      %v1224 = vpop.xlane.xlu0 %1223
      %v1225 = vrcp.pop %v1203
      %v1226 = vrcp.pop %v1206
      %v1227 = vrcp.pop %v1209
      %v1228 = vrcp.pop %v1212
      %v1229 = vrcp.pop %v1215
      %v1230 = vrcp.pop %v1218
      %v1231 = vrcp.pop %v1221
      %v1232 = vrcp.pop %v1224
      %v1233 = vmul.f32 %v1186, %v1225
      %v1234 = vmul.f32 %v1188, %v1226
      %v1235 = vmul.f32 %v1190, %v1227
      %v1236 = vmul.f32 %v1192, %v1228
      %v1237 = vmul.f32 %v1194, %v1229
      %v1238 = vmul.f32 %v1196, %v1230
      %v1239 = vmul.f32 %v1198, %v1231
      %v1240 = vmul.f32 %v1200, %v1232
      %v1241 = vpack.c.bf16 %v1233, %v1233
      %v1242 = vpack.c.bf16 %v1234, %v1234
      %v1243 = vpack.c.bf16 %v1235, %v1235
      %v1244 = vpack.c.bf16 %v1236, %v1236
      %v1245 = vpack.c.bf16 %v1237, %v1237
      %v1246 = vpack.c.bf16 %v1238, %v1238
      %v1247 = vpack.c.bf16 %v1239, %v1239
      %v1248 = vpack.c.bf16 %v1240, %v1240
      %v1251 = vunpack.c.l.b16 %v1241
      %v1252 = vunpack.c.l.b16 %v1242
      %v1253 = vpack.c.b16 %v1252, %v1251
      %v1256 = vunpack.c.l.b16 %v1014
      %v1257 = vunpack.c.l.b16 %v1015
      %v1258 = vpack.c.b16 %v1257, %v1256
      %v1261 = vsel %vm1152, %v1253, 0
      %1263 = vmatpush.bf16.msra.mxu0 0
      %1264 = vmatpush.bf16.msra.mxu0 0
      %1265 = vmatpush.bf16.msra.mxu0 0
      %1266 = vmatpush.bf16.msra.mxu0 0
      %1267 = vmatpush.bf16.msra.mxu0 0
      %1268 = vmatpush.bf16.msra.mxu0 0
      %1269 = vmatpush.bf16.msra.mxu0 0
      %1270 = vmatpush.bf16.msra.mxu0 %v1258
      %1271 = vmatmul.bf16.gmra.mxu0 %v1261
      %v1272 = vpop.f32.mrf.mxu0
      %v1273 = vadd.f32 0.0, %v1272
      %v1274 = vpop.f32.mrf.mxu0
      %v1275 = vadd.f32 0.0, %v1274
      %1276 = vdwg.mxu0
      %v1279 = vunpack.c.l.b16 %v1243
      %v1280 = vunpack.c.l.b16 %v1244
      %v1281 = vpack.c.b16 %v1280, %v1279
      %v1284 = vunpack.c.l.b16 %v1016
      %v1285 = vunpack.c.l.b16 %v1017
      %v1286 = vpack.c.b16 %v1285, %v1284
      %v1289 = vsel %vm1152, %v1281, 0
      %1291 = vmatpush.bf16.msra.mxu0 0
      %1292 = vmatpush.bf16.msra.mxu0 0
      %1293 = vmatpush.bf16.msra.mxu0 0
      %1294 = vmatpush.bf16.msra.mxu0 0
      %1295 = vmatpush.bf16.msra.mxu0 0
      %1296 = vmatpush.bf16.msra.mxu0 0
      %1297 = vmatpush.bf16.msra.mxu0 0
      %1298 = vmatpush.bf16.msra.mxu0 %v1286
      %1299 = vmatmul.bf16.gmra.mxu0 %v1289
      %v1300 = vpop.f32.mrf.mxu0
      %v1301 = vadd.f32 0.0, %v1300
      %v1302 = vpop.f32.mrf.mxu0
      %v1303 = vadd.f32 0.0, %v1302
      %1304 = vdwg.mxu0
      %v1307 = vunpack.c.l.b16 %v1245
      %v1308 = vunpack.c.l.b16 %v1246
      %v1309 = vpack.c.b16 %v1308, %v1307
      %v1312 = vunpack.c.l.b16 %v1018
      %v1313 = vunpack.c.l.b16 %v1019
      %v1314 = vpack.c.b16 %v1313, %v1312
      %v1317 = vsel %vm1152, %v1309, 0
      %1319 = vmatpush.bf16.msra.mxu0 0
      %1320 = vmatpush.bf16.msra.mxu0 0
      %1321 = vmatpush.bf16.msra.mxu0 0
      %1322 = vmatpush.bf16.msra.mxu0 0
      %1323 = vmatpush.bf16.msra.mxu0 0
      %1324 = vmatpush.bf16.msra.mxu0 0
      %1325 = vmatpush.bf16.msra.mxu0 0
      %1326 = vmatpush.bf16.msra.mxu0 %v1314
      %1327 = vmatmul.bf16.gmra.mxu0 %v1317
      %v1328 = vpop.f32.mrf.mxu0
      %v1329 = vadd.f32 0.0, %v1328
      %v1330 = vpop.f32.mrf.mxu0
      %v1331 = vadd.f32 0.0, %v1330
      %1332 = vdwg.mxu0
      %v1335 = vunpack.c.l.b16 %v1247
      %v1336 = vunpack.c.l.b16 %v1248
      %v1337 = vpack.c.b16 %v1336, %v1335
      %v1340 = vunpack.c.l.b16 %v1020
      %v1341 = vunpack.c.l.b16 %v1021
      %v1342 = vpack.c.b16 %v1341, %v1340
      %v1345 = vsel %vm1152, %v1337, 0
      %1347 = vmatpush.bf16.msra.mxu0 0
      %1348 = vmatpush.bf16.msra.mxu0 0
      %1349 = vmatpush.bf16.msra.mxu0 0
      %1350 = vmatpush.bf16.msra.mxu0 0
      %1351 = vmatpush.bf16.msra.mxu0 0
      %1352 = vmatpush.bf16.msra.mxu0 0
      %1353 = vmatpush.bf16.msra.mxu0 0
      %1354 = vmatpush.bf16.msra.mxu0 %v1342
      %1355 = vmatmul.bf16.gmra.mxu0 %v1345
      %v1356 = vpop.f32.mrf.mxu0
      %v1357 = vadd.f32 0.0, %v1356
      %v1358 = vpop.f32.mrf.mxu0
      %v1359 = vadd.f32 0.0, %v1358
      %1360 = vdwg.mxu0
      %1363 = vrot.lane.b32.xlu0 %v1301, 32
      %v1364 = vpop.permute.xlu0 %1363
      %1365 = vrot.lane.b32.xlu0 %v1303, 32
      %v1366 = vpop.permute.xlu0 %1365
      %1371 = vrot.lane.b32.xlu0 %v1329, 64
      %v1372 = vpop.permute.xlu0 %1371
      %1373 = vrot.lane.b32.xlu0 %v1331, 64
      %v1374 = vpop.permute.xlu0 %1373
      %1379 = vrot.lane.b32.xlu0 %v1357, 96
      %v1380 = vpop.permute.xlu0 %1379
      %1381 = vrot.lane.b32.xlu0 %v1359, 96
      %v1382 = vpop.permute.xlu0 %1381
      %v1385 = vsel %vm1041, %v1273, %v1364
      %v1386 = vsel %vm1041, %v1275, %v1366
      %vm1387 = vcmask 523264
      %v1388 = vsel %vm1387, %v1385, %v1372
      %v1389 = vsel %vm1387, %v1386, %v1374
      %vm1390 = vcmask 785408
      %v1391 = vsel %vm1390, %v1388, %v1380
      %v1392 = vsel %vm1390, %v1389, %v1382
      %v1393 = vpack.c.bf16 %v1392, %v1391
      %v1394 = vld [vmem:[%s619] sm:$0xf]
      %v1395 = vld [vmem:[%s619 + $0x4] sm:$0xf]
      %v1396 = vld [vmem:[%s619 + $0x8] sm:$0xf]
      %v1397 = vld [vmem:[%s619 + $0xc] sm:$0xf]
      %v1398 = vld [vmem:[%s619 + $0x10] sm:$0xf]
      %v1399 = vld [vmem:[%s619 + $0x14] sm:$0xf]
      %v1400 = vld [vmem:[%s619 + $0x18] sm:$0xf]
      %v1401 = vld [vmem:[%s619 + $0x1c] sm:$0xf]
      %v1402 = vld [vmem:[%s619 + $0x20] sm:$0xf]
      %v1403 = vld [vmem:[%s619 + $0x24] sm:$0xf]
      %v1404 = vld [vmem:[%s619 + $0x28] sm:$0xf]
      %v1405 = vld [vmem:[%s619 + $0x2c] sm:$0xf]
      %v1406 = vld [vmem:[%s619 + $0x30] sm:$0xf]
      %v1407 = vld [vmem:[%s619 + $0x34] sm:$0xf]
      %v1408 = vld [vmem:[%s619 + $0x38] sm:$0xf]
      %v1409 = vld [vmem:[%s619 + $0x3c] sm:$0xf]
      %v1410 = vld [vmem:[%s622] sm:$0x1]
      %v1412 = vperm.slane %v1410, 0
      %v1430 = vunpack.c.l.b16 %v1394
      %v1431 = vunpack.c.l.b16 %v1395
      %v1432 = vunpack.c.l.b16 %v1396
      %v1433 = vunpack.c.l.b16 %v1397
      %v1434 = vunpack.c.l.b16 %v1398
      %v1435 = vunpack.c.l.b16 %v1399
      %v1436 = vunpack.c.l.b16 %v1400
      %v1437 = vunpack.c.l.b16 %v1401
      %v1438 = vunpack.c.l.b16 %v1402
      %v1439 = vunpack.c.l.b16 %v1403
      %v1440 = vunpack.c.l.b16 %v1404
      %v1441 = vunpack.c.l.b16 %v1405
      %v1442 = vunpack.c.l.b16 %v1406
      %v1443 = vunpack.c.l.b16 %v1407
      %v1444 = vunpack.c.l.b16 %v1408
      %v1445 = vunpack.c.l.b16 %v1409
      %v1446 = vpack.c.b16 %v1431, %v1430
      %v1447 = vpack.c.b16 %v1433, %v1432
      %v1448 = vpack.c.b16 %v1435, %v1434
      %v1449 = vpack.c.b16 %v1437, %v1436
      %v1450 = vpack.c.b16 %v1439, %v1438
      %v1451 = vpack.c.b16 %v1441, %v1440
      %v1452 = vpack.c.b16 %v1443, %v1442
      %v1453 = vpack.c.b16 %v1445, %v1444
      %1462 = vmatpush.bf16.msra.mxu0 %v1453
      %1463 = vmatpush.bf16.msra.mxu0 %v1452
      %1464 = vmatpush.bf16.msra.mxu0 %v1451
      %1465 = vmatpush.bf16.msra.mxu0 %v1450
      %1466 = vmatpush.bf16.msra.mxu0 %v1449
      %1467 = vmatpush.bf16.msra.mxu0 %v1448
      %1468 = vmatpush.bf16.msra.mxu0 %v1447
      %1469 = vmatpush.bf16.msra.mxu0 %v1446
      %1470 = vmatmul.bf16.gmra.mxu0 %v1393
      %v1471 = vpop.f32.mrf.mxu0
      %v1472 = vadd.f32 %v1412, %v1471
      %v1473 = vpop.f32.mrf.mxu0
      %v1474 = vadd.f32 %v1412, %v1473
      %1475 = vdwg.mxu0
      %v1476 = vadd.f32 %v660, %v1472
      %v1477 = vadd.f32 %v661, %v1474
      %v1478 = vld [vmem:[%s625] sm:$0x1]
      %v1479 = vld [vmem:[%s628] sm:$0x1]
      %1480 = vadd.xlane.f32.xlu0 %v1476
      %v1481 = vpop.xlane.xlu0 %1480
      %1482 = vadd.xlane.f32.xlu0 %v1477
      %v1483 = vpop.xlane.xlu0 %1482
      %v1484 = vmul.f32 %v1481, %v674
      %v1485 = vmul.f32 %v1483, %v674
      %v1486 = vmul.f32 %v1476, %v1476
      %v1487 = vmul.f32 %v1477, %v1477
      %1488 = vadd.xlane.f32.xlu0 %v1486
      %v1489 = vpop.xlane.xlu0 %1488
      %1490 = vadd.xlane.f32.xlu0 %v1487
      %v1491 = vpop.xlane.xlu0 %1490
      %v1492 = vmul.f32 %v1489, %v674
      %v1493 = vmul.f32 %v1491, %v674
      %v1494 = vmul.f32 %v1484, %v1484
      %v1495 = vmul.f32 %v1485, %v1485
      %v1496 = vsub.f32 %v1492, %v1494
      %v1497 = vsub.f32 %v1493, %v1495
      %v1498 = vmax.f32 %v1496, 0.0
      %v1499 = vmax.f32 %v1497, 0.0
      %v1500 = vsub.f32 %v1476, %v1484
      %v1501 = vsub.f32 %v1477, %v1485
      %v1502 = vadd.f32 %v1498, 1e-05
      %v1503 = vadd.f32 %v1499, 1e-05
      %v1504 = vrsqrt.pop %v1502
      %v1505 = vmul.f32 %v1504, %v1502
      %v1506 = vmul.f32 %v1505, %v1504
      %v1507 = vmul.f32 0.5, %v1506
      %v1508 = vsub.f32 1.5, %v1507
      %v1509 = vmul.f32 %v1504, %v1508
      %vm1510 = vweird.f32 %v1502
      %vm1511 = vweird.f32 %v1504
      %vm1512 = vmor %vm1510, %vm1511
      %v1513 = vsel %vm1512, %v1504, %v1509
      %v1514 = vrsqrt.pop %v1503
      %v1515 = vmul.f32 %v1514, %v1503
      %v1516 = vmul.f32 %v1515, %v1514
      %v1517 = vmul.f32 0.5, %v1516
      %v1518 = vsub.f32 1.5, %v1517
      %v1519 = vmul.f32 %v1514, %v1518
      %vm1520 = vweird.f32 %v1503
      %vm1521 = vweird.f32 %v1514
      %vm1522 = vmor %vm1520, %vm1521
      %v1523 = vsel %vm1522, %v1514, %v1519
      %v1524 = vmul.f32 %v1500, %v1513
      %v1525 = vmul.f32 %v1501, %v1523
      %v1527 = vperm.slane %v1478, 0
      %v1529 = vmul.f32 %v1524, %v1527
      %v1530 = vmul.f32 %v1525, %v1527
      %v1532 = vperm.slane %v1479, 0
      %v1534 = vadd.f32 %v1529, %v1532
      %v1535 = vadd.f32 %v1530, %v1532
      %v1536 = vpack.c.bf16 %v1535, %v1534
      %v1537 = vld [vmem:[%s633] sm:$0xff]
      %v1538 = vld [vmem:[%s633 + $0x8] sm:$0xff]
      %v1539 = vld [vmem:[%s633 + $0x10] sm:$0xff]
      %v1540 = vld [vmem:[%s633 + $0x18] sm:$0xff]
      %v1541 = vld [vmem:[%s633 + $0x20] sm:$0xff]
      %v1542 = vld [vmem:[%s633 + $0x28] sm:$0xff]
      %v1543 = vld [vmem:[%s633 + $0x30] sm:$0xff]
      %v1544 = vld [vmem:[%s633 + $0x38] sm:$0xff]
      %v1545 = vld [vmem:[%s633 + $0x40] sm:$0xff]
      %v1546 = vld [vmem:[%s633 + $0x48] sm:$0xff]
      %v1547 = vld [vmem:[%s633 + $0x50] sm:$0xff]
      %v1548 = vld [vmem:[%s633 + $0x58] sm:$0xff]
      %v1549 = vld [vmem:[%s633 + $0x60] sm:$0xff]
      %v1550 = vld [vmem:[%s633 + $0x68] sm:$0xff]
      %v1551 = vld [vmem:[%s633 + $0x70] sm:$0xff]
      %v1552 = vld [vmem:[%s633 + $0x78] sm:$0xff]
      %v1553 = vld [vmem:[%s633 + $0x80] sm:$0xff]
      %v1554 = vld [vmem:[%s633 + $0x88] sm:$0xff]
      %v1555 = vld [vmem:[%s633 + $0x90] sm:$0xff]
      %v1556 = vld [vmem:[%s633 + $0x98] sm:$0xff]
      %v1557 = vld [vmem:[%s633 + $0xa0] sm:$0xff]
      %v1558 = vld [vmem:[%s633 + $0xa8] sm:$0xff]
      %v1559 = vld [vmem:[%s633 + $0xb0] sm:$0xff]
      %v1560 = vld [vmem:[%s633 + $0xb8] sm:$0xff]
      %v1561 = vld [vmem:[%s633 + $0xc0] sm:$0xff]
      %v1562 = vld [vmem:[%s633 + $0xc8] sm:$0xff]
      %v1563 = vld [vmem:[%s633 + $0xd0] sm:$0xff]
      %v1564 = vld [vmem:[%s633 + $0xd8] sm:$0xff]
      %v1565 = vld [vmem:[%s633 + $0xe0] sm:$0xff]
      %v1566 = vld [vmem:[%s633 + $0xe8] sm:$0xff]
      %v1567 = vld [vmem:[%s633 + $0xf0] sm:$0xff]
      %v1568 = vld [vmem:[%s633 + $0xf8] sm:$0xff]
      %v1569 = vld [vmem:[%s637] sm:$0xf]
      %v1571 = vperm.slane %v1569, 0
      %v1572 = vperm.slane %v1569, 1
      %v1573 = vperm.slane %v1569, 2
      %v1574 = vperm.slane %v1569, 3
      %v1611 = vunpack.c.l.b16 %v1537
      %v1612 = vunpack.c.h.b16 %v1537
      %v1613 = vunpack.c.l.b16 %v1538
      %v1614 = vunpack.c.h.b16 %v1538
      %v1615 = vunpack.c.l.b16 %v1539
      %v1616 = vunpack.c.h.b16 %v1539
      %v1617 = vunpack.c.l.b16 %v1540
      %v1618 = vunpack.c.h.b16 %v1540
      %v1619 = vunpack.c.l.b16 %v1541
      %v1620 = vunpack.c.h.b16 %v1541
      %v1621 = vunpack.c.l.b16 %v1542
      %v1622 = vunpack.c.h.b16 %v1542
      %v1623 = vunpack.c.l.b16 %v1543
      %v1624 = vunpack.c.h.b16 %v1543
      %v1625 = vunpack.c.l.b16 %v1544
      %v1626 = vunpack.c.h.b16 %v1544
      %v1627 = vunpack.c.l.b16 %v1545
      %v1628 = vunpack.c.h.b16 %v1545
      %v1629 = vunpack.c.l.b16 %v1546
      %v1630 = vunpack.c.h.b16 %v1546
      %v1631 = vunpack.c.l.b16 %v1547
      %v1632 = vunpack.c.h.b16 %v1547
      %v1633 = vunpack.c.l.b16 %v1548
      %v1634 = vunpack.c.h.b16 %v1548
      %v1635 = vunpack.c.l.b16 %v1549
      %v1636 = vunpack.c.h.b16 %v1549
      %v1637 = vunpack.c.l.b16 %v1550
      %v1638 = vunpack.c.h.b16 %v1550
      %v1639 = vunpack.c.l.b16 %v1551
      %v1640 = vunpack.c.h.b16 %v1551
      %v1641 = vunpack.c.l.b16 %v1552
      %v1642 = vunpack.c.h.b16 %v1552
      %v1643 = vunpack.c.l.b16 %v1553
      %v1644 = vunpack.c.h.b16 %v1553
      %v1645 = vunpack.c.l.b16 %v1554
      %v1646 = vunpack.c.h.b16 %v1554
      %v1647 = vunpack.c.l.b16 %v1555
      %v1648 = vunpack.c.h.b16 %v1555
      %v1649 = vunpack.c.l.b16 %v1556
      %v1650 = vunpack.c.h.b16 %v1556
      %v1651 = vunpack.c.l.b16 %v1557
      %v1652 = vunpack.c.h.b16 %v1557
      %v1653 = vunpack.c.l.b16 %v1558
      %v1654 = vunpack.c.h.b16 %v1558
      %v1655 = vunpack.c.l.b16 %v1559
      %v1656 = vunpack.c.h.b16 %v1559
      %v1657 = vunpack.c.l.b16 %v1560
      %v1658 = vunpack.c.h.b16 %v1560
      %v1659 = vunpack.c.l.b16 %v1561
      %v1660 = vunpack.c.h.b16 %v1561
      %v1661 = vunpack.c.l.b16 %v1562
      %v1662 = vunpack.c.h.b16 %v1562
      %v1663 = vunpack.c.l.b16 %v1563
      %v1664 = vunpack.c.h.b16 %v1563
      %v1665 = vunpack.c.l.b16 %v1564
      %v1666 = vunpack.c.h.b16 %v1564
      %v1667 = vunpack.c.l.b16 %v1565
      %v1668 = vunpack.c.h.b16 %v1565
      %v1669 = vunpack.c.l.b16 %v1566
      %v1670 = vunpack.c.h.b16 %v1566
      %v1671 = vunpack.c.l.b16 %v1567
      %v1672 = vunpack.c.h.b16 %v1567
      %v1673 = vunpack.c.l.b16 %v1568
      %v1674 = vunpack.c.h.b16 %v1568
      %v1675 = vpack.c.b16 %v1615, %v1611
      %v1676 = vpack.c.b16 %v1616, %v1612
      %v1677 = vpack.c.b16 %v1617, %v1613
      %v1678 = vpack.c.b16 %v1618, %v1614
      %v1679 = vpack.c.b16 %v1623, %v1619
      %v1680 = vpack.c.b16 %v1624, %v1620
      %v1681 = vpack.c.b16 %v1625, %v1621
      %v1682 = vpack.c.b16 %v1626, %v1622
      %v1683 = vpack.c.b16 %v1631, %v1627
      %v1684 = vpack.c.b16 %v1632, %v1628
      %v1685 = vpack.c.b16 %v1633, %v1629
      %v1686 = vpack.c.b16 %v1634, %v1630
      %v1687 = vpack.c.b16 %v1639, %v1635
      %v1688 = vpack.c.b16 %v1640, %v1636
      %v1689 = vpack.c.b16 %v1641, %v1637
      %v1690 = vpack.c.b16 %v1642, %v1638
      %v1691 = vpack.c.b16 %v1647, %v1643
      %v1692 = vpack.c.b16 %v1648, %v1644
      %v1693 = vpack.c.b16 %v1649, %v1645
      %v1694 = vpack.c.b16 %v1650, %v1646
      %v1695 = vpack.c.b16 %v1655, %v1651
      %v1696 = vpack.c.b16 %v1656, %v1652
      %v1697 = vpack.c.b16 %v1657, %v1653
      %v1698 = vpack.c.b16 %v1658, %v1654
      %v1699 = vpack.c.b16 %v1663, %v1659
      %v1700 = vpack.c.b16 %v1664, %v1660
      %v1701 = vpack.c.b16 %v1665, %v1661
      %v1702 = vpack.c.b16 %v1666, %v1662
      %v1703 = vpack.c.b16 %v1671, %v1667
      %v1704 = vpack.c.b16 %v1672, %v1668
      %v1705 = vpack.c.b16 %v1673, %v1669
      %v1706 = vpack.c.b16 %v1674, %v1670
      %1739 = vmatpush.bf16.msra.mxu0 %v1703
      %1740 = vmatpush.bf16.msra.mxu0 %v1699
      %1741 = vmatpush.bf16.msra.mxu0 %v1695
      %1742 = vmatpush.bf16.msra.mxu0 %v1691
      %1743 = vmatpush.bf16.msra.mxu0 %v1687
      %1744 = vmatpush.bf16.msra.mxu0 %v1683
      %1745 = vmatpush.bf16.msra.mxu0 %v1679
      %1746 = vmatpush.bf16.msra.mxu0 %v1675
      %1747 = vmatmul.bf16.gmra.mxu0 %v1536
      %v1748 = vpop.f32.mrf.mxu0
      %v1749 = vadd.f32 %v1571, %v1748
      %v1750 = vpop.f32.mrf.mxu0
      %v1751 = vadd.f32 %v1571, %v1750
      %1752 = vdwg.mxu0
      %1753 = vmatpush.bf16.msra.mxu0 %v1704
      %1754 = vmatpush.bf16.msra.mxu0 %v1700
      %1755 = vmatpush.bf16.msra.mxu0 %v1696
      %1756 = vmatpush.bf16.msra.mxu0 %v1692
      %1757 = vmatpush.bf16.msra.mxu0 %v1688
      %1758 = vmatpush.bf16.msra.mxu0 %v1684
      %1759 = vmatpush.bf16.msra.mxu0 %v1680
      %1760 = vmatpush.bf16.msra.mxu0 %v1676
      %1761 = vmatmul.bf16.gmra.mxu0 %v1536
      %v1762 = vpop.f32.mrf.mxu0
      %v1763 = vadd.f32 %v1572, %v1762
      %v1764 = vpop.f32.mrf.mxu0
      %v1765 = vadd.f32 %v1572, %v1764
      %1766 = vdwg.mxu0
      %1767 = vmatpush.bf16.msra.mxu0 %v1705
      %1768 = vmatpush.bf16.msra.mxu0 %v1701
      %1769 = vmatpush.bf16.msra.mxu0 %v1697
      %1770 = vmatpush.bf16.msra.mxu0 %v1693
      %1771 = vmatpush.bf16.msra.mxu0 %v1689
      %1772 = vmatpush.bf16.msra.mxu0 %v1685
      %1773 = vmatpush.bf16.msra.mxu0 %v1681
      %1774 = vmatpush.bf16.msra.mxu0 %v1677
      %1775 = vmatmul.bf16.gmra.mxu0 %v1536
      %v1776 = vpop.f32.mrf.mxu0
      %v1777 = vadd.f32 %v1573, %v1776
      %v1778 = vpop.f32.mrf.mxu0
      %v1779 = vadd.f32 %v1573, %v1778
      %1780 = vdwg.mxu0
      %1781 = vmatpush.bf16.msra.mxu0 %v1706
      %1782 = vmatpush.bf16.msra.mxu0 %v1702
      %1783 = vmatpush.bf16.msra.mxu0 %v1698
      %1784 = vmatpush.bf16.msra.mxu0 %v1694
      %1785 = vmatpush.bf16.msra.mxu0 %v1690
      %1786 = vmatpush.bf16.msra.mxu0 %v1686
      %1787 = vmatpush.bf16.msra.mxu0 %v1682
      %1788 = vmatpush.bf16.msra.mxu0 %v1678
      %1789 = vmatmul.bf16.gmra.mxu0 %v1536
      %v1790 = vpop.f32.mrf.mxu0
      %v1791 = vadd.f32 %v1574, %v1790
      %v1792 = vpop.f32.mrf.mxu0
      %v1793 = vadd.f32 %v1574, %v1792
      %1794 = vdwg.mxu0
      %v1795 = vmul.f32 %v1749, 0.5
      %v1796 = vmul.f32 %v1763, 0.5
      %v1797 = vmul.f32 %v1777, 0.5
      %v1798 = vmul.f32 %v1791, 0.5
      %v1799 = vmul.f32 %v1751, 0.5
      %v1800 = vmul.f32 %v1765, 0.5
      %v1801 = vmul.f32 %v1779, 0.5
      %v1802 = vmul.f32 %v1793, 0.5
      %v1803 = vmul.f32 %v1749, 0.70710677
      %v1804 = vmul.f32 %v1763, 0.70710677
      %v1805 = vmul.f32 %v1777, 0.70710677
      %v1806 = vmul.f32 %v1791, 0.70710677
      %v1807 = vmul.f32 %v1751, 0.70710677
      %v1808 = vmul.f32 %v1765, 0.70710677
      %v1809 = vmul.f32 %v1779, 0.70710677
      %v1810 = vmul.f32 %v1793, 0.70710677
      %v1811 = vmul.f32 %v1803, %v1803
      %v1812 = vmin.f32 16.0, %v1811
      %v1813 = vmul.f32 %v1812, 2.1237322e-06
      %v1814 = vadd.f32 %v1813, 0.00028619796
      %v1815 = vmul.f32 %v1812, %v1814
      %v1816 = vadd.f32 %v1815, 0.0036580483
      %v1817 = vmul.f32 %v1812, %v1816
      %v1818 = vadd.f32 %v1817, 0.05243302
      %v1819 = vmul.f32 %v1812, %v1818
      %v1820 = vadd.f32 %v1819, 0.18741608
      %v1821 = vmul.f32 %v1812, %v1820
      %v1822 = vadd.f32 %v1821, 1.1283791
      %v1823 = vmul.f32 %v1803, %v1822
      %v1824 = vmul.f32 %v1812, 3.8918573e-05
      %v1825 = vadd.f32 %v1824, 0.001143296
      %v1826 = vmul.f32 %v1812, %v1825
      %v1827 = vadd.f32 %v1826, 0.014752088
      %v1828 = vmul.f32 %v1812, %v1827
      %v1829 = vadd.f32 %v1828, 0.112945676
      %v1830 = vmul.f32 %v1812, %v1829
      %v1831 = vadd.f32 %v1830, 0.4994258
      %v1832 = vmul.f32 %v1812, %v1831
      %v1833 = vadd.f32 %v1832, 1.0
      %v1834 = vrcp.pop %v1833
      %v1835 = vmul.f32 %v1833, %v1834
      %v1836 = vsub.f32 1.0, %v1835
      %v1837 = vmul.f32 %v1834, %v1836
      %v1838 = vadd.f32 %v1834, %v1837
      %vm1839 = vweird.f32 %v1833
      %vm1840 = vweird.f32 %v1834
      %vm1841 = vmor %vm1839, %vm1840
      %v1842 = vsel %vm1841, %v1834, %v1838
      %v1843 = vand.u32 2147483647, %v1833
      %vm1844 = vcmp.eq.f32.partialorder %v1843, 8.507059e+37
      %v1845 = vand.u32 %v1833, 2147483648
      %v1846 = vor.u32 1.1754944e-38, %v1845
      %v1847 = vsel %vm1844, %v1846, %v1842
      %v1848 = vmul.f32 %v1823, %v1847
      %v1849 = vmin.f32 %v1848, 1.0
      %v1850 = vmax.f32 %v1849, -1.0
      %v1851 = vmul.f32 %v1804, %v1804
      %v1852 = vmin.f32 16.0, %v1851
      %v1853 = vmul.f32 %v1852, 2.1237322e-06
      %v1854 = vadd.f32 %v1853, 0.00028619796
      %v1855 = vmul.f32 %v1852, %v1854
      %v1856 = vadd.f32 %v1855, 0.0036580483
      %v1857 = vmul.f32 %v1852, %v1856
      %v1858 = vadd.f32 %v1857, 0.05243302
      %v1859 = vmul.f32 %v1852, %v1858
      %v1860 = vadd.f32 %v1859, 0.18741608
      %v1861 = vmul.f32 %v1852, %v1860
      %v1862 = vadd.f32 %v1861, 1.1283791
      %v1863 = vmul.f32 %v1804, %v1862
      %v1864 = vmul.f32 %v1852, 3.8918573e-05
      %v1865 = vadd.f32 %v1864, 0.001143296
      %v1866 = vmul.f32 %v1852, %v1865
      %v1867 = vadd.f32 %v1866, 0.014752088
      %v1868 = vmul.f32 %v1852, %v1867
      %v1869 = vadd.f32 %v1868, 0.112945676
      %v1870 = vmul.f32 %v1852, %v1869
      %v1871 = vadd.f32 %v1870, 0.4994258
      %v1872 = vmul.f32 %v1852, %v1871
      %v1873 = vadd.f32 %v1872, 1.0
      %v1874 = vrcp.pop %v1873
      %v1875 = vmul.f32 %v1873, %v1874
      %v1876 = vsub.f32 1.0, %v1875
      %v1877 = vmul.f32 %v1874, %v1876
      %v1878 = vadd.f32 %v1874, %v1877
      %vm1879 = vweird.f32 %v1873
      %vm1880 = vweird.f32 %v1874
      %vm1881 = vmor %vm1879, %vm1880
      %v1882 = vsel %vm1881, %v1874, %v1878
      %v1883 = vand.u32 2147483647, %v1873
      %vm1884 = vcmp.eq.f32.partialorder %v1883, 8.507059e+37
      %v1885 = vand.u32 %v1873, 2147483648
      %v1886 = vor.u32 1.1754944e-38, %v1885
      %v1887 = vsel %vm1884, %v1886, %v1882
      %v1888 = vmul.f32 %v1863, %v1887
      %v1889 = vmin.f32 %v1888, 1.0
      %v1890 = vmax.f32 %v1889, -1.0
      %v1891 = vmul.f32 %v1805, %v1805
      %v1892 = vmin.f32 16.0, %v1891
      %v1893 = vmul.f32 %v1892, 2.1237322e-06
      %v1894 = vadd.f32 %v1893, 0.00028619796
      %v1895 = vmul.f32 %v1892, %v1894
      %v1896 = vadd.f32 %v1895, 0.0036580483
      %v1897 = vmul.f32 %v1892, %v1896
      %v1898 = vadd.f32 %v1897, 0.05243302
      %v1899 = vmul.f32 %v1892, %v1898
      %v1900 = vadd.f32 %v1899, 0.18741608
      %v1901 = vmul.f32 %v1892, %v1900
      %v1902 = vadd.f32 %v1901, 1.1283791
      %v1903 = vmul.f32 %v1805, %v1902
      %v1904 = vmul.f32 %v1892, 3.8918573e-05
      %v1905 = vadd.f32 %v1904, 0.001143296
      %v1906 = vmul.f32 %v1892, %v1905
      %v1907 = vadd.f32 %v1906, 0.014752088
      %v1908 = vmul.f32 %v1892, %v1907
      %v1909 = vadd.f32 %v1908, 0.112945676
      %v1910 = vmul.f32 %v1892, %v1909
      %v1911 = vadd.f32 %v1910, 0.4994258
      %v1912 = vmul.f32 %v1892, %v1911
      %v1913 = vadd.f32 %v1912, 1.0
      %v1914 = vrcp.pop %v1913
      %v1915 = vmul.f32 %v1913, %v1914
      %v1916 = vsub.f32 1.0, %v1915
      %v1917 = vmul.f32 %v1914, %v1916
      %v1918 = vadd.f32 %v1914, %v1917
      %vm1919 = vweird.f32 %v1913
      %vm1920 = vweird.f32 %v1914
      %vm1921 = vmor %vm1919, %vm1920
      %v1922 = vsel %vm1921, %v1914, %v1918
      %v1923 = vand.u32 2147483647, %v1913
      %vm1924 = vcmp.eq.f32.partialorder %v1923, 8.507059e+37
      %v1925 = vand.u32 %v1913, 2147483648
      %v1926 = vor.u32 1.1754944e-38, %v1925
      %v1927 = vsel %vm1924, %v1926, %v1922
      %v1928 = vmul.f32 %v1903, %v1927
      %v1929 = vmin.f32 %v1928, 1.0
      %v1930 = vmax.f32 %v1929, -1.0
      %v1931 = vmul.f32 %v1806, %v1806
      %v1932 = vmin.f32 16.0, %v1931
      %v1933 = vmul.f32 %v1932, 2.1237322e-06
      %v1934 = vadd.f32 %v1933, 0.00028619796
      %v1935 = vmul.f32 %v1932, %v1934
      %v1936 = vadd.f32 %v1935, 0.0036580483
      %v1937 = vmul.f32 %v1932, %v1936
      %v1938 = vadd.f32 %v1937, 0.05243302
      %v1939 = vmul.f32 %v1932, %v1938
      %v1940 = vadd.f32 %v1939, 0.18741608
      %v1941 = vmul.f32 %v1932, %v1940
      %v1942 = vadd.f32 %v1941, 1.1283791
      %v1943 = vmul.f32 %v1806, %v1942
      %v1944 = vmul.f32 %v1932, 3.8918573e-05
      %v1945 = vadd.f32 %v1944, 0.001143296
      %v1946 = vmul.f32 %v1932, %v1945
      %v1947 = vadd.f32 %v1946, 0.014752088
      %v1948 = vmul.f32 %v1932, %v1947
      %v1949 = vadd.f32 %v1948, 0.112945676
      %v1950 = vmul.f32 %v1932, %v1949
      %v1951 = vadd.f32 %v1950, 0.4994258
      %v1952 = vmul.f32 %v1932, %v1951
      %v1953 = vadd.f32 %v1952, 1.0
      %v1954 = vrcp.pop %v1953
      %v1955 = vmul.f32 %v1953, %v1954
      %v1956 = vsub.f32 1.0, %v1955
      %v1957 = vmul.f32 %v1954, %v1956
      %v1958 = vadd.f32 %v1954, %v1957
      %vm1959 = vweird.f32 %v1953
      %vm1960 = vweird.f32 %v1954
      %vm1961 = vmor %vm1959, %vm1960
      %v1962 = vsel %vm1961, %v1954, %v1958
      %v1963 = vand.u32 2147483647, %v1953
      %vm1964 = vcmp.eq.f32.partialorder %v1963, 8.507059e+37
      %v1965 = vand.u32 %v1953, 2147483648
      %v1966 = vor.u32 1.1754944e-38, %v1965
      %v1967 = vsel %vm1964, %v1966, %v1962
      %v1968 = vmul.f32 %v1943, %v1967
      %v1969 = vmin.f32 %v1968, 1.0
      %v1970 = vmax.f32 %v1969, -1.0
      %v1971 = vmul.f32 %v1807, %v1807
      %v1972 = vmin.f32 16.0, %v1971
      %v1973 = vmul.f32 %v1972, 2.1237322e-06
      %v1974 = vadd.f32 %v1973, 0.00028619796
      %v1975 = vmul.f32 %v1972, %v1974
      %v1976 = vadd.f32 %v1975, 0.0036580483
      %v1977 = vmul.f32 %v1972, %v1976
      %v1978 = vadd.f32 %v1977, 0.05243302
      %v1979 = vmul.f32 %v1972, %v1978
      %v1980 = vadd.f32 %v1979, 0.18741608
      %v1981 = vmul.f32 %v1972, %v1980
      %v1982 = vadd.f32 %v1981, 1.1283791
      %v1983 = vmul.f32 %v1807, %v1982
      %v1984 = vmul.f32 %v1972, 3.8918573e-05
      %v1985 = vadd.f32 %v1984, 0.001143296
      %v1986 = vmul.f32 %v1972, %v1985
      %v1987 = vadd.f32 %v1986, 0.014752088
      %v1988 = vmul.f32 %v1972, %v1987
      %v1989 = vadd.f32 %v1988, 0.112945676
      %v1990 = vmul.f32 %v1972, %v1989
      %v1991 = vadd.f32 %v1990, 0.4994258
      %v1992 = vmul.f32 %v1972, %v1991
      %v1993 = vadd.f32 %v1992, 1.0
      %v1994 = vrcp.pop %v1993
      %v1995 = vmul.f32 %v1993, %v1994
      %v1996 = vsub.f32 1.0, %v1995
      %v1997 = vmul.f32 %v1994, %v1996
      %v1998 = vadd.f32 %v1994, %v1997
      %vm1999 = vweird.f32 %v1993
      %vm2000 = vweird.f32 %v1994
      %vm2001 = vmor %vm1999, %vm2000
      %v2002 = vsel %vm2001, %v1994, %v1998
      %v2003 = vand.u32 2147483647, %v1993
      %vm2004 = vcmp.eq.f32.partialorder %v2003, 8.507059e+37
      %v2005 = vand.u32 %v1993, 2147483648
      %v2006 = vor.u32 1.1754944e-38, %v2005
      %v2007 = vsel %vm2004, %v2006, %v2002
      %v2008 = vmul.f32 %v1983, %v2007
      %v2009 = vmin.f32 %v2008, 1.0
      %v2010 = vmax.f32 %v2009, -1.0
      %v2011 = vmul.f32 %v1808, %v1808
      %v2012 = vmin.f32 16.0, %v2011
      %v2013 = vmul.f32 %v2012, 2.1237322e-06
      %v2014 = vadd.f32 %v2013, 0.00028619796
      %v2015 = vmul.f32 %v2012, %v2014
      %v2016 = vadd.f32 %v2015, 0.0036580483
      %v2017 = vmul.f32 %v2012, %v2016
      %v2018 = vadd.f32 %v2017, 0.05243302
      %v2019 = vmul.f32 %v2012, %v2018
      %v2020 = vadd.f32 %v2019, 0.18741608
      %v2021 = vmul.f32 %v2012, %v2020
      %v2022 = vadd.f32 %v2021, 1.1283791
      %v2023 = vmul.f32 %v1808, %v2022
      %v2024 = vmul.f32 %v2012, 3.8918573e-05
      %v2025 = vadd.f32 %v2024, 0.001143296
      %v2026 = vmul.f32 %v2012, %v2025
      %v2027 = vadd.f32 %v2026, 0.014752088
      %v2028 = vmul.f32 %v2012, %v2027
      %v2029 = vadd.f32 %v2028, 0.112945676
      %v2030 = vmul.f32 %v2012, %v2029
      %v2031 = vadd.f32 %v2030, 0.4994258
      %v2032 = vmul.f32 %v2012, %v2031
      %v2033 = vadd.f32 %v2032, 1.0
      %v2034 = vrcp.pop %v2033
      %v2035 = vmul.f32 %v2033, %v2034
      %v2036 = vsub.f32 1.0, %v2035
      %v2037 = vmul.f32 %v2034, %v2036
      %v2038 = vadd.f32 %v2034, %v2037
      %vm2039 = vweird.f32 %v2033
      %vm2040 = vweird.f32 %v2034
      %vm2041 = vmor %vm2039, %vm2040
      %v2042 = vsel %vm2041, %v2034, %v2038
      %v2043 = vand.u32 2147483647, %v2033
      %vm2044 = vcmp.eq.f32.partialorder %v2043, 8.507059e+37
      %v2045 = vand.u32 %v2033, 2147483648
      %v2046 = vor.u32 1.1754944e-38, %v2045
      %v2047 = vsel %vm2044, %v2046, %v2042
      %v2048 = vmul.f32 %v2023, %v2047
      %v2049 = vmin.f32 %v2048, 1.0
      %v2050 = vmax.f32 %v2049, -1.0
      %v2051 = vmul.f32 %v1809, %v1809
      %v2052 = vmin.f32 16.0, %v2051
      %v2053 = vmul.f32 %v2052, 2.1237322e-06
      %v2054 = vadd.f32 %v2053, 0.00028619796
      %v2055 = vmul.f32 %v2052, %v2054
      %v2056 = vadd.f32 %v2055, 0.0036580483
      %v2057 = vmul.f32 %v2052, %v2056
      %v2058 = vadd.f32 %v2057, 0.05243302
      %v2059 = vmul.f32 %v2052, %v2058
      %v2060 = vadd.f32 %v2059, 0.18741608
      %v2061 = vmul.f32 %v2052, %v2060
      %v2062 = vadd.f32 %v2061, 1.1283791
      %v2063 = vmul.f32 %v1809, %v2062
      %v2064 = vmul.f32 %v2052, 3.8918573e-05
      %v2065 = vadd.f32 %v2064, 0.001143296
      %v2066 = vmul.f32 %v2052, %v2065
      %v2067 = vadd.f32 %v2066, 0.014752088
      %v2068 = vmul.f32 %v2052, %v2067
      %v2069 = vadd.f32 %v2068, 0.112945676
      %v2070 = vmul.f32 %v2052, %v2069
      %v2071 = vadd.f32 %v2070, 0.4994258
      %v2072 = vmul.f32 %v2052, %v2071
      %v2073 = vadd.f32 %v2072, 1.0
      %v2074 = vrcp.pop %v2073
      %v2075 = vmul.f32 %v2073, %v2074
      %v2076 = vsub.f32 1.0, %v2075
      %v2077 = vmul.f32 %v2074, %v2076
      %v2078 = vadd.f32 %v2074, %v2077
      %vm2079 = vweird.f32 %v2073
      %vm2080 = vweird.f32 %v2074
      %vm2081 = vmor %vm2079, %vm2080
      %v2082 = vsel %vm2081, %v2074, %v2078
      %v2083 = vand.u32 2147483647, %v2073
      %vm2084 = vcmp.eq.f32.partialorder %v2083, 8.507059e+37
      %v2085 = vand.u32 %v2073, 2147483648
      %v2086 = vor.u32 1.1754944e-38, %v2085
      %v2087 = vsel %vm2084, %v2086, %v2082
      %v2088 = vmul.f32 %v2063, %v2087
      %v2089 = vmin.f32 %v2088, 1.0
      %v2090 = vmax.f32 %v2089, -1.0
      %v2091 = vmul.f32 %v1810, %v1810
      %v2092 = vmin.f32 16.0, %v2091
      %v2093 = vmul.f32 %v2092, 2.1237322e-06
      %v2094 = vadd.f32 %v2093, 0.00028619796
      %v2095 = vmul.f32 %v2092, %v2094
      %v2096 = vadd.f32 %v2095, 0.0036580483
      %v2097 = vmul.f32 %v2092, %v2096
      %v2098 = vadd.f32 %v2097, 0.05243302
      %v2099 = vmul.f32 %v2092, %v2098
      %v2100 = vadd.f32 %v2099, 0.18741608
      %v2101 = vmul.f32 %v2092, %v2100
      %v2102 = vadd.f32 %v2101, 1.1283791
      %v2103 = vmul.f32 %v1810, %v2102
      %v2104 = vmul.f32 %v2092, 3.8918573e-05
      %v2105 = vadd.f32 %v2104, 0.001143296
      %v2106 = vmul.f32 %v2092, %v2105
      %v2107 = vadd.f32 %v2106, 0.014752088
      %v2108 = vmul.f32 %v2092, %v2107
      %v2109 = vadd.f32 %v2108, 0.112945676
      %v2110 = vmul.f32 %v2092, %v2109
      %v2111 = vadd.f32 %v2110, 0.4994258
      %v2112 = vmul.f32 %v2092, %v2111
      %v2113 = vadd.f32 %v2112, 1.0
      %v2114 = vrcp.pop %v2113
      %v2115 = vmul.f32 %v2113, %v2114
      %v2116 = vsub.f32 1.0, %v2115
      %v2117 = vmul.f32 %v2114, %v2116
      %v2118 = vadd.f32 %v2114, %v2117
      %vm2119 = vweird.f32 %v2113
      %vm2120 = vweird.f32 %v2114
      %vm2121 = vmor %vm2119, %vm2120
      %v2122 = vsel %vm2121, %v2114, %v2118
      %v2123 = vand.u32 2147483647, %v2113
      %vm2124 = vcmp.eq.f32.partialorder %v2123, 8.507059e+37
      %v2125 = vand.u32 %v2113, 2147483648
      %v2126 = vor.u32 1.1754944e-38, %v2125
      %v2127 = vsel %vm2124, %v2126, %v2122
      %v2128 = vmul.f32 %v2103, %v2127
      %v2129 = vmin.f32 %v2128, 1.0
      %v2130 = vmax.f32 %v2129, -1.0
      %v2131 = vadd.f32 %v1850, 1.0
      %v2132 = vadd.f32 %v1890, 1.0
      %v2133 = vadd.f32 %v1930, 1.0
      %v2134 = vadd.f32 %v1970, 1.0
      %v2135 = vadd.f32 %v2010, 1.0
      %v2136 = vadd.f32 %v2050, 1.0
      %v2137 = vadd.f32 %v2090, 1.0
      %v2138 = vadd.f32 %v2130, 1.0
      %v2139 = vmul.f32 %v1795, %v2131
      %v2140 = vmul.f32 %v1796, %v2132
      %v2141 = vmul.f32 %v1797, %v2133
      %v2142 = vmul.f32 %v1798, %v2134
      %v2143 = vmul.f32 %v1799, %v2135
      %v2144 = vmul.f32 %v1800, %v2136
      %v2145 = vmul.f32 %v1801, %v2137
      %v2146 = vmul.f32 %v1802, %v2138
      %v2147 = vpack.c.bf16 %v2143, %v2139
      %v2148 = vpack.c.bf16 %v2144, %v2140
      %v2149 = vpack.c.bf16 %v2145, %v2141
      %v2150 = vpack.c.bf16 %v2146, %v2142
      %v2151 = vld [vmem:[%s642] sm:$0xf]
      %v2152 = vld [vmem:[%s642 + $0x4] sm:$0xf]
      %v2153 = vld [vmem:[%s642 + $0x8] sm:$0xf]
      %v2154 = vld [vmem:[%s642 + $0xc] sm:$0xf]
      %v2155 = vld [vmem:[%s642 + $0x10] sm:$0xf]
      %v2156 = vld [vmem:[%s642 + $0x14] sm:$0xf]
      %v2157 = vld [vmem:[%s642 + $0x18] sm:$0xf]
      %v2158 = vld [vmem:[%s642 + $0x1c] sm:$0xf]
      %v2159 = vld [vmem:[%s642 + $0x20] sm:$0xf]
      %v2160 = vld [vmem:[%s642 + $0x24] sm:$0xf]
      %v2161 = vld [vmem:[%s642 + $0x28] sm:$0xf]
      %v2162 = vld [vmem:[%s642 + $0x2c] sm:$0xf]
      %v2163 = vld [vmem:[%s642 + $0x30] sm:$0xf]
      %v2164 = vld [vmem:[%s642 + $0x34] sm:$0xf]
      %v2165 = vld [vmem:[%s642 + $0x38] sm:$0xf]
      %v2166 = vld [vmem:[%s642 + $0x3c] sm:$0xf]
      %v2167 = vld [vmem:[%s642 + $0x40] sm:$0xf]
      %v2168 = vld [vmem:[%s642 + $0x44] sm:$0xf]
      %v2169 = vld [vmem:[%s642 + $0x48] sm:$0xf]
      %v2170 = vld [vmem:[%s642 + $0x4c] sm:$0xf]
      %v2171 = vld [vmem:[%s642 + $0x50] sm:$0xf]
      %v2172 = vld [vmem:[%s642 + $0x54] sm:$0xf]
      %v2173 = vld [vmem:[%s642 + $0x58] sm:$0xf]
      %v2174 = vld [vmem:[%s642 + $0x5c] sm:$0xf]
      %v2175 = vld [vmem:[%s642 + $0x60] sm:$0xf]
      %v2176 = vld [vmem:[%s642 + $0x64] sm:$0xf]
      %v2177 = vld [vmem:[%s642 + $0x68] sm:$0xf]
      %v2178 = vld [vmem:[%s642 + $0x6c] sm:$0xf]
      %v2179 = vld [vmem:[%s642 + $0x70] sm:$0xf]
      %v2180 = vld [vmem:[%s642 + $0x74] sm:$0xf]
      %v2181 = vld [vmem:[%s642 + $0x78] sm:$0xf]
      %v2182 = vld [vmem:[%s642 + $0x7c] sm:$0xf]
      %v2183 = vld [vmem:[%s642 + $0x80] sm:$0xf]
      %v2184 = vld [vmem:[%s642 + $0x84] sm:$0xf]
      %v2185 = vld [vmem:[%s642 + $0x88] sm:$0xf]
      %v2186 = vld [vmem:[%s642 + $0x8c] sm:$0xf]
      %v2187 = vld [vmem:[%s642 + $0x90] sm:$0xf]
      %v2188 = vld [vmem:[%s642 + $0x94] sm:$0xf]
      %v2189 = vld [vmem:[%s642 + $0x98] sm:$0xf]
      %v2190 = vld [vmem:[%s642 + $0x9c] sm:$0xf]
      %v2191 = vld [vmem:[%s642 + $0xa0] sm:$0xf]
      %v2192 = vld [vmem:[%s642 + $0xa4] sm:$0xf]
      %v2193 = vld [vmem:[%s642 + $0xa8] sm:$0xf]
      %v2194 = vld [vmem:[%s642 + $0xac] sm:$0xf]
      %v2195 = vld [vmem:[%s642 + $0xb0] sm:$0xf]
      %v2196 = vld [vmem:[%s642 + $0xb4] sm:$0xf]
      %v2197 = vld [vmem:[%s642 + $0xb8] sm:$0xf]
      %v2198 = vld [vmem:[%s642 + $0xbc] sm:$0xf]
      %v2199 = vld [vmem:[%s642 + $0xc0] sm:$0xf]
      %v2200 = vld [vmem:[%s642 + $0xc4] sm:$0xf]
      %v2201 = vld [vmem:[%s642 + $0xc8] sm:$0xf]
      %v2202 = vld [vmem:[%s642 + $0xcc] sm:$0xf]
      %v2203 = vld [vmem:[%s642 + $0xd0] sm:$0xf]
      %v2204 = vld [vmem:[%s642 + $0xd4] sm:$0xf]
      %v2205 = vld [vmem:[%s642 + $0xd8] sm:$0xf]
      %v2206 = vld [vmem:[%s642 + $0xdc] sm:$0xf]
      %v2207 = vld [vmem:[%s642 + $0xe0] sm:$0xf]
      %v2208 = vld [vmem:[%s642 + $0xe4] sm:$0xf]
      %v2209 = vld [vmem:[%s642 + $0xe8] sm:$0xf]
      %v2210 = vld [vmem:[%s642 + $0xec] sm:$0xf]
      %v2211 = vld [vmem:[%s642 + $0xf0] sm:$0xf]
      %v2212 = vld [vmem:[%s642 + $0xf4] sm:$0xf]
      %v2213 = vld [vmem:[%s642 + $0xf8] sm:$0xf]
      %v2214 = vld [vmem:[%s642 + $0xfc] sm:$0xf]
      %v2215 = vld [vmem:[%s645] sm:$0x1]
      %v2217 = vperm.slane %v2215, 0
      %v2283 = vunpack.c.l.b16 %v2151
      %v2284 = vunpack.c.l.b16 %v2152
      %v2285 = vunpack.c.l.b16 %v2153
      %v2286 = vunpack.c.l.b16 %v2154
      %v2287 = vunpack.c.l.b16 %v2155
      %v2288 = vunpack.c.l.b16 %v2156
      %v2289 = vunpack.c.l.b16 %v2157
      %v2290 = vunpack.c.l.b16 %v2158
      %v2291 = vunpack.c.l.b16 %v2159
      %v2292 = vunpack.c.l.b16 %v2160
      %v2293 = vunpack.c.l.b16 %v2161
      %v2294 = vunpack.c.l.b16 %v2162
      %v2295 = vunpack.c.l.b16 %v2163
      %v2296 = vunpack.c.l.b16 %v2164
      %v2297 = vunpack.c.l.b16 %v2165
      %v2298 = vunpack.c.l.b16 %v2166
      %v2299 = vunpack.c.l.b16 %v2167
      %v2300 = vunpack.c.l.b16 %v2168
      %v2301 = vunpack.c.l.b16 %v2169
      %v2302 = vunpack.c.l.b16 %v2170
      %v2303 = vunpack.c.l.b16 %v2171
      %v2304 = vunpack.c.l.b16 %v2172
      %v2305 = vunpack.c.l.b16 %v2173
      %v2306 = vunpack.c.l.b16 %v2174
      %v2307 = vunpack.c.l.b16 %v2175
      %v2308 = vunpack.c.l.b16 %v2176
      %v2309 = vunpack.c.l.b16 %v2177
      %v2310 = vunpack.c.l.b16 %v2178
      %v2311 = vunpack.c.l.b16 %v2179
      %v2312 = vunpack.c.l.b16 %v2180
      %v2313 = vunpack.c.l.b16 %v2181
      %v2314 = vunpack.c.l.b16 %v2182
      %v2315 = vunpack.c.l.b16 %v2183
      %v2316 = vunpack.c.l.b16 %v2184
      %v2317 = vunpack.c.l.b16 %v2185
      %v2318 = vunpack.c.l.b16 %v2186
      %v2319 = vunpack.c.l.b16 %v2187
      %v2320 = vunpack.c.l.b16 %v2188
      %v2321 = vunpack.c.l.b16 %v2189
      %v2322 = vunpack.c.l.b16 %v2190
      %v2323 = vunpack.c.l.b16 %v2191
      %v2324 = vunpack.c.l.b16 %v2192
      %v2325 = vunpack.c.l.b16 %v2193
      %v2326 = vunpack.c.l.b16 %v2194
      %v2327 = vunpack.c.l.b16 %v2195
      %v2328 = vunpack.c.l.b16 %v2196
      %v2329 = vunpack.c.l.b16 %v2197
      %v2330 = vunpack.c.l.b16 %v2198
      %v2331 = vunpack.c.l.b16 %v2199
      %v2332 = vunpack.c.l.b16 %v2200
      %v2333 = vunpack.c.l.b16 %v2201
      %v2334 = vunpack.c.l.b16 %v2202
      %v2335 = vunpack.c.l.b16 %v2203
      %v2336 = vunpack.c.l.b16 %v2204
      %v2337 = vunpack.c.l.b16 %v2205
      %v2338 = vunpack.c.l.b16 %v2206
      %v2339 = vunpack.c.l.b16 %v2207
      %v2340 = vunpack.c.l.b16 %v2208
      %v2341 = vunpack.c.l.b16 %v2209
      %v2342 = vunpack.c.l.b16 %v2210
      %v2343 = vunpack.c.l.b16 %v2211
      %v2344 = vunpack.c.l.b16 %v2212
      %v2345 = vunpack.c.l.b16 %v2213
      %v2346 = vunpack.c.l.b16 %v2214
      %v2347 = vpack.c.b16 %v2284, %v2283
      %v2348 = vpack.c.b16 %v2286, %v2285
      %v2349 = vpack.c.b16 %v2288, %v2287
      %v2350 = vpack.c.b16 %v2290, %v2289
      %v2351 = vpack.c.b16 %v2292, %v2291
      %v2352 = vpack.c.b16 %v2294, %v2293
      %v2353 = vpack.c.b16 %v2296, %v2295
      %v2354 = vpack.c.b16 %v2298, %v2297
      %v2355 = vpack.c.b16 %v2300, %v2299
      %v2356 = vpack.c.b16 %v2302, %v2301
      %v2357 = vpack.c.b16 %v2304, %v2303
      %v2358 = vpack.c.b16 %v2306, %v2305
      %v2359 = vpack.c.b16 %v2308, %v2307
      %v2360 = vpack.c.b16 %v2310, %v2309
      %v2361 = vpack.c.b16 %v2312, %v2311
      %v2362 = vpack.c.b16 %v2314, %v2313
      %v2363 = vpack.c.b16 %v2316, %v2315
      %v2364 = vpack.c.b16 %v2318, %v2317
      %v2365 = vpack.c.b16 %v2320, %v2319
      %v2366 = vpack.c.b16 %v2322, %v2321
      %v2367 = vpack.c.b16 %v2324, %v2323
      %v2368 = vpack.c.b16 %v2326, %v2325
      %v2369 = vpack.c.b16 %v2328, %v2327
      %v2370 = vpack.c.b16 %v2330, %v2329
      %v2371 = vpack.c.b16 %v2332, %v2331
      %v2372 = vpack.c.b16 %v2334, %v2333
      %v2373 = vpack.c.b16 %v2336, %v2335
      %v2374 = vpack.c.b16 %v2338, %v2337
      %v2375 = vpack.c.b16 %v2340, %v2339
      %v2376 = vpack.c.b16 %v2342, %v2341
      %v2377 = vpack.c.b16 %v2344, %v2343
      %v2378 = vpack.c.b16 %v2346, %v2345
      %2411 = vmatpush.bf16.msra.mxu0 %v2354
      %2412 = vmatpush.bf16.msra.mxu0 %v2353
      %2413 = vmatpush.bf16.msra.mxu0 %v2352
      %2414 = vmatpush.bf16.msra.mxu0 %v2351
      %2415 = vmatpush.bf16.msra.mxu0 %v2350
      %2416 = vmatpush.bf16.msra.mxu0 %v2349
      %2417 = vmatpush.bf16.msra.mxu0 %v2348
      %2418 = vmatpush.bf16.msra.mxu0 %v2347
      %2419 = vmatmul.bf16.gmra.mxu0 %v2147
      %v2420 = vpop.f32.mrf.mxu0
      %v2421 = vadd.f32 %v2217, %v2420
      %v2422 = vpop.f32.mrf.mxu0
      %v2423 = vadd.f32 %v2217, %v2422
      %2424 = vdwg.mxu0
      %2425 = vmatpush.bf16.msra.mxu0 %v2362
      %2426 = vmatpush.bf16.msra.mxu0 %v2361
      %2427 = vmatpush.bf16.msra.mxu0 %v2360
      %2428 = vmatpush.bf16.msra.mxu0 %v2359
      %2429 = vmatpush.bf16.msra.mxu0 %v2358
      %2430 = vmatpush.bf16.msra.mxu0 %v2357
      %2431 = vmatpush.bf16.msra.mxu0 %v2356
      %2432 = vmatpush.bf16.msra.mxu0 %v2355
      %2433 = vmatmul.bf16.gmra.mxu0 %v2148
      %v2434 = vpop.f32.mrf.mxu0
      %v2435 = vadd.f32 %v2421, %v2434
      %v2436 = vpop.f32.mrf.mxu0
      %v2437 = vadd.f32 %v2423, %v2436
      %2438 = vdwg.mxu0
      %2439 = vmatpush.bf16.msra.mxu0 %v2370
      %2440 = vmatpush.bf16.msra.mxu0 %v2369
      %2441 = vmatpush.bf16.msra.mxu0 %v2368
      %2442 = vmatpush.bf16.msra.mxu0 %v2367
      %2443 = vmatpush.bf16.msra.mxu0 %v2366
      %2444 = vmatpush.bf16.msra.mxu0 %v2365
      %2445 = vmatpush.bf16.msra.mxu0 %v2364
      %2446 = vmatpush.bf16.msra.mxu0 %v2363
      %2447 = vmatmul.bf16.gmra.mxu0 %v2149
      %v2448 = vpop.f32.mrf.mxu0
      %v2449 = vadd.f32 %v2435, %v2448
      %v2450 = vpop.f32.mrf.mxu0
      %v2451 = vadd.f32 %v2437, %v2450
      %2452 = vdwg.mxu0
      %2453 = vmatpush.bf16.msra.mxu0 %v2378
      %2454 = vmatpush.bf16.msra.mxu0 %v2377
      %2455 = vmatpush.bf16.msra.mxu0 %v2376
      %2456 = vmatpush.bf16.msra.mxu0 %v2375
      %2457 = vmatpush.bf16.msra.mxu0 %v2374
      %2458 = vmatpush.bf16.msra.mxu0 %v2373
      %2459 = vmatpush.bf16.msra.mxu0 %v2372
      %2460 = vmatpush.bf16.msra.mxu0 %v2371
      %2461 = vmatmul.bf16.gmra.mxu0 %v2150
      %v2462 = vpop.f32.mrf.mxu0
      %v2463 = vadd.f32 %v2449, %v2462
      %v2464 = vpop.f32.mrf.mxu0
      %v2465 = vadd.f32 %v2451, %v2464
      %2466 = vdwg.mxu0
      %v2467 = vadd.f32 %v1476, %v2463
      %v2468 = vadd.f32 %v1477, %v2465
      %2469 = vst [vmem:[#allocation2] sm:$0xff] %v2467
      %2470 = vst [vmem:[#allocation2 + $0x8] sm:$0xff] %v2468
      %p2471 = scmp.eq.s32.totalorder %s29, 1
      // Predicated region
      $region77: #{char_transformer_forward.2} parent=71 // pred_check
        %p2472 = pneg %p2471
      $region78: #{char_transformer_forward.2} parent=71 // pred_check_branch
        %2474 = sbr.rel (%p2472) target = $region80
      $region79: #{char_transformer_forward.2} parent=71 // pred_region
        %2475 = vst [vmem:[%s650] sm:$0xff] %v2467
        %2476 = vst [vmem:[%s650 + $0x8] sm:$0xff] %v2468
      $region80: #{char_transformer_forward.2} parent=71 // pred_fallthru
        _
      %p2477 = scmp.lt.s32.totalorder %s28, 1
      %s2478 = scalar_select %p2477, %s28, 1
      %s2479 = smul.addr %s2478, 2
      %s2480 = smul.addr %s2479, 8
      %s2481 = scalar_lea.vmem %s13, %s2480
      // Predicated region
      $region81: #{char_transformer_forward.2} parent=71 // pred_check
        %p2482 = pneg %p392
      $region82: #{char_transformer_forward.2} parent=71 // pred_check_branch
        %2484 = sbr.rel (%p2482) target = $region84
      $region83: #{char_transformer_forward.2} parent=71 // pred_region
        _
      $region84: #{char_transformer_forward.2} parent=71 // pred_fallthru
        _
    $region72: #{char_transformer_forward.2} parent=5 // pred_fallthru
      _
    %p2485 = scmp.le.s32.totalorder 2, %s19
    // Predicated region
    $region85: #{char_transformer_forward.2} parent=5 // pred_check
      %p2486 = pneg %p2485
    $region86: #{char_transformer_forward.2} parent=5 // pred_check_branch
      %2488 = sbr.rel (%p2486) target = $region88
    $region87: #{char_transformer_forward.2} parent=5 // pred_region
      %s2489 = ssub.s32 %s19, 2
      // Predicated region
      $region89: #{char_transformer_forward.2} parent=87 // pred_check
        %p2490 = pneg %p398
      $region90: #{char_transformer_forward.2} parent=87 // pred_check_branch
        %2492 = sbr.rel (%p2490) target = $region92
      $region91: #{char_transformer_forward.2} parent=87 // pred_region
        %p2493 = scmp.lt.s32.totalorder %s30, 1
        %s2494 = scalar_select %p2493, %s30, 1
        %s2495 = smul.addr %s2494, 2
        %s2496 = smul.addr %s2495, 8
        %s2497 = scalar_lea.vmem %s13, %s2496
      $region92: #{char_transformer_forward.2} parent=87 // pred_fallthru
        _
    $region88: #{char_transformer_forward.2} parent=5 // pred_fallthru
      _
  $region6: #{char_transformer_forward.2} parent=0 // loop_footer
    %s23 = sadd.s32 1, %s19
  $region7: #{char_transformer_forward.2} parent=0 // loop_footer_branch
    %18 = sbr.rel target = $region3
  $region8: #{char_transformer_forward.2} parent=0 // loop_exit
    _

</llo_original>
